<compile_context>
chip_gen: v7x
topology: tpu7x:2x2x1
jax: 0.10.0
libtpu: 0.0.40
codegen_flags: <defaults>
</compile_context>

<pallas_src>
import functools

import jax
import jax.numpy as jnp
from jax.experimental import pallas as pl
from jax.experimental.pallas import tpu as pltpu


def _group_attention_kernel(x_ref, wq_ref, wk_ref, wv_ref, wo_ref, g_ref, b_ref,
                            o_ref, ctx_ref, *, heads, dim_head, group_len,
                            groups, eps, block_diag):
    x = x_ref[0].astype(jnp.float32)                  # (S_blk, D)
    gamma = g_ref[0].astype(jnp.float32)              # (D,)
    beta = b_ref[0].astype(jnp.float32)               # (D,)
    s_blk = x.shape[0]

    # ---- LayerNorm over the feature dim (f32) ----
    mu = jnp.mean(x, axis=-1, keepdims=True)
    xc = x - mu
    var = jnp.mean(xc * xc, axis=-1, keepdims=True)
    xn = xc * jax.lax.rsqrt(var + eps) * gamma[None, :] + beta[None, :]
    xb = xn.astype(jnp.bfloat16)

    # ---- flat q/k/v projections: (S, D) @ (D, inner), full MXU width ----
    # (q scale dh**-0.5 is folded into Wq on the host.)
    q = jnp.dot(xb, wq_ref[...], preferred_element_type=jnp.float32)
    k = jnp.dot(xb, wk_ref[...], preferred_element_type=jnp.float32)
    v = jnp.dot(xb, wv_ref[...], preferred_element_type=jnp.float32)

    # ---- per-head attention restricted to groups of `group_len` tokens ----
    for h in range(heads):
        sl = slice(h * dim_head, (h + 1) * dim_head)
        qh, kh, vh = q[:, sl], k[:, sl], v[:, sl]     # (S_blk, dh) f32 lane slices
        if block_diag:
            # Free sublane split S_blk -> (G, n); batched matmul over groups.
            qg = qh.reshape(groups, group_len, dim_head).astype(jnp.bfloat16)
            kg = kh.reshape(groups, group_len, dim_head).astype(jnp.bfloat16)
            vg = vh.reshape(groups, group_len, dim_head).astype(jnp.bfloat16)
            sim = jnp.einsum('gid,gjd->gij', qg, kg,
                             preferred_element_type=jnp.float32)   # (G, n, n)
            sim = sim - jnp.max(sim, axis=-1, keepdims=True)
            p = jnp.exp(sim)
            attn = p * pl.reciprocal(jnp.sum(p, axis=-1, keepdims=True),
                                     approx=True)
            outh = jnp.einsum('gij,gjd->gid', attn.astype(jnp.bfloat16), vg,
                              preferred_element_type=jnp.float32)  # (G, n, dh)
            outh = outh.reshape(s_blk, dim_head)
        else:
            # Fallback for group_len not a multiple of 8: masked full-slab attn.
            qhb, khb = qh.astype(jnp.bfloat16), kh.astype(jnp.bfloat16)
            sim = jnp.einsum('id,jd->ij', qhb, khb,
                             preferred_element_type=jnp.float32)   # (S, S)
            row = jax.lax.broadcasted_iota(jnp.int32, sim.shape, 0) // group_len
            col = jax.lax.broadcasted_iota(jnp.int32, sim.shape, 1) // group_len
            sim = jnp.where(row == col, sim, -1e30)
            sim = sim - jnp.max(sim, axis=-1, keepdims=True)
            p = jnp.exp(sim)
            attn = p * pl.reciprocal(jnp.sum(p, axis=-1, keepdims=True),
                                     approx=True)
            outh = jnp.dot(attn.astype(jnp.bfloat16), vh.astype(jnp.bfloat16),
                           preferred_element_type=jnp.float32)
        ctx_ref[:, sl] = outh                          # merge heads -> (S, inner)

    # ---- fused head-merge + output projection: one (S, inner) @ (inner, D) ----
    y = jnp.dot(ctx_ref[...].astype(jnp.bfloat16), wo_ref[...],
                preferred_element_type=jnp.float32)
    o_ref[0] = y.astype(o_ref.dtype)


def _sublane(dtype):
    return {4: 8, 2: 16, 1: 32}.get(jnp.dtype(dtype).itemsize, 8)


def _vmem_budget_bytes():
    """Per-generation VMEM cap: ~48 MiB on v7x (64 MiB phys), up to 96 MiB on v5e/v6e."""
    try:
        phys = int(pltpu.get_tpu_info().vmem_capacity_bytes)
    except Exception:
        phys = 64 << 20            # conservative (v7x-sized) fallback
    return min(phys * 3 // 4, 96 << 20)


def _token_budget(d_model, inner, heads, group_len, vmem_budget):
    """Rough per-token VMEM estimate -> max tokens per grid step."""
    weight_bytes = 2 * 8 * d_model * inner              # bf16 qkv+out, worst-case 2 bufs
    per_token = (16 * d_model                            # x/out blocks, double-buffered f32
                 + 10 * d_model                          # xn f32 + xb bf16 + y f32
                 + 18 * inner                            # q/k/v f32 + bf16 casts
                 + 4 * inner                             # ctx scratch (f32)
                 + 8 * heads * min(group_len, 512))      # per-head scores / probs
    avail = vmem_budget - weight_bytes - (4 << 20)       # headroom
    return max(group_len, avail // per_token)


def _choose_groups_per_block(t, n, *, max_tokens, sublane, min_steps=1):
    """Largest group count per grid step with a layout-legal, VMEM-friendly slab."""
    divisors = [g for g in range(1, t + 1) if t % g == 0]
    # Block second-to-last dim must be a multiple of the sublane pack, or full extent.
    legal = [g for g in divisors if g == t or (g * n) % sublane == 0]
    if not legal:
        return t                                   # full extent is always layout-legal
    fits = [g for g in legal if g * n <= max_tokens]
    if fits:
        stepped = [g for g in fits if t // g >= min_steps]
        return max(stepped) if stepped else max(fits)
    return min(legal)                              # nothing fits: smallest legal slab


def group_attention(x, wq, wkv, wo, gamma, beta, inputs_size, *, heads,
                    dim_head, eps=1e-5, groups_per_block=None):
    """x: (B, t*n, D); wq: (D, inner); wkv: (D, 2*inner); wo: (inner, D)."""
    t, n = inputs_size
    B, S, D = x.shape
    assert S == t * n
    inner = heads * dim_head
    assert wq.shape == (D, inner) and wkv.shape == (D, 2 * inner)
    assert wo.shape == (inner, D)

    vmem_budget = _vmem_budget_bytes()
    if groups_per_block is None:
        max_tokens = _token_budget(D, inner, heads, n, vmem_budget)
        min_steps = 2 if (B == 1 and t > 1) else 1   # keep both v7x TCs busy
        G = _choose_groups_per_block(t, n, max_tokens=max_tokens,
                                     sublane=_sublane(x.dtype),
                                     min_steps=min_steps)
    else:
        G = groups_per_block
    assert t % G == 0
    s_blk = G * n
    block_diag = (n % 8 == 0)    # in-kernel (G, n, dh) f32 reshape needs n % 8 == 0

    # ---- host-side weight prep (lane-dense 2-D weights, free at trace time) ----
    wdt = jnp.bfloat16
    scale = dim_head ** (-0.5)
    wq2 = (wq * scale).astype(wdt)          # (D, inner), q scale folded in
    wk2 = wkv[:, :inner].astype(wdt)        # (D, inner)
    wv2 = wkv[:, inner:].astype(wdt)        # (D, inner)
    wo2 = wo.astype(wdt)                    # (inner, D)
    gamma2 = gamma.reshape(1, D).astype(jnp.float32)
    beta2 = beta.reshape(1, D).astype(jnp.float32)

    kernel = functools.partial(_group_attention_kernel, heads=heads,
                               dim_head=dim_head, group_len=n,
                               groups=s_blk // n, eps=eps, block_diag=block_diag)

    cost = pl.CostEstimate(
        flops=int(8 * B * S * D * inner + 4 * B * S * n * inner),
        transcendentals=int(B * heads * S * n + B * S),
        bytes_accessed=int(x.size * jnp.dtype(x.dtype).itemsize
                           + B * S * D * 4 + 8 * D * inner))

    def build(single_buffer_consts):
        const_kw = {}
        if single_buffer_consts and hasattr(pl, "Buffered"):
            const_kw = dict(pipeline_mode=pl.Buffered(1))   # constant blocks: 1 buffer
        w_in_spec = pl.BlockSpec((D, inner), lambda b, gi: (0, 0), **const_kw)
        wo_spec = pl.BlockSpec((inner, D), lambda b, gi: (0, 0), **const_kw)
        vec_spec = pl.BlockSpec((1, D), lambda b, gi: (0, 0), **const_kw)
        return pl.pallas_call(
            kernel,
            out_shape=jax.ShapeDtypeStruct((B, S, D), x.dtype),
            grid_spec=pltpu.PrefetchScalarGridSpec(
                num_scalar_prefetch=0,
                grid=(B, t // G),
                in_specs=[
                    pl.BlockSpec((1, s_blk, D), lambda b, gi: (b, gi, 0)),   # x
                    w_in_spec, w_in_spec, w_in_spec,                         # Wq Wk Wv
                    wo_spec,                                                 # Wo
                    vec_spec, vec_spec,                                      # gamma, beta
                ],
                out_specs=pl.BlockSpec((1, s_blk, D), lambda b, gi: (b, gi, 0)),
                scratch_shapes=[pltpu.VMEM((s_blk, inner), jnp.float32)],    # merged heads
            ),
            compiler_params=pltpu.CompilerParams(
                dimension_semantics=("parallel", "parallel"),
                vmem_limit_bytes=vmem_budget),
            cost_estimate=cost,
        )

    args = (x, wq2, wk2, wv2, wo2, gamma2, beta2)
    try:
        return build(True)(*args)
    except Exception:
        # pipeline_mode single-buffering unavailable on this build: default buffering.
        return build(False)(*args)


def group_attention_ref(x, wq, wkv, wo, gamma, beta, inputs_size, *, heads,
                        dim_head, eps=1e-5):
    """Pure-JAX f32 reference mirroring the PyTorch forward."""
    t, n = inputs_size
    B, S, D = x.shape
    inner = heads * dim_head
    mu = jnp.mean(x, axis=-1, keepdims=True)
    var = jnp.mean((x - mu) ** 2, axis=-1, keepdims=True)
    xn = (x - mu) / jnp.sqrt(var + eps) * gamma + beta
    q = xn @ wq
    kv = xn @ wkv
    k, v = kv[..., :inner], kv[..., inner:]

    def split(a):  # b (t n) (h d) -> b h t n d
        a = a.reshape(B, t, n, heads, dim_head)
        return jnp.transpose(a, (0, 3, 1, 2, 4))

    q, k, v = split(q) * dim_head ** (-0.5), split(k), split(v)
    sim = jnp.einsum('bhtid,bhtjd->bhtij', q, k)
    sim = sim - jnp.max(sim, axis=-1, keepdims=True)
    attn = jax.nn.softmax(sim, axis=-1)
    out = jnp.einsum('bhtij,bhtjd->bhtid', attn, v)
    out = jnp.transpose(out, (0, 2, 3, 1, 4)).reshape(B, S, inner)
    return out @ wo


if __name__ == "__main__":
    # Small, TPU-friendly shapes: dim=32, heads=4, dim_head=8 -> inner=32
    B, t, n, D = 2, 2, 8, 32
    heads, dim_head = 4, 8
    inner = heads * dim_head
    S = t * n

    key = jax.random.PRNGKey(0)
    kx, kq, kkv, ko, kg, kb = jax.random.split(key, 6)
    x = jax.random.normal(kx, (B, S, D), dtype=jnp.float32)
    wq = jax.random.normal(kq, (D, inner), dtype=jnp.float32) * 0.05
    wkv = jax.random.normal(kkv, (D, 2 * inner), dtype=jnp.float32) * 0.05
    wo = jax.random.normal(ko, (inner, D), dtype=jnp.float32) * 0.05
    gamma = jnp.ones((D,), jnp.float32) + 0.01 * jax.random.normal(kg, (D,))
    beta = 0.01 * jax.random.normal(kb, (D,), dtype=jnp.float32)

    y = group_attention(x, wq, wkv, wo, gamma, beta, (t, n),
                        heads=heads, dim_head=dim_head)
    y = jax.block_until_ready(y)

    y_ref = group_attention_ref(x, wq, wkv, wo, gamma, beta, (t, n),
                                heads=heads, dim_head=dim_head)
    assert y.shape == (B, S, D)
    # bf16 matmul operands + approx reciprocal => relaxed tolerance vs f32 ref.
    err = float(jnp.max(jnp.abs(y - y_ref)))
    assert err < 2e-2, err
    print("KERNEL_OK")
</pallas_src>

<mosaic_0001>
module attributes {stable_mosaic.version = 11 : i64} {
  func.func @_group_attention_kernel(%arg0: i32, %arg1: i32, %arg2: memref<1x16x32xf32, #tpu.memory_space<vmem>>, %arg3: memref<32x32xbf16, #tpu.memory_space<vmem>>, %arg4: memref<32x32xbf16, #tpu.memory_space<vmem>>, %arg5: memref<32x32xbf16, #tpu.memory_space<vmem>>, %arg6: memref<32x32xbf16, #tpu.memory_space<vmem>>, %arg7: memref<1x32xf32, #tpu.memory_space<vmem>>, %arg8: memref<1x32xf32, #tpu.memory_space<vmem>>, %arg9: memref<1x16x32xf32, #tpu.memory_space<vmem>>, %arg10: memref<16x32xf32, #tpu.memory_space<vmem>>) attributes {dimension_semantics = [#tpu.dimension_semantics<parallel>, #tpu.dimension_semantics<parallel>], iteration_bounds = array<i64: 2, 1>, scalar_prefetch = 0 : i64, scratch_operands = 1 : i64, tpu.core_type = #tpu.core_type<tc>, window_params = [{transform_indices = @transform_0, window_bounds = array<i64: 1, 16, 32>}, {pipeline_mode = #tpu.pipeline_mode<synchronous>, transform_indices = @transform_1, window_bounds = array<i64: 32, 32>}, {pipeline_mode = #tpu.pipeline_mode<synchronous>, transform_indices = @transform_2, window_bounds = array<i64: 32, 32>}, {pipeline_mode = #tpu.pipeline_mode<synchronous>, transform_indices = @transform_3, window_bounds = array<i64: 32, 32>}, {pipeline_mode = #tpu.pipeline_mode<synchronous>, transform_indices = @transform_4, window_bounds = array<i64: 32, 32>}, {pipeline_mode = #tpu.pipeline_mode<synchronous>, transform_indices = @transform_5, window_bounds = array<i64: 1, 32>}, {pipeline_mode = #tpu.pipeline_mode<synchronous>, transform_indices = @transform_6, window_bounds = array<i64: 1, 32>}, {transform_indices = @transform_7, window_bounds = array<i64: 1, 16, 32>}]} {
    %c0 = arith.constant 0 : index
    %c0_0 = arith.constant 0 : index
    %c0_1 = arith.constant 0 : index
    %0 = vector.load %arg2[%c0, %c0_0, %c0_1] : memref<1x16x32xf32, #tpu.memory_space<vmem>>, vector<1x16x32xf32>
    %1 = vector.shape_cast %0 : vector<1x16x32xf32> to vector<16x32xf32>
    %c0_2 = arith.constant 0 : index
    %c0_3 = arith.constant 0 : index
    %2 = vector.load %arg7[%c0_2, %c0_3] : memref<1x32xf32, #tpu.memory_space<vmem>>, vector<1x32xf32>
    %3 = vector.shape_cast %2 : vector<1x32xf32> to vector<32xf32>
    %c0_4 = arith.constant 0 : index
    %c0_5 = arith.constant 0 : index
    %4 = vector.load %arg8[%c0_4, %c0_5] : memref<1x32xf32, #tpu.memory_space<vmem>>, vector<1x32xf32>
    %5 = vector.shape_cast %4 : vector<1x32xf32> to vector<32xf32>
    %cst = arith.constant dense<0.000000e+00> : vector<16xf32>
    %6 = vector.multi_reduction <add>, %1, %cst [1] : vector<16x32xf32> to vector<16xf32>
    %7 = vector.shape_cast %6 : vector<16xf32> to vector<16x1xf32>
    %cst_6 = arith.constant 3.200000e+01 : f32
    %8 = vector.broadcast %cst_6 : f32 to vector<16x1xf32>
    %9 = arith.divf %7, %8 : vector<16x1xf32>
    %10 = vector.broadcast %9 : vector<16x1xf32> to vector<16x32xf32>
    %11 = arith.subf %1, %10 : vector<16x32xf32>
    %12 = arith.mulf %11, %11 : vector<16x32xf32>
    %cst_7 = arith.constant dense<0.000000e+00> : vector<16xf32>
    %13 = vector.multi_reduction <add>, %12, %cst_7 [1] : vector<16x32xf32> to vector<16xf32>
    %14 = vector.shape_cast %13 : vector<16xf32> to vector<16x1xf32>
    %cst_8 = arith.constant 3.200000e+01 : f32
    %15 = vector.broadcast %cst_8 : f32 to vector<16x1xf32>
    %16 = arith.divf %14, %15 : vector<16x1xf32>
    %cst_9 = arith.constant 9.99999974E-6 : f32
    %17 = vector.broadcast %cst_9 : f32 to vector<16x1xf32>
    %18 = arith.addf %16, %17 : vector<16x1xf32>
    %19 = math.rsqrt %18 : vector<16x1xf32>
    %20 = vector.broadcast %19 : vector<16x1xf32> to vector<16x32xf32>
    %21 = arith.mulf %11, %20 : vector<16x32xf32>
    %22 = vector.shape_cast %3 : vector<32xf32> to vector<1x32xf32>
    %23 = vector.broadcast %22 : vector<1x32xf32> to vector<16x32xf32>
    %24 = arith.mulf %21, %23 : vector<16x32xf32>
    %25 = vector.shape_cast %5 : vector<32xf32> to vector<1x32xf32>
    %26 = vector.broadcast %25 : vector<1x32xf32> to vector<16x32xf32>
    %27 = arith.addf %24, %26 : vector<16x32xf32>
    %28 = arith.truncf %27 : vector<16x32xf32> to vector<16x32xbf16>
    %c0_10 = arith.constant 0 : index
    %c0_11 = arith.constant 0 : index
    %29 = vector.load %arg3[%c0_10, %c0_11] : memref<32x32xbf16, #tpu.memory_space<vmem>>, vector<32x32xbf16>
    %cst_12 = arith.constant dense<0.000000e+00> : vector<16x32xf32>
    %30 = tpu.matmul %28, %29, %cst_12 {dimension_numbers = #tpu.dot_dimension_numbers<[1], [0], [0], [1], [0, 0, 1, 1], [], []>} : vector<16x32xbf16>, vector<32x32xbf16>, vector<16x32xf32> -> vector<16x32xf32>
    %c0_13 = arith.constant 0 : index
    %c0_14 = arith.constant 0 : index
    %31 = vector.load %arg4[%c0_13, %c0_14] : memref<32x32xbf16, #tpu.memory_space<vmem>>, vector<32x32xbf16>
    %cst_15 = arith.constant dense<0.000000e+00> : vector<16x32xf32>
    %32 = tpu.matmul %28, %31, %cst_15 {dimension_numbers = #tpu.dot_dimension_numbers<[1], [0], [0], [1], [0, 0, 1, 1], [], []>} : vector<16x32xbf16>, vector<32x32xbf16>, vector<16x32xf32> -> vector<16x32xf32>
    %c0_16 = arith.constant 0 : index
    %c0_17 = arith.constant 0 : index
    %33 = vector.load %arg5[%c0_16, %c0_17] : memref<32x32xbf16, #tpu.memory_space<vmem>>, vector<32x32xbf16>
    %cst_18 = arith.constant dense<0.000000e+00> : vector<16x32xf32>
    %34 = tpu.matmul %28, %33, %cst_18 {dimension_numbers = #tpu.dot_dimension_numbers<[1], [0], [0], [1], [0, 0, 1, 1], [], []>} : vector<16x32xbf16>, vector<32x32xbf16>, vector<16x32xf32> -> vector<16x32xf32>
    %35 = vector.extract_strided_slice %30 {offsets = [0, 0], sizes = [16, 8], strides = [1, 1]} : vector<16x32xf32> to vector<16x8xf32>
    %36 = vector.extract_strided_slice %32 {offsets = [0, 0], sizes = [16, 8], strides = [1, 1]} : vector<16x32xf32> to vector<16x8xf32>
    %37 = vector.extract_strided_slice %34 {offsets = [0, 0], sizes = [16, 8], strides = [1, 1]} : vector<16x32xf32> to vector<16x8xf32>
    %38 = vector.shape_cast %35 : vector<16x8xf32> to vector<2x8x8xf32>
    %39 = arith.truncf %38 : vector<2x8x8xf32> to vector<2x8x8xbf16>
    %40 = vector.shape_cast %36 : vector<16x8xf32> to vector<2x8x8xf32>
    %41 = arith.truncf %40 : vector<2x8x8xf32> to vector<2x8x8xbf16>
    %42 = vector.shape_cast %37 : vector<16x8xf32> to vector<2x8x8xf32>
    %43 = arith.truncf %42 : vector<2x8x8xf32> to vector<2x8x8xbf16>
    "tpu.trace_start"() <{level = 10 : i32, message = "gid,gjd->gij"}> : () -> ()
    %cst_19 = arith.constant dense<0.000000e+00> : vector<2x8x8xf32>
    %44 = tpu.matmul %39, %41, %cst_19 {dimension_numbers = #tpu.dot_dimension_numbers<[2], [2], [1], [1], [0, 0, 0, 1, 1, 1], [0], [0]>} : vector<2x8x8xbf16>, vector<2x8x8xbf16>, vector<2x8x8xf32> -> vector<2x8x8xf32>
    "tpu.trace_stop"() : () -> ()
    %cst_20 = arith.constant dense<0xFF800000> : vector<2x8xf32>
    %45 = vector.multi_reduction <maximumf>, %44, %cst_20 [2] : vector<2x8x8xf32> to vector<2x8xf32>
    %46 = vector.shape_cast %45 : vector<2x8xf32> to vector<2x8x1xf32>
    %47 = vector.broadcast %46 : vector<2x8x1xf32> to vector<2x8x8xf32>
    %48 = arith.subf %44, %47 : vector<2x8x8xf32>
    %49 = math.exp %48 : vector<2x8x8xf32>
    %cst_21 = arith.constant dense<0.000000e+00> : vector<2x8xf32>
    %50 = vector.multi_reduction <add>, %49, %cst_21 [2] : vector<2x8x8xf32> to vector<2x8xf32>
    %51 = vector.shape_cast %50 : vector<2x8xf32> to vector<2x8x1xf32>
    %52 = tpu.reciprocal %51 {approx = true} : vector<2x8x1xf32> -> vector<2x8x1xf32>
    %53 = vector.broadcast %52 : vector<2x8x1xf32> to vector<2x8x8xf32>
    %54 = arith.mulf %49, %53 : vector<2x8x8xf32>
    %55 = arith.truncf %54 : vector<2x8x8xf32> to vector<2x8x8xbf16>
    "tpu.trace_start"() <{level = 10 : i32, message = "gij,gjd->gid"}> : () -> ()
    %cst_22 = arith.constant dense<0.000000e+00> : vector<2x8x8xf32>
    %56 = tpu.matmul %55, %43, %cst_22 {dimension_numbers = #tpu.dot_dimension_numbers<[2], [1], [1], [2], [0, 0, 0, 1, 1, 2], [0], [0]>} : vector<2x8x8xbf16>, vector<2x8x8xbf16>, vector<2x8x8xf32> -> vector<2x8x8xf32>
    "tpu.trace_stop"() : () -> ()
    %57 = vector.shape_cast %56 : vector<2x8x8xf32> to vector<16x8xf32>
    %c0_23 = arith.constant 0 : index
    %c0_24 = arith.constant 0 : index
    %58 = vector.load %arg10[%c0_23, %c0_24] : memref<16x32xf32, #tpu.memory_space<vmem>>, vector<16x8xf32>
    tpu.vector_store %arg10[%c0_23, %c0_24], %57 {strides = array<i32>} : memref<16x32xf32, #tpu.memory_space<vmem>>, vector<16x8xf32>,
    %59 = vector.extract_strided_slice %30 {offsets = [0, 8], sizes = [16, 8], strides = [1, 1]} : vector<16x32xf32> to vector<16x8xf32>
    %60 = vector.extract_strided_slice %32 {offsets = [0, 8], sizes = [16, 8], strides = [1, 1]} : vector<16x32xf32> to vector<16x8xf32>
    %61 = vector.extract_strided_slice %34 {offsets = [0, 8], sizes = [16, 8], strides = [1, 1]} : vector<16x32xf32> to vector<16x8xf32>
    %62 = vector.shape_cast %59 : vector<16x8xf32> to vector<2x8x8xf32>
    %63 = arith.truncf %62 : vector<2x8x8xf32> to vector<2x8x8xbf16>
    %64 = vector.shape_cast %60 : vector<16x8xf32> to vector<2x8x8xf32>
    %65 = arith.truncf %64 : vector<2x8x8xf32> to vector<2x8x8xbf16>
    %66 = vector.shape_cast %61 : vector<16x8xf32> to vector<2x8x8xf32>
    %67 = arith.truncf %66 : vector<2x8x8xf32> to vector<2x8x8xbf16>
    "tpu.trace_start"() <{level = 10 : i32, message = "gid,gjd->gij"}> : () -> ()
    %cst_25 = arith.constant dense<0.000000e+00> : vector<2x8x8xf32>
    %68 = tpu.matmul %63, %65, %cst_25 {dimension_numbers = #tpu.dot_dimension_numbers<[2], [2], [1], [1], [0, 0, 0, 1, 1, 1], [0], [0]>} : vector<2x8x8xbf16>, vector<2x8x8xbf16>, vector<2x8x8xf32> -> vector<2x8x8xf32>
    "tpu.trace_stop"() : () -> ()
    %cst_26 = arith.constant dense<0xFF800000> : vector<2x8xf32>
    %69 = vector.multi_reduction <maximumf>, %68, %cst_26 [2] : vector<2x8x8xf32> to vector<2x8xf32>
    %70 = vector.shape_cast %69 : vector<2x8xf32> to vector<2x8x1xf32>
    %71 = vector.broadcast %70 : vector<2x8x1xf32> to vector<2x8x8xf32>
    %72 = arith.subf %68, %71 : vector<2x8x8xf32>
    %73 = math.exp %72 : vector<2x8x8xf32>
    %cst_27 = arith.constant dense<0.000000e+00> : vector<2x8xf32>
    %74 = vector.multi_reduction <add>, %73, %cst_27 [2] : vector<2x8x8xf32> to vector<2x8xf32>
    %75 = vector.shape_cast %74 : vector<2x8xf32> to vector<2x8x1xf32>
    %76 = tpu.reciprocal %75 {approx = true} : vector<2x8x1xf32> -> vector<2x8x1xf32>
    %77 = vector.broadcast %76 : vector<2x8x1xf32> to vector<2x8x8xf32>
    %78 = arith.mulf %73, %77 : vector<2x8x8xf32>
    %79 = arith.truncf %78 : vector<2x8x8xf32> to vector<2x8x8xbf16>
    "tpu.trace_start"() <{level = 10 : i32, message = "gij,gjd->gid"}> : () -> ()
    %cst_28 = arith.constant dense<0.000000e+00> : vector<2x8x8xf32>
    %80 = tpu.matmul %79, %67, %cst_28 {dimension_numbers = #tpu.dot_dimension_numbers<[2], [1], [1], [2], [0, 0, 0, 1, 1, 2], [0], [0]>} : vector<2x8x8xbf16>, vector<2x8x8xbf16>, vector<2x8x8xf32> -> vector<2x8x8xf32>
    "tpu.trace_stop"() : () -> ()
    %81 = vector.shape_cast %80 : vector<2x8x8xf32> to vector<16x8xf32>
    %c0_29 = arith.constant 0 : index
    %c8 = arith.constant 8 : index
    %82 = vector.load %arg10[%c0_29, %c8] : memref<16x32xf32, #tpu.memory_space<vmem>>, vector<16x8xf32>
    tpu.vector_store %arg10[%c0_29, %c8], %81 {strides = array<i32>} : memref<16x32xf32, #tpu.memory_space<vmem>>, vector<16x8xf32>,
    %83 = vector.extract_strided_slice %30 {offsets = [0, 16], sizes = [16, 8], strides = [1, 1]} : vector<16x32xf32> to vector<16x8xf32>
    %84 = vector.extract_strided_slice %32 {offsets = [0, 16], sizes = [16, 8], strides = [1, 1]} : vector<16x32xf32> to vector<16x8xf32>
    %85 = vector.extract_strided_slice %34 {offsets = [0, 16], sizes = [16, 8], strides = [1, 1]} : vector<16x32xf32> to vector<16x8xf32>
    %86 = vector.shape_cast %83 : vector<16x8xf32> to vector<2x8x8xf32>
    %87 = arith.truncf %86 : vector<2x8x8xf32> to vector<2x8x8xbf16>
    %88 = vector.shape_cast %84 : vector<16x8xf32> to vector<2x8x8xf32>
    %89 = arith.truncf %88 : vector<2x8x8xf32> to vector<2x8x8xbf16>
    %90 = vector.shape_cast %85 : vector<16x8xf32> to vector<2x8x8xf32>
    %91 = arith.truncf %90 : vector<2x8x8xf32> to vector<2x8x8xbf16>
    "tpu.trace_start"() <{level = 10 : i32, message = "gid,gjd->gij"}> : () -> ()
    %cst_30 = arith.constant dense<0.000000e+00> : vector<2x8x8xf32>
    %92 = tpu.matmul %87, %89, %cst_30 {dimension_numbers = #tpu.dot_dimension_numbers<[2], [2], [1], [1], [0, 0, 0, 1, 1, 1], [0], [0]>} : vector<2x8x8xbf16>, vector<2x8x8xbf16>, vector<2x8x8xf32> -> vector<2x8x8xf32>
    "tpu.trace_stop"() : () -> ()
    %cst_31 = arith.constant dense<0xFF800000> : vector<2x8xf32>
    %93 = vector.multi_reduction <maximumf>, %92, %cst_31 [2] : vector<2x8x8xf32> to vector<2x8xf32>
    %94 = vector.shape_cast %93 : vector<2x8xf32> to vector<2x8x1xf32>
    %95 = vector.broadcast %94 : vector<2x8x1xf32> to vector<2x8x8xf32>
    %96 = arith.subf %92, %95 : vector<2x8x8xf32>
    %97 = math.exp %96 : vector<2x8x8xf32>
    %cst_32 = arith.constant dense<0.000000e+00> : vector<2x8xf32>
    %98 = vector.multi_reduction <add>, %97, %cst_32 [2] : vector<2x8x8xf32> to vector<2x8xf32>
    %99 = vector.shape_cast %98 : vector<2x8xf32> to vector<2x8x1xf32>
    %100 = tpu.reciprocal %99 {approx = true} : vector<2x8x1xf32> -> vector<2x8x1xf32>
    %101 = vector.broadcast %100 : vector<2x8x1xf32> to vector<2x8x8xf32>
    %102 = arith.mulf %97, %101 : vector<2x8x8xf32>
    %103 = arith.truncf %102 : vector<2x8x8xf32> to vector<2x8x8xbf16>
    "tpu.trace_start"() <{level = 10 : i32, message = "gij,gjd->gid"}> : () -> ()
    %cst_33 = arith.constant dense<0.000000e+00> : vector<2x8x8xf32>
    %104 = tpu.matmul %103, %91, %cst_33 {dimension_numbers = #tpu.dot_dimension_numbers<[2], [1], [1], [2], [0, 0, 0, 1, 1, 2], [0], [0]>} : vector<2x8x8xbf16>, vector<2x8x8xbf16>, vector<2x8x8xf32> -> vector<2x8x8xf32>
    "tpu.trace_stop"() : () -> ()
    %105 = vector.shape_cast %104 : vector<2x8x8xf32> to vector<16x8xf32>
    %c0_34 = arith.constant 0 : index
    %c16 = arith.constant 16 : index
    %106 = vector.load %arg10[%c0_34, %c16] : memref<16x32xf32, #tpu.memory_space<vmem>>, vector<16x8xf32>
    tpu.vector_store %arg10[%c0_34, %c16], %105 {strides = array<i32>} : memref<16x32xf32, #tpu.memory_space<vmem>>, vector<16x8xf32>,
    %107 = vector.extract_strided_slice %30 {offsets = [0, 24], sizes = [16, 8], strides = [1, 1]} : vector<16x32xf32> to vector<16x8xf32>
    %108 = vector.extract_strided_slice %32 {offsets = [0, 24], sizes = [16, 8], strides = [1, 1]} : vector<16x32xf32> to vector<16x8xf32>
    %109 = vector.extract_strided_slice %34 {offsets = [0, 24], sizes = [16, 8], strides = [1, 1]} : vector<16x32xf32> to vector<16x8xf32>
    %110 = vector.shape_cast %107 : vector<16x8xf32> to vector<2x8x8xf32>
    %111 = arith.truncf %110 : vector<2x8x8xf32> to vector<2x8x8xbf16>
    %112 = vector.shape_cast %108 : vector<16x8xf32> to vector<2x8x8xf32>
    %113 = arith.truncf %112 : vector<2x8x8xf32> to vector<2x8x8xbf16>
    %114 = vector.shape_cast %109 : vector<16x8xf32> to vector<2x8x8xf32>
    %115 = arith.truncf %114 : vector<2x8x8xf32> to vector<2x8x8xbf16>
    "tpu.trace_start"() <{level = 10 : i32, message = "gid,gjd->gij"}> : () -> ()
    %cst_35 = arith.constant dense<0.000000e+00> : vector<2x8x8xf32>
    %116 = tpu.matmul %111, %113, %cst_35 {dimension_numbers = #tpu.dot_dimension_numbers<[2], [2], [1], [1], [0, 0, 0, 1, 1, 1], [0], [0]>} : vector<2x8x8xbf16>, vector<2x8x8xbf16>, vector<2x8x8xf32> -> vector<2x8x8xf32>
    "tpu.trace_stop"() : () -> ()
    %cst_36 = arith.constant dense<0xFF800000> : vector<2x8xf32>
    %117 = vector.multi_reduction <maximumf>, %116, %cst_36 [2] : vector<2x8x8xf32> to vector<2x8xf32>
    %118 = vector.shape_cast %117 : vector<2x8xf32> to vector<2x8x1xf32>
    %119 = vector.broadcast %118 : vector<2x8x1xf32> to vector<2x8x8xf32>
    %120 = arith.subf %116, %119 : vector<2x8x8xf32>
    %121 = math.exp %120 : vector<2x8x8xf32>
    %cst_37 = arith.constant dense<0.000000e+00> : vector<2x8xf32>
    %122 = vector.multi_reduction <add>, %121, %cst_37 [2] : vector<2x8x8xf32> to vector<2x8xf32>
    %123 = vector.shape_cast %122 : vector<2x8xf32> to vector<2x8x1xf32>
    %124 = tpu.reciprocal %123 {approx = true} : vector<2x8x1xf32> -> vector<2x8x1xf32>
    %125 = vector.broadcast %124 : vector<2x8x1xf32> to vector<2x8x8xf32>
    %126 = arith.mulf %121, %125 : vector<2x8x8xf32>
    %127 = arith.truncf %126 : vector<2x8x8xf32> to vector<2x8x8xbf16>
    "tpu.trace_start"() <{level = 10 : i32, message = "gij,gjd->gid"}> : () -> ()
    %cst_38 = arith.constant dense<0.000000e+00> : vector<2x8x8xf32>
    %128 = tpu.matmul %127, %115, %cst_38 {dimension_numbers = #tpu.dot_dimension_numbers<[2], [1], [1], [2], [0, 0, 0, 1, 1, 2], [0], [0]>} : vector<2x8x8xbf16>, vector<2x8x8xbf16>, vector<2x8x8xf32> -> vector<2x8x8xf32>
    "tpu.trace_stop"() : () -> ()
    %129 = vector.shape_cast %128 : vector<2x8x8xf32> to vector<16x8xf32>
    %c0_39 = arith.constant 0 : index
    %c24 = arith.constant 24 : index
    %130 = vector.load %arg10[%c0_39, %c24] : memref<16x32xf32, #tpu.memory_space<vmem>>, vector<16x8xf32>
    tpu.vector_store %arg10[%c0_39, %c24], %129 {strides = array<i32>} : memref<16x32xf32, #tpu.memory_space<vmem>>, vector<16x8xf32>,
    %c0_40 = arith.constant 0 : index
    %c0_41 = arith.constant 0 : index
    %131 = vector.load %arg10[%c0_40, %c0_41] : memref<16x32xf32, #tpu.memory_space<vmem>>, vector<16x32xf32>
    %132 = arith.truncf %131 : vector<16x32xf32> to vector<16x32xbf16>
    %c0_42 = arith.constant 0 : index
    %c0_43 = arith.constant 0 : index
    %133 = vector.load %arg6[%c0_42, %c0_43] : memref<32x32xbf16, #tpu.memory_space<vmem>>, vector<32x32xbf16>
    %cst_44 = arith.constant dense<0.000000e+00> : vector<16x32xf32>
    %134 = tpu.matmul %132, %133, %cst_44 {dimension_numbers = #tpu.dot_dimension_numbers<[1], [0], [0], [1], [0, 0, 1, 1], [], []>} : vector<16x32xbf16>, vector<32x32xbf16>, vector<16x32xf32> -> vector<16x32xf32>
    %c0_45 = arith.constant 0 : index
    %c0_46 = arith.constant 0 : index
    %c0_47 = arith.constant 0 : index
    %135 = vector.load %arg9[%c0_45, %c0_46, %c0_47] : memref<1x16x32xf32, #tpu.memory_space<vmem>>, vector<1x16x32xf32>
    %136 = vector.shape_cast %135 : vector<1x16x32xf32> to vector<16x32xf32>
    %137 = vector.shape_cast %134 : vector<16x32xf32> to vector<1x16x32xf32>
    tpu.vector_store %arg9[%c0_45, %c0_46, %c0_47], %137 {strides = array<i32>} : memref<1x16x32xf32, #tpu.memory_space<vmem>>, vector<1x16x32xf32>,
    return
  }
  func.func @transform_0(%arg0: i32, %arg1: i32) -> (i32, i32, i32) {
    %c0_i32 = arith.constant 0 : i32
    %c0_i32_0 = arith.constant 0 : i32
    return %arg0, %arg1, %c0_i32 : i32, i32, i32
  }
  func.func @transform_1(%arg0: i32, %arg1: i32) -> (i32, i32) {
    %c0_i32 = arith.constant 0 : i32
    %c0_i32_0 = arith.constant 0 : i32
    %c0_i32_1 = arith.constant 0 : i32
    return %c0_i32, %c0_i32_0 : i32, i32
  }
  func.func @transform_2(%arg0: i32, %arg1: i32) -> (i32, i32) {
    %c0_i32 = arith.constant 0 : i32
    %c0_i32_0 = arith.constant 0 : i32
    %c0_i32_1 = arith.constant 0 : i32
    return %c0_i32, %c0_i32_0 : i32, i32
  }
  func.func @transform_3(%arg0: i32, %arg1: i32) -> (i32, i32) {
    %c0_i32 = arith.constant 0 : i32
    %c0_i32_0 = arith.constant 0 : i32
    %c0_i32_1 = arith.constant 0 : i32
    return %c0_i32, %c0_i32_0 : i32, i32
  }
  func.func @transform_4(%arg0: i32, %arg1: i32) -> (i32, i32) {
    %c0_i32 = arith.constant 0 : i32
    %c0_i32_0 = arith.constant 0 : i32
    %c0_i32_1 = arith.constant 0 : i32
    return %c0_i32, %c0_i32_0 : i32, i32
  }
  func.func @transform_5(%arg0: i32, %arg1: i32) -> (i32, i32) {
    %c0_i32 = arith.constant 0 : i32
    %c0_i32_0 = arith.constant 0 : i32
    %c0_i32_1 = arith.constant 0 : i32
    return %c0_i32, %c0_i32_0 : i32, i32
  }
  func.func @transform_6(%arg0: i32, %arg1: i32) -> (i32, i32) {
    %c0_i32 = arith.constant 0 : i32
    %c0_i32_0 = arith.constant 0 : i32
    %c0_i32_1 = arith.constant 0 : i32
    return %c0_i32, %c0_i32_0 : i32, i32
  }
  func.func @transform_7(%arg0: i32, %arg1: i32) -> (i32, i32, i32) {
    %c0_i32 = arith.constant 0 : i32
    %c0_i32_0 = arith.constant 0 : i32
    return %arg0, %arg1, %c0_i32 : i32, i32, i32
  }
}

module attributes {stable_mosaic.version = 11 : i64} {
  func.func @_group_attention_kernel(%arg0: i32, %arg1: i32, %arg2: memref<1x16x32xf32, #tpu.memory_space<vmem>>, %arg3: memref<32x32xbf16, #tpu.memory_space<vmem>>, %arg4: memref<32x32xbf16, #tpu.memory_space<vmem>>, %arg5: memref<32x32xbf16, #tpu.memory_space<vmem>>, %arg6: memref<32x32xbf16, #tpu.memory_space<vmem>>, %arg7: memref<1x32xf32, #tpu.memory_space<vmem>>, %arg8: memref<1x32xf32, #tpu.memory_space<vmem>>, %arg9: memref<1x16x32xf32, #tpu.memory_space<vmem>>, %arg10: memref<16x32xf32, #tpu.memory_space<vmem>>) attributes {dimension_semantics = [#tpu.dimension_semantics<parallel>, #tpu.dimension_semantics<parallel>], iteration_bounds = array<i64: 2, 1>, scalar_prefetch = 0 : i64, scratch_operands = 1 : i64, tpu.core_type = #tpu.core_type<tc>, window_params = [{transform_indices = @transform_0, window_bounds = array<i64: 1, 16, 32>}, {pipeline_mode = #tpu.pipeline_mode<synchronous>, transform_indices = @transform_1, window_bounds = array<i64: 32, 32>}, {pipeline_mode = #tpu.pipeline_mode<synchronous>, transform_indices = @transform_2, window_bounds = array<i64: 32, 32>}, {pipeline_mode = #tpu.pipeline_mode<synchronous>, transform_indices = @transform_3, window_bounds = array<i64: 32, 32>}, {pipeline_mode = #tpu.pipeline_mode<synchronous>, transform_indices = @transform_4, window_bounds = array<i64: 32, 32>}, {pipeline_mode = #tpu.pipeline_mode<synchronous>, transform_indices = @transform_5, window_bounds = array<i64: 1, 32>}, {pipeline_mode = #tpu.pipeline_mode<synchronous>, transform_indices = @transform_6, window_bounds = array<i64: 1, 32>}, {transform_indices = @transform_7, window_bounds = array<i64: 1, 16, 32>}]} {
    %c0 = arith.constant 0 : index
    %c0_0 = arith.constant 0 : index
    %c0_1 = arith.constant 0 : index
    %0 = vector.load %arg2[%c0, %c0_0, %c0_1] : memref<1x16x32xf32, #tpu.memory_space<vmem>>, vector<1x16x32xf32>
    %1 = vector.shape_cast %0 : vector<1x16x32xf32> to vector<16x32xf32>
    %c0_2 = arith.constant 0 : index
    %c0_3 = arith.constant 0 : index
    %2 = vector.load %arg7[%c0_2, %c0_3] : memref<1x32xf32, #tpu.memory_space<vmem>>, vector<1x32xf32>
    %3 = vector.shape_cast %2 : vector<1x32xf32> to vector<32xf32>
    %c0_4 = arith.constant 0 : index
    %c0_5 = arith.constant 0 : index
    %4 = vector.load %arg8[%c0_4, %c0_5] : memref<1x32xf32, #tpu.memory_space<vmem>>, vector<1x32xf32>
    %5 = vector.shape_cast %4 : vector<1x32xf32> to vector<32xf32>
    %cst = arith.constant dense<0.000000e+00> : vector<16xf32>
    %6 = vector.multi_reduction <add>, %1, %cst [1] : vector<16x32xf32> to vector<16xf32>
    %7 = vector.shape_cast %6 : vector<16xf32> to vector<16x1xf32>
    %cst_6 = arith.constant 3.200000e+01 : f32
    %8 = vector.broadcast %cst_6 : f32 to vector<16x1xf32>
    %9 = arith.divf %7, %8 : vector<16x1xf32>
    %10 = vector.broadcast %9 : vector<16x1xf32> to vector<16x32xf32>
    %11 = arith.subf %1, %10 : vector<16x32xf32>
    %12 = arith.mulf %11, %11 : vector<16x32xf32>
    %cst_7 = arith.constant dense<0.000000e+00> : vector<16xf32>
    %13 = vector.multi_reduction <add>, %12, %cst_7 [1] : vector<16x32xf32> to vector<16xf32>
    %14 = vector.shape_cast %13 : vector<16xf32> to vector<16x1xf32>
    %cst_8 = arith.constant 3.200000e+01 : f32
    %15 = vector.broadcast %cst_8 : f32 to vector<16x1xf32>
    %16 = arith.divf %14, %15 : vector<16x1xf32>
    %cst_9 = arith.constant 9.99999974E-6 : f32
    %17 = vector.broadcast %cst_9 : f32 to vector<16x1xf32>
    %18 = arith.addf %16, %17 : vector<16x1xf32>
    %19 = math.rsqrt %18 : vector<16x1xf32>
    %20 = vector.broadcast %19 : vector<16x1xf32> to vector<16x32xf32>
    %21 = arith.mulf %11, %20 : vector<16x32xf32>
    %22 = vector.shape_cast %3 : vector<32xf32> to vector<1x32xf32>
    %23 = vector.broadcast %22 : vector<1x32xf32> to vector<16x32xf32>
    %24 = arith.mulf %21, %23 : vector<16x32xf32>
    %25 = vector.shape_cast %5 : vector<32xf32> to vector<1x32xf32>
    %26 = vector.broadcast %25 : vector<1x32xf32> to vector<16x32xf32>
    %27 = arith.addf %24, %26 : vector<16x32xf32>
    %28 = arith.truncf %27 : vector<16x32xf32> to vector<16x32xbf16>
    %c0_10 = arith.constant 0 : index
    %c0_11 = arith.constant 0 : index
    %29 = vector.load %arg3[%c0_10, %c0_11] : memref<32x32xbf16, #tpu.memory_space<vmem>>, vector<32x32xbf16>
    %cst_12 = arith.constant dense<0.000000e+00> : vector<16x32xf32>
    %30 = tpu.matmul %28, %29, %cst_12 {dimension_numbers = #tpu.dot_dimension_numbers<[1], [0], [0], [1], [0, 0, 1, 1], [], []>} : vector<16x32xbf16>, vector<32x32xbf16>, vector<16x32xf32> -> vector<16x32xf32>
    %c0_13 = arith.constant 0 : index
    %c0_14 = arith.constant 0 : index
    %31 = vector.load %arg4[%c0_13, %c0_14] : memref<32x32xbf16, #tpu.memory_space<vmem>>, vector<32x32xbf16>
    %cst_15 = arith.constant dense<0.000000e+00> : vector<16x32xf32>
    %32 = tpu.matmul %28, %31, %cst_15 {dimension_numbers = #tpu.dot_dimension_numbers<[1], [0], [0], [1], [0, 0, 1, 1], [], []>} : vector<16x32xbf16>, vector<32x32xbf16>, vector<16x32xf32> -> vector<16x32xf32>
    %c0_16 = arith.constant 0 : index
    %c0_17 = arith.constant 0 : index
    %33 = vector.load %arg5[%c0_16, %c0_17] : memref<32x32xbf16, #tpu.memory_space<vmem>>, vector<32x32xbf16>
    %cst_18 = arith.constant dense<0.000000e+00> : vector<16x32xf32>
    %34 = tpu.matmul %28, %33, %cst_18 {dimension_numbers = #tpu.dot_dimension_numbers<[1], [0], [0], [1], [0, 0, 1, 1], [], []>} : vector<16x32xbf16>, vector<32x32xbf16>, vector<16x32xf32> -> vector<16x32xf32>
    %35 = vector.extract_strided_slice %30 {offsets = [0, 0], sizes = [16, 8], strides = [1, 1]} : vector<16x32xf32> to vector<16x8xf32>
    %36 = vector.extract_strided_slice %32 {offsets = [0, 0], sizes = [16, 8], strides = [1, 1]} : vector<16x32xf32> to vector<16x8xf32>
    %37 = vector.extract_strided_slice %34 {offsets = [0, 0], sizes = [16, 8], strides = [1, 1]} : vector<16x32xf32> to vector<16x8xf32>
    %38 = vector.shape_cast %35 : vector<16x8xf32> to vector<2x8x8xf32>
    %39 = arith.truncf %38 : vector<2x8x8xf32> to vector<2x8x8xbf16>
    %40 = vector.shape_cast %36 : vector<16x8xf32> to vector<2x8x8xf32>
    %41 = arith.truncf %40 : vector<2x8x8xf32> to vector<2x8x8xbf16>
    %42 = vector.shape_cast %37 : vector<16x8xf32> to vector<2x8x8xf32>
    %43 = arith.truncf %42 : vector<2x8x8xf32> to vector<2x8x8xbf16>
    "tpu.trace_start"() <{level = 10 : i32, message = "gid,gjd->gij"}> : () -> ()
    %cst_19 = arith.constant dense<0.000000e+00> : vector<2x8x8xf32>
    %44 = tpu.matmul %39, %41, %cst_19 {dimension_numbers = #tpu.dot_dimension_numbers<[2], [2], [1], [1], [0, 0, 0, 1, 1, 1], [0], [0]>} : vector<2x8x8xbf16>, vector<2x8x8xbf16>, vector<2x8x8xf32> -> vector<2x8x8xf32>
    "tpu.trace_stop"() : () -> ()
    %cst_20 = arith.constant dense<0xFF800000> : vector<2x8xf32>
    %45 = vector.multi_reduction <maximumf>, %44, %cst_20 [2] : vector<2x8x8xf32> to vector<2x8xf32>
    %46 = vector.shape_cast %45 : vector<2x8xf32> to vector<2x8x1xf32>
    %47 = vector.broadcast %46 : vector<2x8x1xf32> to vector<2x8x8xf32>
    %48 = arith.subf %44, %47 : vector<2x8x8xf32>
    %49 = math.exp %48 : vector<2x8x8xf32>
    %cst_21 = arith.constant dense<0.000000e+00> : vector<2x8xf32>
    %50 = vector.multi_reduction <add>, %49, %cst_21 [2] : vector<2x8x8xf32> to vector<2x8xf32>
    %51 = vector.shape_cast %50 : vector<2x8xf32> to vector<2x8x1xf32>
    %52 = tpu.reciprocal %51 {approx = true} : vector<2x8x1xf32> -> vector<2x8x1xf32>
    %53 = vector.broadcast %52 : vector<2x8x1xf32> to vector<2x8x8xf32>
    %54 = arith.mulf %49, %53 : vector<2x8x8xf32>
    %55 = arith.truncf %54 : vector<2x8x8xf32> to vector<2x8x8xbf16>
    "tpu.trace_start"() <{level = 10 : i32, message = "gij,gjd->gid"}> : () -> ()
    %cst_22 = arith.constant dense<0.000000e+00> : vector<2x8x8xf32>
    %56 = tpu.matmul %55, %43, %cst_22 {dimension_numbers = #tpu.dot_dimension_numbers<[2], [1], [1], [2], [0, 0, 0, 1, 1, 2], [0], [0]>} : vector<2x8x8xbf16>, vector<2x8x8xbf16>, vector<2x8x8xf32> -> vector<2x8x8xf32>
    "tpu.trace_stop"() : () -> ()
    %57 = vector.shape_cast %56 : vector<2x8x8xf32> to vector<16x8xf32>
    %c0_23 = arith.constant 0 : index
    %c0_24 = arith.constant 0 : index
    %58 = vector.load %arg10[%c0_23, %c0_24] : memref<16x32xf32, #tpu.memory_space<vmem>>, vector<16x8xf32>
    tpu.vector_store %arg10[%c0_23, %c0_24], %57 {strides = array<i32>} : memref<16x32xf32, #tpu.memory_space<vmem>>, vector<16x8xf32>,
    %59 = vector.extract_strided_slice %30 {offsets = [0, 8], sizes = [16, 8], strides = [1, 1]} : vector<16x32xf32> to vector<16x8xf32>
    %60 = vector.extract_strided_slice %32 {offsets = [0, 8], sizes = [16, 8], strides = [1, 1]} : vector<16x32xf32> to vector<16x8xf32>
    %61 = vector.extract_strided_slice %34 {offsets = [0, 8], sizes = [16, 8], strides = [1, 1]} : vector<16x32xf32> to vector<16x8xf32>
    %62 = vector.shape_cast %59 : vector<16x8xf32> to vector<2x8x8xf32>
    %63 = arith.truncf %62 : vector<2x8x8xf32> to vector<2x8x8xbf16>
    %64 = vector.shape_cast %60 : vector<16x8xf32> to vector<2x8x8xf32>
    %65 = arith.truncf %64 : vector<2x8x8xf32> to vector<2x8x8xbf16>
    %66 = vector.shape_cast %61 : vector<16x8xf32> to vector<2x8x8xf32>
    %67 = arith.truncf %66 : vector<2x8x8xf32> to vector<2x8x8xbf16>
    "tpu.trace_start"() <{level = 10 : i32, message = "gid,gjd->gij"}> : () -> ()
    %cst_25 = arith.constant dense<0.000000e+00> : vector<2x8x8xf32>
    %68 = tpu.matmul %63, %65, %cst_25 {dimension_numbers = #tpu.dot_dimension_numbers<[2], [2], [1], [1], [0, 0, 0, 1, 1, 1], [0], [0]>} : vector<2x8x8xbf16>, vector<2x8x8xbf16>, vector<2x8x8xf32> -> vector<2x8x8xf32>
    "tpu.trace_stop"() : () -> ()
    %cst_26 = arith.constant dense<0xFF800000> : vector<2x8xf32>
    %69 = vector.multi_reduction <maximumf>, %68, %cst_26 [2] : vector<2x8x8xf32> to vector<2x8xf32>
    %70 = vector.shape_cast %69 : vector<2x8xf32> to vector<2x8x1xf32>
    %71 = vector.broadcast %70 : vector<2x8x1xf32> to vector<2x8x8xf32>
    %72 = arith.subf %68, %71 : vector<2x8x8xf32>
    %73 = math.exp %72 : vector<2x8x8xf32>
    %cst_27 = arith.constant dense<0.000000e+00> : vector<2x8xf32>
    %74 = vector.multi_reduction <add>, %73, %cst_27 [2] : vector<2x8x8xf32> to vector<2x8xf32>
    %75 = vector.shape_cast %74 : vector<2x8xf32> to vector<2x8x1xf32>
    %76 = tpu.reciprocal %75 {approx = true} : vector<2x8x1xf32> -> vector<2x8x1xf32>
    %77 = vector.broadcast %76 : vector<2x8x1xf32> to vector<2x8x8xf32>
    %78 = arith.mulf %73, %77 : vector<2x8x8xf32>
    %79 = arith.truncf %78 : vector<2x8x8xf32> to vector<2x8x8xbf16>
    "tpu.trace_start"() <{level = 10 : i32, message = "gij,gjd->gid"}> : () -> ()
    %cst_28 = arith.constant dense<0.000000e+00> : vector<2x8x8xf32>
    %80 = tpu.matmul %79, %67, %cst_28 {dimension_numbers = #tpu.dot_dimension_numbers<[2], [1], [1], [2], [0, 0, 0, 1, 1, 2], [0], [0]>} : vector<2x8x8xbf16>, vector<2x8x8xbf16>, vector<2x8x8xf32> -> vector<2x8x8xf32>
    "tpu.trace_stop"() : () -> ()
    %81 = vector.shape_cast %80 : vector<2x8x8xf32> to vector<16x8xf32>
    %c0_29 = arith.constant 0 : index
    %c8 = arith.constant 8 : index
    %82 = vector.load %arg10[%c0_29, %c8] : memref<16x32xf32, #tpu.memory_space<vmem>>, vector<16x8xf32>
    tpu.vector_store %arg10[%c0_29, %c8], %81 {strides = array<i32>} : memref<16x32xf32, #tpu.memory_space<vmem>>, vector<16x8xf32>,
    %83 = vector.extract_strided_slice %30 {offsets = [0, 16], sizes = [16, 8], strides = [1, 1]} : vector<16x32xf32> to vector<16x8xf32>
    %84 = vector.extract_strided_slice %32 {offsets = [0, 16], sizes = [16, 8], strides = [1, 1]} : vector<16x32xf32> to vector<16x8xf32>
    %85 = vector.extract_strided_slice %34 {offsets = [0, 16], sizes = [16, 8], strides = [1, 1]} : vector<16x32xf32> to vector<16x8xf32>
    %86 = vector.shape_cast %83 : vector<16x8xf32> to vector<2x8x8xf32>
    %87 = arith.truncf %86 : vector<2x8x8xf32> to vector<2x8x8xbf16>
    %88 = vector.shape_cast %84 : vector<16x8xf32> to vector<2x8x8xf32>
    %89 = arith.truncf %88 : vector<2x8x8xf32> to vector<2x8x8xbf16>
    %90 = vector.shape_cast %85 : vector<16x8xf32> to vector<2x8x8xf32>
    %91 = arith.truncf %90 : vector<2x8x8xf32> to vector<2x8x8xbf16>
    "tpu.trace_start"() <{level = 10 : i32, message = "gid,gjd->gij"}> : () -> ()
    %cst_30 = arith.constant dense<0.000000e+00> : vector<2x8x8xf32>
    %92 = tpu.matmul %87, %89, %cst_30 {dimension_numbers = #tpu.dot_dimension_numbers<[2], [2], [1], [1], [0, 0, 0, 1, 1, 1], [0], [0]>} : vector<2x8x8xbf16>, vector<2x8x8xbf16>, vector<2x8x8xf32> -> vector<2x8x8xf32>
    "tpu.trace_stop"() : () -> ()
    %cst_31 = arith.constant dense<0xFF800000> : vector<2x8xf32>
    %93 = vector.multi_reduction <maximumf>, %92, %cst_31 [2] : vector<2x8x8xf32> to vector<2x8xf32>
    %94 = vector.shape_cast %93 : vector<2x8xf32> to vector<2x8x1xf32>
    %95 = vector.broadcast %94 : vector<2x8x1xf32> to vector<2x8x8xf32>
    %96 = arith.subf %92, %95 : vector<2x8x8xf32>
    %97 = math.exp %96 : vector<2x8x8xf32>
    %cst_32 = arith.constant dense<0.000000e+00> : vector<2x8xf32>
    %98 = vector.multi_reduction <add>, %97, %cst_32 [2] : vector<2x8x8xf32> to vector<2x8xf32>
    %99 = vector.shape_cast %98 : vector<2x8xf32> to vector<2x8x1xf32>
    %100 = tpu.reciprocal %99 {approx = true} : vector<2x8x1xf32> -> vector<2x8x1xf32>
    %101 = vector.broadcast %100 : vector<2x8x1xf32> to vector<2x8x8xf32>
    %102 = arith.mulf %97, %101 : vector<2x8x8xf32>
    %103 = arith.truncf %102 : vector<2x8x8xf32> to vector<2x8x8xbf16>
    "tpu.trace_start"() <{level = 10 : i32, message = "gij,gjd->gid"}> : () -> ()
    %cst_33 = arith.constant dense<0.000000e+00> : vector<2x8x8xf32>
    %104 = tpu.matmul %103, %91, %cst_33 {dimension_numbers = #tpu.dot_dimension_numbers<[2], [1], [1], [2], [0, 0, 0, 1, 1, 2], [0], [0]>} : vector<2x8x8xbf16>, vector<2x8x8xbf16>, vector<2x8x8xf32> -> vector<2x8x8xf32>
    "tpu.trace_stop"() : () -> ()
    %105 = vector.shape_cast %104 : vector<2x8x8xf32> to vector<16x8xf32>
    %c0_34 = arith.constant 0 : index
    %c16 = arith.constant 16 : index
    %106 = vector.load %arg10[%c0_34, %c16] : memref<16x32xf32, #tpu.memory_space<vmem>>, vector<16x8xf32>
    tpu.vector_store %arg10[%c0_34, %c16], %105 {strides = array<i32>} : memref<16x32xf32, #tpu.memory_space<vmem>>, vector<16x8xf32>,
    %107 = vector.extract_strided_slice %30 {offsets = [0, 24], sizes = [16, 8], strides = [1, 1]} : vector<16x32xf32> to vector<16x8xf32>
    %108 = vector.extract_strided_slice %32 {offsets = [0, 24], sizes = [16, 8], strides = [1, 1]} : vector<16x32xf32> to vector<16x8xf32>
    %109 = vector.extract_strided_slice %34 {offsets = [0, 24], sizes = [16, 8], strides = [1, 1]} : vector<16x32xf32> to vector<16x8xf32>
    %110 = vector.shape_cast %107 : vector<16x8xf32> to vector<2x8x8xf32>
    %111 = arith.truncf %110 : vector<2x8x8xf32> to vector<2x8x8xbf16>
    %112 = vector.shape_cast %108 : vector<16x8xf32> to vector<2x8x8xf32>
    %113 = arith.truncf %112 : vector<2x8x8xf32> to vector<2x8x8xbf16>
    %114 = vector.shape_cast %109 : vector<16x8xf32> to vector<2x8x8xf32>
    %115 = arith.truncf %114 : vector<2x8x8xf32> to vector<2x8x8xbf16>
    "tpu.trace_start"() <{level = 10 : i32, message = "gid,gjd->gij"}> : () -> ()
    %cst_35 = arith.constant dense<0.000000e+00> : vector<2x8x8xf32>
    %116 = tpu.matmul %111, %113, %cst_35 {dimension_numbers = #tpu.dot_dimension_numbers<[2], [2], [1], [1], [0, 0, 0, 1, 1, 1], [0], [0]>} : vector<2x8x8xbf16>, vector<2x8x8xbf16>, vector<2x8x8xf32> -> vector<2x8x8xf32>
    "tpu.trace_stop"() : () -> ()
    %cst_36 = arith.constant dense<0xFF800000> : vector<2x8xf32>
    %117 = vector.multi_reduction <maximumf>, %116, %cst_36 [2] : vector<2x8x8xf32> to vector<2x8xf32>
    %118 = vector.shape_cast %117 : vector<2x8xf32> to vector<2x8x1xf32>
    %119 = vector.broadcast %118 : vector<2x8x1xf32> to vector<2x8x8xf32>
    %120 = arith.subf %116, %119 : vector<2x8x8xf32>
    %121 = math.exp %120 : vector<2x8x8xf32>
    %cst_37 = arith.constant dense<0.000000e+00> : vector<2x8xf32>
    %122 = vector.multi_reduction <add>, %121, %cst_37 [2] : vector<2x8x8xf32> to vector<2x8xf32>
    %123 = vector.shape_cast %122 : vector<2x8xf32> to vector<2x8x1xf32>
    %124 = tpu.reciprocal %123 {approx = true} : vector<2x8x1xf32> -> vector<2x8x1xf32>
    %125 = vector.broadcast %124 : vector<2x8x1xf32> to vector<2x8x8xf32>
    %126 = arith.mulf %121, %125 : vector<2x8x8xf32>
    %127 = arith.truncf %126 : vector<2x8x8xf32> to vector<2x8x8xbf16>
    "tpu.trace_start"() <{level = 10 : i32, message = "gij,gjd->gid"}> : () -> ()
    %cst_38 = arith.constant dense<0.000000e+00> : vector<2x8x8xf32>
    %128 = tpu.matmul %127, %115, %cst_38 {dimension_numbers = #tpu.dot_dimension_numbers<[2], [1], [1], [2], [0, 0, 0, 1, 1, 2], [0], [0]>} : vector<2x8x8xbf16>, vector<2x8x8xbf16>, vector<2x8x8xf32> -> vector<2x8x8xf32>
    "tpu.trace_stop"() : () -> ()
    %129 = vector.shape_cast %128 : vector<2x8x8xf32> to vector<16x8xf32>
    %c0_39 = arith.constant 0 : index
    %c24 = arith.constant 24 : index
    %130 = vector.load %arg10[%c0_39, %c24] : memref<16x32xf32, #tpu.memory_space<vmem>>, vector<16x8xf32>
    tpu.vector_store %arg10[%c0_39, %c24], %129 {strides = array<i32>} : memref<16x32xf32, #tpu.memory_space<vmem>>, vector<16x8xf32>,
    %c0_40 = arith.constant 0 : index
    %c0_41 = arith.constant 0 : index
    %131 = vector.load %arg10[%c0_40, %c0_41] : memref<16x32xf32, #tpu.memory_space<vmem>>, vector<16x32xf32>
    %132 = arith.truncf %131 : vector<16x32xf32> to vector<16x32xbf16>
    %c0_42 = arith.constant 0 : index
    %c0_43 = arith.constant 0 : index
    %133 = vector.load %arg6[%c0_42, %c0_43] : memref<32x32xbf16, #tpu.memory_space<vmem>>, vector<32x32xbf16>
    %cst_44 = arith.constant dense<0.000000e+00> : vector<16x32xf32>
    %134 = tpu.matmul %132, %133, %cst_44 {dimension_numbers = #tpu.dot_dimension_numbers<[1], [0], [0], [1], [0, 0, 1, 1], [], []>} : vector<16x32xbf16>, vector<32x32xbf16>, vector<16x32xf32> -> vector<16x32xf32>
    %c0_45 = arith.constant 0 : index
    %c0_46 = arith.constant 0 : index
    %c0_47 = arith.constant 0 : index
    %135 = vector.load %arg9[%c0_45, %c0_46, %c0_47] : memref<1x16x32xf32, #tpu.memory_space<vmem>>, vector<1x16x32xf32>
    %136 = vector.shape_cast %135 : vector<1x16x32xf32> to vector<16x32xf32>
    %137 = vector.shape_cast %134 : vector<16x32xf32> to vector<1x16x32xf32>
    tpu.vector_store %arg9[%c0_45, %c0_46, %c0_47], %137 {strides = array<i32>} : memref<1x16x32xf32, #tpu.memory_space<vmem>>, vector<1x16x32xf32>,
    return
  }
  func.func @transform_0(%arg0: i32, %arg1: i32) -> (i32, i32, i32) {
    %c0_i32 = arith.constant 0 : i32
    %c0_i32_0 = arith.constant 0 : i32
    return %arg0, %arg1, %c0_i32 : i32, i32, i32
  }
  func.func @transform_1(%arg0: i32, %arg1: i32) -> (i32, i32) {
    %c0_i32 = arith.constant 0 : i32
    %c0_i32_0 = arith.constant 0 : i32
    %c0_i32_1 = arith.constant 0 : i32
    return %c0_i32, %c0_i32_0 : i32, i32
  }
  func.func @transform_2(%arg0: i32, %arg1: i32) -> (i32, i32) {
    %c0_i32 = arith.constant 0 : i32
    %c0_i32_0 = arith.constant 0 : i32
    %c0_i32_1 = arith.constant 0 : i32
    return %c0_i32, %c0_i32_0 : i32, i32
  }
  func.func @transform_3(%arg0: i32, %arg1: i32) -> (i32, i32) {
    %c0_i32 = arith.constant 0 : i32
    %c0_i32_0 = arith.constant 0 : i32
    %c0_i32_1 = arith.constant 0 : i32
    return %c0_i32, %c0_i32_0 : i32, i32
  }
  func.func @transform_4(%arg0: i32, %arg1: i32) -> (i32, i32) {
    %c0_i32 = arith.constant 0 : i32
    %c0_i32_0 = arith.constant 0 : i32
    %c0_i32_1 = arith.constant 0 : i32
    return %c0_i32, %c0_i32_0 : i32, i32
  }
  func.func @transform_5(%arg0: i32, %arg1: i32) -> (i32, i32) {
    %c0_i32 = arith.constant 0 : i32
    %c0_i32_0 = arith.constant 0 : i32
    %c0_i32_1 = arith.constant 0 : i32
    return %c0_i32, %c0_i32_0 : i32, i32
  }
  func.func @transform_6(%arg0: i32, %arg1: i32) -> (i32, i32) {
    %c0_i32 = arith.constant 0 : i32
    %c0_i32_0 = arith.constant 0 : i32
    %c0_i32_1 = arith.constant 0 : i32
    return %c0_i32, %c0_i32_0 : i32, i32
  }
  func.func @transform_7(%arg0: i32, %arg1: i32) -> (i32, i32, i32) {
    %c0_i32 = arith.constant 0 : i32
    %c0_i32_0 = arith.constant 0 : i32
    return %arg0, %arg1, %c0_i32 : i32, i32, i32
  }
}

</mosaic_0001>

<llo_original>
// kernel: tpu_custom_call.1
$region0: #{tpu_custom_call.1}
  #allocation0 [shape = 'u32[]', space=smem, size = 0x4, offset = 0x4, fixed_abs, tag = 'smem constant byte address 0x4 - core index']
  #allocation1 [shape = 'u32[144,128]{1,0:T(1,128)}', space=vmem, size = 0x12000, scoped, tag = 'internal scratch']
  #allocation2 [shape = 'f32[16,32]{1,0:T(8,128)}', space=vmem, size = 0x2000, scoped, tag = 'scratch operand']
  %s0 = inlined_call_operand.hbm [shape: f32[2,16,32], index: 0, kind: input, shape index: {}]
  %s1 = inlined_call_operand.hbm [shape: bf16[32,32], index: 1, kind: input, shape index: {}]
  %s2 = inlined_call_operand.hbm [shape: bf16[32,32], index: 2, kind: input, shape index: {}]
  %s3 = inlined_call_operand.hbm [shape: bf16[32,32], index: 3, kind: input, shape index: {}]
  %s4 = inlined_call_operand.hbm [shape: bf16[32,32], index: 4, kind: input, shape index: {}]
  %s5 = inlined_call_operand.vmem [shape: f32[1,32], index: 5, kind: input, shape index: {}]
  %s6 = inlined_call_operand.vmem [shape: f32[1,32], index: 6, kind: input, shape index: {}]
  %s7 = inlined_call_operand.hbm [shape: f32[2,16,32], index: 7, kind: output, shape index: {}]
  %s8 = sld [smem:[#allocation0]]
  $region81: #{tpu_custom_call.1} parent=0
    _
  %s10 = ssub.s32 1, %s8
  %s11 = scalar_select 0, %s10, %s8
  $region1: #{tpu_custom_call.1} parent=0
    #allocation3 [shape = 'u8[16384]{0}', space=vmem, size = 0x4000, scoped, tag = 'input window, operand 0']
    #allocation4 [shape = 's32[2]{0}', space=sflag, size = 0x8, scoped, tag = 'scoped memory for tpu_custom_call.1']
    #allocation5 [shape = 's32[2]{0}', space=sflag, size = 0x8, scoped, tag = 'scoped memory for tpu_custom_call.1']
    #allocation6 [shape = 'u8[8192]{0}', space=vmem, size = 0x2000, scoped, tag = 'input window, operand 1, single buffered']
    #allocation7 [shape = 's32[1]{0}', space=sflag, size = 0x4, scoped, tag = 'scoped memory for tpu_custom_call.1']
    #allocation8 [shape = 'u8[8192]{0}', space=vmem, size = 0x2000, scoped, tag = 'input window, operand 2, single buffered']
    #allocation9 [shape = 'u8[8192]{0}', space=vmem, size = 0x2000, scoped, tag = 'input window, operand 3, single buffered']
    #allocation10 [shape = 's32[1]{0}', space=sflag, size = 0x4, scoped, tag = 'scoped memory for tpu_custom_call.1']
    #allocation11 [shape = 'u8[8192]{0}', space=vmem, size = 0x2000, scoped, tag = 'input window, operand 4, single buffered']
    #allocation12 [shape = 'u8[16384]{0}', space=vmem, size = 0x4000, scoped, tag = 'output window, operand 0']
    %12 = vsyncpa [#allocation4], 0
    %s13 = scalar_lea.sflag [#allocation4], 1
    %14 = vsyncpa %s13, 0
    %15 = vsyncpa [#allocation7], 0
    %16 = vsyncpa [#allocation10], 0
    %17 = vsyncpa [#allocation5], 0
    %s18 = scalar_lea.sflag [#allocation5], 1
    %19 = vsyncpa %s18, 0
    loop: start=0, step=1, limit=4
    $region2: #{tpu_custom_call.1} parent=1 // loop_pre_header
      _
    $region3: #{tpu_custom_call.1} parent=1 // loop_header
      %s21 = sphi 0, %s25
      %p22 = scmp.ge.s32.totalorder %s21, 4
      %s28 = sphi 0, %s40
      %s29 = sphi 0, %s36
      %s30 = sphi 0, %s28
      %s31 = sphi 0, %s29
      %s32 = sphi 0, %s30
      %s33 = sphi 0, %s31
      %s45 = sphi 0, %s47
      %s48 = sphi 0, %s45
      %s49 = sphi 0, %s48
      %s65 = sphi 0, %s49
      %s69 = sphi 0, %s69
      %s71 = sphi 0, %s69
      %s72 = sphi 0, %s71
      %s86 = sphi 0, %s72
      %s90 = sphi 0, %s90
      %s92 = sphi 0, %s90
      %s93 = sphi 0, %s92
      %s107 = sphi 0, %s93
      %s111 = sphi 0, %s111
      %s113 = sphi 0, %s111
      %s114 = sphi 0, %s113
      %s128 = sphi 0, %s114
      %s132 = sphi 0, %s132
      %s134 = sphi 0, %s132
      %s135 = sphi 0, %s134
      %s149 = sphi 0, %s135
      %s153 = sphi 0, %s153
      %s155 = sphi 0, %s153
      %s156 = sphi 0, %s155
      %s170 = sphi 0, %s156
      %s174 = sphi 0, %s174
      %s176 = sphi 0, %s174
      %s177 = sphi 0, %s176
      %s191 = sphi 0, %s177
      %s199 = sphi 0, %s201
      %s202 = sphi 0, %s199
      %s203 = sphi 0, %s202
      %s219 = sphi 0, %s203
    $region4: #{tpu_custom_call.1} parent=1 // loop_header_branch
      %24 = sbr.rel (%p22) target = $region8
    $region5: #{tpu_custom_call.1} parent=1 // loop_body
      %s26 = ssub.s32 %s21, 1
      %s27 = ssub.s32 %s21, 2
      %s34 = sadd.s32 1, %s29
      %p35 = scmp.ge.s32.totalorder %s34, 1
      %s36 = scalar_select %p35, 0, %s34
      %s37 = sadd.s32 1, %s28
      %s38 = scalar_select %p35, %s37, %s28
      %p39 = scmp.ge.s32.totalorder %s38, 2
      %s40 = scalar_select %p39, 0, %s38
      %s41 = ssub.s32 %s28, %s40
      %s42 = ssub.s32 %s29, %s36
      %s43 = sor.u32 %s41, %s42
      %p44 = scmp.eq.s32.totalorder %s43, 0
      %s46 = sadd.s32 %s45, 1
      %s47 = scalar_select %p44, %s45, %s46
      %p50 = pneg %p44
      %p51 = scmp.eq.s32.totalorder %s21, 1
      %p52 = por %p50, %p51
      %p53 = scmp.ne.s32.totalorder %s45, %s48
      %p54 = scmp.eq.s32.totalorder %s21, 0
      %p55 = por %p53, %p54
      %p56 = scmp.ne.s32.totalorder %s45, %s48
      %p57 = scmp.eq.s32.totalorder %s26, 1
      %p58 = por %p56, %p57
      %p59 = scmp.ne.s32.totalorder %s48, %s49
      %p60 = scmp.eq.s32.totalorder %s26, 0
      %p61 = por %p59, %p60
      %p62 = scmp.ne.s32.totalorder %s48, %s49
      %p63 = scmp.eq.s32.totalorder %s27, 1
      %p64 = por %p62, %p63
      %p66 = scmp.ne.s32.totalorder %s49, %s65
      %p67 = scmp.eq.s32.totalorder %s27, 0
      %p68 = por %p66, %p67
      %s70 = sadd.s32 %s69, 1
      %p73 = scmp.eq.s32.totalorder %s21, 1
      %p74 = scmp.ne.s32.totalorder %s69, %s71
      %p75 = scmp.eq.s32.totalorder %s21, 0
      %p76 = por %p74, %p75
      %p77 = scmp.ne.s32.totalorder %s69, %s71
      %p78 = scmp.eq.s32.totalorder %s26, 1
      %p79 = por %p77, %p78
      %p80 = scmp.ne.s32.totalorder %s71, %s72
      %p81 = scmp.eq.s32.totalorder %s26, 0
      %p82 = por %p80, %p81
      %p83 = scmp.ne.s32.totalorder %s71, %s72
      %p84 = scmp.eq.s32.totalorder %s27, 1
      %p85 = por %p83, %p84
      %p87 = scmp.ne.s32.totalorder %s72, %s86
      %p88 = scmp.eq.s32.totalorder %s27, 0
      %p89 = por %p87, %p88
      %s91 = sadd.s32 %s90, 1
      %p94 = scmp.eq.s32.totalorder %s21, 1
      %p95 = scmp.ne.s32.totalorder %s90, %s92
      %p96 = scmp.eq.s32.totalorder %s21, 0
      %p97 = por %p95, %p96
      %p98 = scmp.ne.s32.totalorder %s90, %s92
      %p99 = scmp.eq.s32.totalorder %s26, 1
      %p100 = por %p98, %p99
      %p101 = scmp.ne.s32.totalorder %s92, %s93
      %p102 = scmp.eq.s32.totalorder %s26, 0
      %p103 = por %p101, %p102
      %p104 = scmp.ne.s32.totalorder %s92, %s93
      %p105 = scmp.eq.s32.totalorder %s27, 1
      %p106 = por %p104, %p105
      %p108 = scmp.ne.s32.totalorder %s93, %s107
      %p109 = scmp.eq.s32.totalorder %s27, 0
      %p110 = por %p108, %p109
      %s112 = sadd.s32 %s111, 1
      %p115 = scmp.eq.s32.totalorder %s21, 1
      %p116 = scmp.ne.s32.totalorder %s111, %s113
      %p117 = scmp.eq.s32.totalorder %s21, 0
      %p118 = por %p116, %p117
      %p119 = scmp.ne.s32.totalorder %s111, %s113
      %p120 = scmp.eq.s32.totalorder %s26, 1
      %p121 = por %p119, %p120
      %p122 = scmp.ne.s32.totalorder %s113, %s114
      %p123 = scmp.eq.s32.totalorder %s26, 0
      %p124 = por %p122, %p123
      %p125 = scmp.ne.s32.totalorder %s113, %s114
      %p126 = scmp.eq.s32.totalorder %s27, 1
      %p127 = por %p125, %p126
      %p129 = scmp.ne.s32.totalorder %s114, %s128
      %p130 = scmp.eq.s32.totalorder %s27, 0
      %p131 = por %p129, %p130
      %s133 = sadd.s32 %s132, 1
      %p136 = scmp.eq.s32.totalorder %s21, 1
      %p137 = scmp.ne.s32.totalorder %s132, %s134
      %p138 = scmp.eq.s32.totalorder %s21, 0
      %p139 = por %p137, %p138
      %p140 = scmp.ne.s32.totalorder %s132, %s134
      %p141 = scmp.eq.s32.totalorder %s26, 1
      %p142 = por %p140, %p141
      %p143 = scmp.ne.s32.totalorder %s134, %s135
      %p144 = scmp.eq.s32.totalorder %s26, 0
      %p145 = por %p143, %p144
      %p146 = scmp.ne.s32.totalorder %s134, %s135
      %p147 = scmp.eq.s32.totalorder %s27, 1
      %p148 = por %p146, %p147
      %p150 = scmp.ne.s32.totalorder %s135, %s149
      %p151 = scmp.eq.s32.totalorder %s27, 0
      %p152 = por %p150, %p151
      %s154 = sadd.s32 %s153, 1
      %p157 = scmp.eq.s32.totalorder %s21, 1
      %p158 = scmp.ne.s32.totalorder %s153, %s155
      %p159 = scmp.eq.s32.totalorder %s21, 0
      %p160 = por %p158, %p159
      %p161 = scmp.ne.s32.totalorder %s153, %s155
      %p162 = scmp.eq.s32.totalorder %s26, 1
      %p163 = por %p161, %p162
      %p164 = scmp.ne.s32.totalorder %s155, %s156
      %p165 = scmp.eq.s32.totalorder %s26, 0
      %p166 = por %p164, %p165
      %p167 = scmp.ne.s32.totalorder %s155, %s156
      %p168 = scmp.eq.s32.totalorder %s27, 1
      %p169 = por %p167, %p168
      %p171 = scmp.ne.s32.totalorder %s156, %s170
      %p172 = scmp.eq.s32.totalorder %s27, 0
      %p173 = por %p171, %p172
      %s175 = sadd.s32 %s174, 1
      %p178 = scmp.eq.s32.totalorder %s21, 1
      %p179 = scmp.ne.s32.totalorder %s174, %s176
      %p180 = scmp.eq.s32.totalorder %s21, 0
      %p181 = por %p179, %p180
      %p182 = scmp.ne.s32.totalorder %s174, %s176
      %p183 = scmp.eq.s32.totalorder %s26, 1
      %p184 = por %p182, %p183
      %p185 = scmp.ne.s32.totalorder %s176, %s177
      %p186 = scmp.eq.s32.totalorder %s26, 0
      %p187 = por %p185, %p186
      %p188 = scmp.ne.s32.totalorder %s176, %s177
      %p189 = scmp.eq.s32.totalorder %s27, 1
      %p190 = por %p188, %p189
      %p192 = scmp.ne.s32.totalorder %s177, %s191
      %p193 = scmp.eq.s32.totalorder %s27, 0
      %p194 = por %p192, %p193
      %s195 = ssub.s32 %s28, %s40
      %s196 = ssub.s32 %s29, %s36
      %s197 = sor.u32 %s195, %s196
      %p198 = scmp.eq.s32.totalorder %s197, 0
      %s200 = sadd.s32 %s199, 1
      %s201 = scalar_select %p198, %s199, %s200
      %p204 = pneg %p198
      %p205 = scmp.eq.s32.totalorder %s21, 1
      %p206 = por %p204, %p205
      %p207 = scmp.ne.s32.totalorder %s199, %s202
      %p208 = scmp.eq.s32.totalorder %s21, 0
      %p209 = por %p207, %p208
      %p210 = scmp.ne.s32.totalorder %s199, %s202
      %p211 = scmp.eq.s32.totalorder %s26, 1
      %p212 = por %p210, %p211
      %p213 = scmp.ne.s32.totalorder %s202, %s203
      %p214 = scmp.eq.s32.totalorder %s26, 0
      %p215 = por %p213, %p214
      %p216 = scmp.ne.s32.totalorder %s202, %s203
      %p217 = scmp.eq.s32.totalorder %s27, 1
      %p218 = por %p216, %p217
      %p220 = scmp.ne.s32.totalorder %s203, %s219
      %p221 = scmp.eq.s32.totalorder %s27, 0
      %p222 = por %p220, %p221
      %p223 = scmp.le.s32.totalorder 1, %s21
      %p224 = scmp.lt.s32.totalorder %s21, 3
      %p225 = pnand %p223, %p224
      %p226 = pneg %p225
      // Predicated region
      $region9: #{tpu_custom_call.1} parent=5 // pred_check
        _
      $region10: #{tpu_custom_call.1} parent=5 // pred_check_branch
        %228 = sbr.rel (%p225) target = $region12
      $region11: #{tpu_custom_call.1} parent=5 // pred_region
        %s229 = ssub.s32 %s21, 1
        // Predicated region
        $region13: #{tpu_custom_call.1} parent=11 // pred_check
          %p230 = pneg %p82
        $region14: #{tpu_custom_call.1} parent=11 // pred_check_branch
          %232 = sbr.rel (%p230) target = $region16
        $region15: #{tpu_custom_call.1} parent=11 // pred_region
          %s234 = ssub.s32 256, 256
          %235 = vsyncadd [#allocation7], %s234
          %s236 = sshll.u32 [#allocation6], 4
          %s237 = int_to_ptr.vmem [resolvable:$true] %s236
          %242 = dma.hbm_to_vmem [thread:$0]  %s1, 256, %s237, [#allocation7], 64, 64, 4
        $region16: #{tpu_custom_call.1} parent=11 // pred_fallthru
          _
        // Predicated region
        $region17: #{tpu_custom_call.1} parent=11 // pred_check
          %p243 = pneg %p103
        $region18: #{tpu_custom_call.1} parent=11 // pred_check_branch
          %245 = sbr.rel (%p243) target = $region20
        $region19: #{tpu_custom_call.1} parent=11 // pred_region
          %s247 = ssub.s32 256, 256
          %248 = vsyncadd [#allocation7], %s247
          %s249 = sshll.u32 [#allocation8], 4
          %s250 = int_to_ptr.vmem [resolvable:$true] %s249
          %255 = dma.hbm_to_vmem [thread:$0]  %s2, 256, %s250, [#allocation7], 64, 64, 4
        $region20: #{tpu_custom_call.1} parent=11 // pred_fallthru
          _
        // Predicated region
        $region21: #{tpu_custom_call.1} parent=11 // pred_check
          %p256 = pneg %p124
        $region22: #{tpu_custom_call.1} parent=11 // pred_check_branch
          %258 = sbr.rel (%p256) target = $region24
        $region23: #{tpu_custom_call.1} parent=11 // pred_region
          %s260 = ssub.s32 256, 256
          %261 = vsyncadd [#allocation10], %s260
          %s262 = sshll.u32 [#allocation9], 4
          %s263 = int_to_ptr.vmem [resolvable:$true] %s262
          %268 = dma.hbm_to_vmem [thread:$0]  %s3, 256, %s263, [#allocation10], 64, 64, 4
        $region24: #{tpu_custom_call.1} parent=11 // pred_fallthru
          _
        // Predicated region
        $region25: #{tpu_custom_call.1} parent=11 // pred_check
          %p269 = pneg %p145
        $region26: #{tpu_custom_call.1} parent=11 // pred_check_branch
          %271 = sbr.rel (%p269) target = $region28
        $region27: #{tpu_custom_call.1} parent=11 // pred_region
          %s273 = ssub.s32 256, 256
          %274 = vsyncadd [#allocation10], %s273
          %s275 = sshll.u32 [#allocation11], 4
          %s276 = int_to_ptr.vmem [resolvable:$true] %s275
          %281 = dma.hbm_to_vmem [thread:$0]  %s4, 256, %s276, [#allocation10], 64, 64, 4
        $region28: #{tpu_custom_call.1} parent=11 // pred_fallthru
          _
        // Predicated region
        $region29: #{tpu_custom_call.1} parent=11 // pred_check
          %p282 = pneg %p166
        $region30: #{tpu_custom_call.1} parent=11 // pred_check_branch
          %284 = sbr.rel (%p282) target = $region32
        $region31: #{tpu_custom_call.1} parent=11 // pred_region
          _
        $region32: #{tpu_custom_call.1} parent=11 // pred_fallthru
          _
        // Predicated region
        $region33: #{tpu_custom_call.1} parent=11 // pred_check
          %p285 = pneg %p187
        $region34: #{tpu_custom_call.1} parent=11 // pred_check_branch
          %287 = sbr.rel (%p285) target = $region36
        $region35: #{tpu_custom_call.1} parent=11 // pred_region
          _
        $region36: #{tpu_custom_call.1} parent=11 // pred_fallthru
          _
      $region12: #{tpu_custom_call.1} parent=5 // pred_fallthru
        _
      %p288 = scmp.lt.s32.totalorder %s21, 2
      // Predicated region
      $region37: #{tpu_custom_call.1} parent=5 // pred_check
        %p289 = pneg %p288
      $region38: #{tpu_custom_call.1} parent=5 // pred_check_branch
        %291 = sbr.rel (%p289) target = $region40
      $region39: #{tpu_custom_call.1} parent=5 // pred_region
        // Predicated region
        $region41: #{tpu_custom_call.1} parent=39 // pred_check
          %p292 = pneg %p55
        $region42: #{tpu_custom_call.1} parent=39 // pred_check_branch
          %294 = sbr.rel (%p292) target = $region44
        $region43: #{tpu_custom_call.1} parent=39 // pred_region
          %s295 = sand.u32 %s45, 1
          %s296 = scalar_lea.sflag [#allocation4], %s295
          %s297 = sand.u32 %s45, 1
          %s298 = smul.addr %s297, 16
          %s299 = scalar_lea.vmem [#allocation3], %s298
          %s300 = smul.u32 2, %s29
          %s302 = ssub.s32 256, 256
          %303 = vsyncadd %s296, %s302
          %s304 = smul.addr %s28, 2
          %s305 = sadd.s32 %s300, %s304
          %s306 = smul.addr %s305, 128
          %s307 = scalar_lea.hbm %s0, %s306
          %s308 = sshll.u32 %s299, 4
          %s309 = int_to_ptr.vmem [resolvable:$true] %s308
          %314 = dma.hbm_to_vmem [thread:$0]  %s307, 256, %s309, %s296, 128, 128, 8
        $region44: #{tpu_custom_call.1} parent=39 // pred_fallthru
          _
      $region40: #{tpu_custom_call.1} parent=5 // pred_fallthru
        _
      %p315 = scmp.le.s32.totalorder 1, %s21
      %p316 = scmp.lt.s32.totalorder %s21, 3
      %p317 = pnand %p315, %p316
      %p318 = pneg %p317
      // Predicated region
      $region45: #{tpu_custom_call.1} parent=5 // pred_check
        _
      $region46: #{tpu_custom_call.1} parent=5 // pred_check_branch
        %320 = sbr.rel (%p317) target = $region48
      $region47: #{tpu_custom_call.1} parent=5 // pred_region
        %s321 = ssub.s32 %s21, 1
        %s322 = sand.u32 %s48, 1
        %s323 = scalar_lea.sflag [#allocation4], %s322
        %s324 = sand.u32 %s48, 1
        %s325 = smul.addr %s324, 16
        %s326 = scalar_lea.vmem [#allocation3], %s325
        // Predicated region
        $region49: #{tpu_custom_call.1} parent=47 // pred_check
          %p327 = pneg %p61
        $region50: #{tpu_custom_call.1} parent=47 // pred_check_branch
          %329 = sbr.rel (%p327) target = $region52
        $region51: #{tpu_custom_call.1} parent=47 // pred_region
          %330 = dma.done %s323, 256
        $region52: #{tpu_custom_call.1} parent=47 // pred_fallthru
          _
        // Predicated region
        $region53: #{tpu_custom_call.1} parent=47 // pred_check
          %p331 = pneg %p82
        $region54: #{tpu_custom_call.1} parent=47 // pred_check_branch
          %333 = sbr.rel (%p331) target = $region56
        $region55: #{tpu_custom_call.1} parent=47 // pred_region
          %334 = dma.done [#allocation7], 256
        $region56: #{tpu_custom_call.1} parent=47 // pred_fallthru
          _
        // Predicated region
        $region57: #{tpu_custom_call.1} parent=47 // pred_check
          %p335 = pneg %p103
        $region58: #{tpu_custom_call.1} parent=47 // pred_check_branch
          %337 = sbr.rel (%p335) target = $region60
        $region59: #{tpu_custom_call.1} parent=47 // pred_region
          %338 = dma.done [#allocation7], 256
        $region60: #{tpu_custom_call.1} parent=47 // pred_fallthru
          _
        // Predicated region
        $region61: #{tpu_custom_call.1} parent=47 // pred_check
          %p339 = pneg %p124
        $region62: #{tpu_custom_call.1} parent=47 // pred_check_branch
          %341 = sbr.rel (%p339) target = $region64
        $region63: #{tpu_custom_call.1} parent=47 // pred_region
          %342 = dma.done [#allocation10], 256
        $region64: #{tpu_custom_call.1} parent=47 // pred_fallthru
          _
        // Predicated region
        $region65: #{tpu_custom_call.1} parent=47 // pred_check
          %p343 = pneg %p145
        $region66: #{tpu_custom_call.1} parent=47 // pred_check_branch
          %345 = sbr.rel (%p343) target = $region68
        $region67: #{tpu_custom_call.1} parent=47 // pred_region
          %346 = dma.done [#allocation10], 256
        $region68: #{tpu_custom_call.1} parent=47 // pred_fallthru
          _
        %s347 = sand.u32 %s48, 1
        %s348 = scalar_lea.sflag [#allocation4], %s347
        %s349 = sand.u32 %s48, 1
        %s350 = smul.addr %s349, 16
        %s351 = scalar_lea.vmem [#allocation3], %s350
        %p352 = pneg %p61
        %p353 = pneg %p58
        %p354 = pneg %p82
        %p355 = pneg %p79
        %p356 = pneg %p103
        %p357 = pneg %p100
        %p358 = pneg %p124
        %p359 = pneg %p121
        %p360 = pneg %p145
        %p361 = pneg %p142
        %p362 = pneg %p166
        %p363 = pneg %p163
        %p364 = pneg %p187
        %p365 = pneg %p184
        %p366 = pneg %p215
        %p367 = pneg %p212
        %s368 = sand.u32 %s202, 1
        %s369 = scalar_lea.sflag [#allocation5], %s368
        %s370 = sand.u32 %s202, 1
        %s371 = smul.addr %s370, 16
        %s372 = scalar_lea.vmem [#allocation12], %s371
        %s373 = smul.u32 2, %s31
        %s374 = smul.u32 2, %s31
        %v376 = vld [vmem:[%s326] sm:$0xff]
        %v377 = vld [vmem:[%s326 + $0x8] sm:$0xff]
        %v378 = vld [vmem:[%s5] sm:$0x1]
        %v379 = vld [vmem:[%s6] sm:$0x1]
        %vm380 = vcmask 261120
        %v381 = vsel %vm380, %v376, 0.0
        %382 = vadd.xlane.f32.xlu0 %v381
        %v383 = vpop.xlane.xlu0 %382
        %v384 = vsel %vm380, %v377, 0.0
        %385 = vadd.xlane.f32.xlu0 %v384
        %v386 = vpop.xlane.xlu0 %385
        %v387 = vrcp.pop 32.0
        %v388 = vmul.f32 %v383, %v387
        %v389 = vmul.f32 %v386, %v387
        %v390 = vsub.f32 %v376, %v388
        %v391 = vsub.f32 %v377, %v389
        %v392 = vmul.f32 %v390, %v390
        %v393 = vmul.f32 %v391, %v391
        %v394 = vsel %vm380, %v392, 0.0
        %395 = vadd.xlane.f32.xlu0 %v394
        %v396 = vpop.xlane.xlu0 %395
        %v397 = vsel %vm380, %v393, 0.0
        %398 = vadd.xlane.f32.xlu0 %v397
        %v399 = vpop.xlane.xlu0 %398
        %v400 = vmul.f32 %v396, %v387
        %v401 = vmul.f32 %v399, %v387
        %v402 = vadd.f32 %v400, 1e-05
        %v403 = vadd.f32 %v401, 1e-05
        %v404 = vrsqrt.pop %v402
        %v405 = vrsqrt.pop %v403
        %v406 = vmul.f32 %v390, %v404
        %v407 = vmul.f32 %v391, %v405
        %v409 = vlaneseq
        %v410 = vshrl.u32 %v409, 7
        %v411 = vsub.s32 0, %v410
        %v412 = vrot.slane %v378, %v411
        %v414 = vmul.f32 %v406, %v412
        %v415 = vmul.f32 %v407, %v412
        %v417 = vlaneseq
        %v418 = vshrl.u32 %v417, 7
        %v419 = vsub.s32 0, %v418
        %v420 = vrot.slane %v379, %v419
        %v422 = vadd.f32 %v414, %v420
        %v423 = vadd.f32 %v415, %v420
        %v424 = vpack.c.bf16 %v423, %v422
        %v425 = vld [vmem:[#allocation6] sm:$0xf]
        %v426 = vld [vmem:[#allocation6 + $0x4] sm:$0xf]
        %v427 = vld [vmem:[#allocation6 + $0x8] sm:$0xf]
        %v428 = vld [vmem:[#allocation6 + $0xc] sm:$0xf]
        %v433 = vunpack.c.l.b16 %v425
        %v434 = vunpack.c.l.b16 %v426
        %v435 = vunpack.c.l.b16 %v427
        %v436 = vunpack.c.l.b16 %v428
        %v437 = vpack.c.b16 %v434, %v433
        %v438 = vpack.c.b16 %v436, %v435
        %v442 = vsel %vm380, %v424, 0
        %444 = vmatprep.subr.bf16.mxu0 0
        %445 = vmatpush1.bf16.msra.mxu0 %v437
        %446 = vmatprep.subr.bf16.mxu0 0
        %447 = vmatpush1.bf16.msra.mxu0 %v438
        %448 = vmatprep.subr.bf16.mxu0 0
        %449 = vmatpush1.bf16.msra.mxu0 0
        %450 = vmatprep.subr.bf16.mxu0 0
        %451 = vmatpush1.bf16.msra.mxu0 0
        %452 = vmatprep.subr.bf16.mxu0 0
        %453 = vmatpush1.bf16.msra.mxu0 0
        %454 = vmatprep.subr.bf16.mxu0 0
        %455 = vmatpush1.bf16.msra.mxu0 0
        %456 = vmatprep.subr.bf16.mxu0 0
        %457 = vmatpush1.bf16.msra.mxu0 0
        %458 = vmatprep.subr.bf16.mxu0 0
        %459 = vmatpush1.bf16.msra.mxu0 0
        %460 = vmatprep.subr.bf16.mxu0 0
        %461 = vmatpush1.bf16.msra.mxu0 0
        %462 = vmatprep.subr.bf16.mxu0 0
        %463 = vmatpush1.bf16.msra.mxu0 0
        %464 = vmatprep.subr.bf16.mxu0 0
        %465 = vmatpush1.bf16.msra.mxu0 0
        %466 = vmatprep.subr.bf16.mxu0 0
        %467 = vmatpush1.bf16.msra.mxu0 0
        %468 = vmatprep.subr.bf16.mxu0 0
        %469 = vmatpush1.bf16.msra.mxu0 0
        %470 = vmatprep.subr.bf16.mxu0 0
        %471 = vmatpush1.bf16.msra.mxu0 0
        %472 = vmatprep.subr.bf16.mxu0 0
        %473 = vmatpush1.bf16.msra.mxu0 0
        %474 = vmatprep.subr.bf16.mxu0 0
        %475 = vmatpush1.bf16.msra.mxu0 0
        %476 = vmatprep.mubr.bf16.mxu0 0
        %477 = vmatmul.mubr.bf16.gmra.mrb[0].mxu0 %v442
        %v478 = vpop.f32.mrb[0].mxu0
        %v479 = vadd.f32 0.0, %v478
        %v480 = vpop.f32.mrb[0].mxu0
        %v481 = vpop.f32.mrb[0].mxu0
        %v482 = vadd.f32 0.0, %v481
        %v483 = vpop.f32.mrb[0].mxu0
        %484 = vdwg.mxu0
        %v485 = vld [vmem:[#allocation8] sm:$0xf]
        %v486 = vld [vmem:[#allocation8 + $0x4] sm:$0xf]
        %v487 = vld [vmem:[#allocation8 + $0x8] sm:$0xf]
        %v488 = vld [vmem:[#allocation8 + $0xc] sm:$0xf]
        %v493 = vunpack.c.l.b16 %v485
        %v494 = vunpack.c.l.b16 %v486
        %v495 = vunpack.c.l.b16 %v487
        %v496 = vunpack.c.l.b16 %v488
        %v497 = vpack.c.b16 %v494, %v493
        %v498 = vpack.c.b16 %v496, %v495
        %501 = vmatprep.subr.bf16.mxu0 0
        %502 = vmatpush1.bf16.msra.mxu0 %v497
        %503 = vmatprep.subr.bf16.mxu0 0
        %504 = vmatpush1.bf16.msra.mxu0 %v498
        %505 = vmatprep.subr.bf16.mxu0 0
        %506 = vmatpush1.bf16.msra.mxu0 0
        %507 = vmatprep.subr.bf16.mxu0 0
        %508 = vmatpush1.bf16.msra.mxu0 0
        %509 = vmatprep.subr.bf16.mxu0 0
        %510 = vmatpush1.bf16.msra.mxu0 0
        %511 = vmatprep.subr.bf16.mxu0 0
        %512 = vmatpush1.bf16.msra.mxu0 0
        %513 = vmatprep.subr.bf16.mxu0 0
        %514 = vmatpush1.bf16.msra.mxu0 0
        %515 = vmatprep.subr.bf16.mxu0 0
        %516 = vmatpush1.bf16.msra.mxu0 0
        %517 = vmatprep.subr.bf16.mxu0 0
        %518 = vmatpush1.bf16.msra.mxu0 0
        %519 = vmatprep.subr.bf16.mxu0 0
        %520 = vmatpush1.bf16.msra.mxu0 0
        %521 = vmatprep.subr.bf16.mxu0 0
        %522 = vmatpush1.bf16.msra.mxu0 0
        %523 = vmatprep.subr.bf16.mxu0 0
        %524 = vmatpush1.bf16.msra.mxu0 0
        %525 = vmatprep.subr.bf16.mxu0 0
        %526 = vmatpush1.bf16.msra.mxu0 0
        %527 = vmatprep.subr.bf16.mxu0 0
        %528 = vmatpush1.bf16.msra.mxu0 0
        %529 = vmatprep.subr.bf16.mxu0 0
        %530 = vmatpush1.bf16.msra.mxu0 0
        %531 = vmatprep.subr.bf16.mxu0 0
        %532 = vmatpush1.bf16.msra.mxu0 0
        %533 = vmatprep.mubr.bf16.mxu0 0
        %534 = vmatmul.mubr.bf16.gmra.mrb[0].mxu0 %v442
        %v535 = vpop.f32.mrb[0].mxu0
        %v536 = vadd.f32 0.0, %v535
        %v537 = vpop.f32.mrb[0].mxu0
        %v538 = vpop.f32.mrb[0].mxu0
        %v539 = vadd.f32 0.0, %v538
        %v540 = vpop.f32.mrb[0].mxu0
        %541 = vdwg.mxu0
        %v542 = vld [vmem:[#allocation9] sm:$0xf]
        %v543 = vld [vmem:[#allocation9 + $0x4] sm:$0xf]
        %v544 = vld [vmem:[#allocation9 + $0x8] sm:$0xf]
        %v545 = vld [vmem:[#allocation9 + $0xc] sm:$0xf]
        %v550 = vunpack.c.l.b16 %v542
        %v551 = vunpack.c.l.b16 %v543
        %v552 = vunpack.c.l.b16 %v544
        %v553 = vunpack.c.l.b16 %v545
        %v554 = vpack.c.b16 %v551, %v550
        %v555 = vpack.c.b16 %v553, %v552
        %558 = vmatprep.subr.bf16.mxu0 0
        %559 = vmatpush1.bf16.msra.mxu0 %v554
        %560 = vmatprep.subr.bf16.mxu0 0
        %561 = vmatpush1.bf16.msra.mxu0 %v555
        %562 = vmatprep.subr.bf16.mxu0 0
        %563 = vmatpush1.bf16.msra.mxu0 0
        %564 = vmatprep.subr.bf16.mxu0 0
        %565 = vmatpush1.bf16.msra.mxu0 0
        %566 = vmatprep.subr.bf16.mxu0 0
        %567 = vmatpush1.bf16.msra.mxu0 0
        %568 = vmatprep.subr.bf16.mxu0 0
        %569 = vmatpush1.bf16.msra.mxu0 0
        %570 = vmatprep.subr.bf16.mxu0 0
        %571 = vmatpush1.bf16.msra.mxu0 0
        %572 = vmatprep.subr.bf16.mxu0 0
        %573 = vmatpush1.bf16.msra.mxu0 0
        %574 = vmatprep.subr.bf16.mxu0 0
        %575 = vmatpush1.bf16.msra.mxu0 0
        %576 = vmatprep.subr.bf16.mxu0 0
        %577 = vmatpush1.bf16.msra.mxu0 0
        %578 = vmatprep.subr.bf16.mxu0 0
        %579 = vmatpush1.bf16.msra.mxu0 0
        %580 = vmatprep.subr.bf16.mxu0 0
        %581 = vmatpush1.bf16.msra.mxu0 0
        %582 = vmatprep.subr.bf16.mxu0 0
        %583 = vmatpush1.bf16.msra.mxu0 0
        %584 = vmatprep.subr.bf16.mxu0 0
        %585 = vmatpush1.bf16.msra.mxu0 0
        %586 = vmatprep.subr.bf16.mxu0 0
        %587 = vmatpush1.bf16.msra.mxu0 0
        %588 = vmatprep.subr.bf16.mxu0 0
        %589 = vmatpush1.bf16.msra.mxu0 0
        %590 = vmatprep.mubr.bf16.mxu0 0
        %591 = vmatmul.mubr.bf16.gmra.mrb[0].mxu0 %v442
        %v592 = vpop.f32.mrb[0].mxu0
        %v593 = vadd.f32 0.0, %v592
        %v594 = vpop.f32.mrb[0].mxu0
        %v595 = vpop.f32.mrb[0].mxu0
        %v596 = vadd.f32 0.0, %v595
        %v597 = vpop.f32.mrb[0].mxu0
        %598 = vdwg.mxu0
        %v599 = vpack.c.bf16 %v479, %v479
        %v600 = vpack.c.bf16 %v482, %v482
        %v601 = vpack.c.bf16 %v536, %v536
        %v602 = vpack.c.bf16 %v539, %v539
        %v603 = vpack.c.bf16 %v593, %v593
        %v604 = vpack.c.bf16 %v596, %v596
        %vm605 = vcmask 64512
        %v607 = vsel %vm605, %v599, 0
        %v610 = vsel %vm605, %v601, 0
        %612 = vmatprep.subr.bf16.mxu0 0
        %613 = vmatpush1.bf16.xpose.msra.mxu0 %v610
        %614 = vmatprep.subr.bf16.mxu0 0
        %615 = vmatpush1.bf16.xpose.msra.mxu0 0
        %616 = vmatprep.subr.bf16.mxu0 0
        %617 = vmatpush1.bf16.xpose.msra.mxu0 0
        %618 = vmatprep.subr.bf16.mxu0 0
        %619 = vmatpush1.bf16.xpose.msra.mxu0 0
        %620 = vmatprep.subr.bf16.mxu0 0
        %621 = vmatpush1.bf16.xpose.msra.mxu0 0
        %622 = vmatprep.subr.bf16.mxu0 0
        %623 = vmatpush1.bf16.xpose.msra.mxu0 0
        %624 = vmatprep.subr.bf16.mxu0 0
        %625 = vmatpush1.bf16.xpose.msra.mxu0 0
        %626 = vmatprep.subr.bf16.mxu0 0
        %627 = vmatpush1.bf16.xpose.msra.mxu0 0
        %628 = vmatprep.subr.bf16.mxu0 0
        %629 = vmatpush1.bf16.xpose.msra.mxu0 0
        %630 = vmatprep.subr.bf16.mxu0 0
        %631 = vmatpush1.bf16.xpose.msra.mxu0 0
        %632 = vmatprep.subr.bf16.mxu0 0
        %633 = vmatpush1.bf16.xpose.msra.mxu0 0
        %634 = vmatprep.subr.bf16.mxu0 0
        %635 = vmatpush1.bf16.xpose.msra.mxu0 0
        %636 = vmatprep.subr.bf16.mxu0 0
        %637 = vmatpush1.bf16.xpose.msra.mxu0 0
        %638 = vmatprep.subr.bf16.mxu0 0
        %639 = vmatpush1.bf16.xpose.msra.mxu0 0
        %640 = vmatprep.subr.bf16.mxu0 0
        %641 = vmatpush1.bf16.xpose.msra.mxu0 0
        %642 = vmatprep.subr.bf16.mxu0 0
        %643 = vmatpush1.bf16.xpose.msra.mxu0 0
        %644 = vmatprep.mubr.bf16.mxu0 0
        %645 = vmatmul.mubr.bf16.gmra.mrb[0].mxu0 %v607
        %v646 = vpop.f32.mrb[0].mxu0
        %v647 = vadd.f32 0.0, %v646
        %v648 = vpop.f32.mrb[0].mxu0
        %v649 = vpop.f32.mrb[0].mxu0
        %v650 = vpop.f32.mrb[0].mxu0
        %651 = vdwg.mxu0
        %v653 = vsel %vm605, %v600, 0
        %v656 = vsel %vm605, %v602, 0
        %658 = vmatprep.subr.bf16.mxu0 0
        %659 = vmatpush1.bf16.xpose.msra.mxu0 %v656
        %660 = vmatprep.subr.bf16.mxu0 0
        %661 = vmatpush1.bf16.xpose.msra.mxu0 0
        %662 = vmatprep.subr.bf16.mxu0 0
        %663 = vmatpush1.bf16.xpose.msra.mxu0 0
        %664 = vmatprep.subr.bf16.mxu0 0
        %665 = vmatpush1.bf16.xpose.msra.mxu0 0
        %666 = vmatprep.subr.bf16.mxu0 0
        %667 = vmatpush1.bf16.xpose.msra.mxu0 0
        %668 = vmatprep.subr.bf16.mxu0 0
        %669 = vmatpush1.bf16.xpose.msra.mxu0 0
        %670 = vmatprep.subr.bf16.mxu0 0
        %671 = vmatpush1.bf16.xpose.msra.mxu0 0
        %672 = vmatprep.subr.bf16.mxu0 0
        %673 = vmatpush1.bf16.xpose.msra.mxu0 0
        %674 = vmatprep.subr.bf16.mxu0 0
        %675 = vmatpush1.bf16.xpose.msra.mxu0 0
        %676 = vmatprep.subr.bf16.mxu0 0
        %677 = vmatpush1.bf16.xpose.msra.mxu0 0
        %678 = vmatprep.subr.bf16.mxu0 0
        %679 = vmatpush1.bf16.xpose.msra.mxu0 0
        %680 = vmatprep.subr.bf16.mxu0 0
        %681 = vmatpush1.bf16.xpose.msra.mxu0 0
        %682 = vmatprep.subr.bf16.mxu0 0
        %683 = vmatpush1.bf16.xpose.msra.mxu0 0
        %684 = vmatprep.subr.bf16.mxu0 0
        %685 = vmatpush1.bf16.xpose.msra.mxu0 0
        %686 = vmatprep.subr.bf16.mxu0 0
        %687 = vmatpush1.bf16.xpose.msra.mxu0 0
        %688 = vmatprep.subr.bf16.mxu0 0
        %689 = vmatpush1.bf16.xpose.msra.mxu0 0
        %690 = vmatprep.mubr.bf16.mxu0 0
        %691 = vmatmul.mubr.bf16.gmra.mrb[0].mxu0 %v653
        %v692 = vpop.f32.mrb[0].mxu0
        %v693 = vadd.f32 0.0, %v692
        %v694 = vpop.f32.mrb[0].mxu0
        %v695 = vpop.f32.mrb[0].mxu0
        %v696 = vpop.f32.mrb[0].mxu0
        %697 = vdwg.mxu0
        %v698 = vsel %vm605, %v647, -inf
        %699 = vmax.xlane.f32.xlu0 %v698
        %v700 = vpop.xlane.xlu0 %699
        %v701 = vsel %vm605, %v693, -inf
        %702 = vmax.xlane.f32.xlu0 %v701
        %v703 = vpop.xlane.xlu0 %702
        %v704 = vsub.f32 %v647, %v700
        %v705 = vsub.f32 %v693, %v703
        %v706 = vmul.f32 %v704, 1.442695
        %v707 = vpow.pop %v706
        %v708 = vmul.f32 %v705, 1.442695
        %v709 = vpow.pop %v708
        %v710 = vsel %vm605, %v707, 0.0
        %711 = vadd.xlane.f32.xlu0 %v710
        %v712 = vpop.xlane.xlu0 %711
        %v713 = vsel %vm605, %v709, 0.0
        %714 = vadd.xlane.f32.xlu0 %v713
        %v715 = vpop.xlane.xlu0 %714
        %v716 = vrcp.pop %v712
        %v717 = vrcp.pop %v715
        %v718 = vmul.f32 %v707, %v716
        %v719 = vmul.f32 %v709, %v717
        %v720 = vpack.c.bf16 %v718, %v718
        %v721 = vpack.c.bf16 %v719, %v719
        %v723 = vsel %vm605, %v720, 0
        %vm725 = vcmask 1043456
        %v727 = vsel %vm725, %v603, 0
        %729 = vmatprep.subr.bf16.mxu0 0
        %730 = vmatpush1.bf16.msra.mxu0 %v727
        %731 = vmatprep.subr.bf16.mxu0 0
        %732 = vmatpush1.bf16.msra.mxu0 0
        %733 = vmatprep.subr.bf16.mxu0 0
        %734 = vmatpush1.bf16.msra.mxu0 0
        %735 = vmatprep.subr.bf16.mxu0 0
        %736 = vmatpush1.bf16.msra.mxu0 0
        %737 = vmatprep.subr.bf16.mxu0 0
        %738 = vmatpush1.bf16.msra.mxu0 0
        %739 = vmatprep.subr.bf16.mxu0 0
        %740 = vmatpush1.bf16.msra.mxu0 0
        %741 = vmatprep.subr.bf16.mxu0 0
        %742 = vmatpush1.bf16.msra.mxu0 0
        %743 = vmatprep.subr.bf16.mxu0 0
        %744 = vmatpush1.bf16.msra.mxu0 0
        %745 = vmatprep.subr.bf16.mxu0 0
        %746 = vmatpush1.bf16.msra.mxu0 0
        %747 = vmatprep.subr.bf16.mxu0 0
        %748 = vmatpush1.bf16.msra.mxu0 0
        %749 = vmatprep.subr.bf16.mxu0 0
        %750 = vmatpush1.bf16.msra.mxu0 0
        %751 = vmatprep.subr.bf16.mxu0 0
        %752 = vmatpush1.bf16.msra.mxu0 0
        %753 = vmatprep.subr.bf16.mxu0 0
        %754 = vmatpush1.bf16.msra.mxu0 0
        %755 = vmatprep.subr.bf16.mxu0 0
        %756 = vmatpush1.bf16.msra.mxu0 0
        %757 = vmatprep.subr.bf16.mxu0 0
        %758 = vmatpush1.bf16.msra.mxu0 0
        %759 = vmatprep.subr.bf16.mxu0 0
        %760 = vmatpush1.bf16.msra.mxu0 0
        %761 = vmatprep.mubr.bf16.mxu0 0
        %762 = vmatmul.mubr.bf16.gmra.mrb[0].mxu0 %v723
        %v763 = vpop.f32.mrb[0].mxu0
        %v764 = vadd.f32 0.0, %v763
        %v765 = vpop.f32.mrb[0].mxu0
        %v766 = vpop.f32.mrb[0].mxu0
        %v767 = vpop.f32.mrb[0].mxu0
        %768 = vdwg.mxu0
        %v770 = vsel %vm605, %v721, 0
        %v773 = vsel %vm725, %v604, 0
        %775 = vmatprep.subr.bf16.mxu0 0
        %776 = vmatpush1.bf16.msra.mxu0 %v773
        %777 = vmatprep.subr.bf16.mxu0 0
        %778 = vmatpush1.bf16.msra.mxu0 0
        %779 = vmatprep.subr.bf16.mxu0 0
        %780 = vmatpush1.bf16.msra.mxu0 0
        %781 = vmatprep.subr.bf16.mxu0 0
        %782 = vmatpush1.bf16.msra.mxu0 0
        %783 = vmatprep.subr.bf16.mxu0 0
        %784 = vmatpush1.bf16.msra.mxu0 0
        %785 = vmatprep.subr.bf16.mxu0 0
        %786 = vmatpush1.bf16.msra.mxu0 0
        %787 = vmatprep.subr.bf16.mxu0 0
        %788 = vmatpush1.bf16.msra.mxu0 0
        %789 = vmatprep.subr.bf16.mxu0 0
        %790 = vmatpush1.bf16.msra.mxu0 0
        %791 = vmatprep.subr.bf16.mxu0 0
        %792 = vmatpush1.bf16.msra.mxu0 0
        %793 = vmatprep.subr.bf16.mxu0 0
        %794 = vmatpush1.bf16.msra.mxu0 0
        %795 = vmatprep.subr.bf16.mxu0 0
        %796 = vmatpush1.bf16.msra.mxu0 0
        %797 = vmatprep.subr.bf16.mxu0 0
        %798 = vmatpush1.bf16.msra.mxu0 0
        %799 = vmatprep.subr.bf16.mxu0 0
        %800 = vmatpush1.bf16.msra.mxu0 0
        %801 = vmatprep.subr.bf16.mxu0 0
        %802 = vmatpush1.bf16.msra.mxu0 0
        %803 = vmatprep.subr.bf16.mxu0 0
        %804 = vmatpush1.bf16.msra.mxu0 0
        %805 = vmatprep.subr.bf16.mxu0 0
        %806 = vmatpush1.bf16.msra.mxu0 0
        %807 = vmatprep.mubr.bf16.mxu0 0
        %808 = vmatmul.mubr.bf16.gmra.mrb[0].mxu0 %v770
        %v809 = vpop.f32.mrb[0].mxu0
        %v810 = vadd.f32 0.0, %v809
        %v811 = vpop.f32.mrb[0].mxu0
        %v812 = vpop.f32.mrb[0].mxu0
        %v813 = vpop.f32.mrb[0].mxu0
        %814 = vdwg.mxu0
        %815 = vst.msk [vmem:[#allocation2] sm:$0xff] %vm605, %v764
        %816 = vst.msk [vmem:[#allocation2 + $0x8] sm:$0xff] %vm605, %v810
        %818 = vrot.lane.b32.xlu0 %v599, 120
        %v819 = vpop.permute.xlu0 %818
        %821 = vrot.lane.b32.xlu0 %v601, 120
        %v822 = vpop.permute.xlu0 %821
        %v824 = vsel %vm605, %v819, 0
        %v827 = vsel %vm605, %v822, 0
        %829 = vmatprep.subr.bf16.mxu0 0
        %830 = vmatpush1.bf16.xpose.msra.mxu0 %v827
        %831 = vmatprep.subr.bf16.mxu0 0
        %832 = vmatpush1.bf16.xpose.msra.mxu0 0
        %833 = vmatprep.subr.bf16.mxu0 0
        %834 = vmatpush1.bf16.xpose.msra.mxu0 0
        %835 = vmatprep.subr.bf16.mxu0 0
        %836 = vmatpush1.bf16.xpose.msra.mxu0 0
        %837 = vmatprep.subr.bf16.mxu0 0
        %838 = vmatpush1.bf16.xpose.msra.mxu0 0
        %839 = vmatprep.subr.bf16.mxu0 0
        %840 = vmatpush1.bf16.xpose.msra.mxu0 0
        %841 = vmatprep.subr.bf16.mxu0 0
        %842 = vmatpush1.bf16.xpose.msra.mxu0 0
        %843 = vmatprep.subr.bf16.mxu0 0
        %844 = vmatpush1.bf16.xpose.msra.mxu0 0
        %845 = vmatprep.subr.bf16.mxu0 0
        %846 = vmatpush1.bf16.xpose.msra.mxu0 0
        %847 = vmatprep.subr.bf16.mxu0 0
        %848 = vmatpush1.bf16.xpose.msra.mxu0 0
        %849 = vmatprep.subr.bf16.mxu0 0
        %850 = vmatpush1.bf16.xpose.msra.mxu0 0
        %851 = vmatprep.subr.bf16.mxu0 0
        %852 = vmatpush1.bf16.xpose.msra.mxu0 0
        %853 = vmatprep.subr.bf16.mxu0 0
        %854 = vmatpush1.bf16.xpose.msra.mxu0 0
        %855 = vmatprep.subr.bf16.mxu0 0
        %856 = vmatpush1.bf16.xpose.msra.mxu0 0
        %857 = vmatprep.subr.bf16.mxu0 0
        %858 = vmatpush1.bf16.xpose.msra.mxu0 0
        %859 = vmatprep.subr.bf16.mxu0 0
        %860 = vmatpush1.bf16.xpose.msra.mxu0 0
        %861 = vmatprep.mubr.bf16.mxu0 0
        %862 = vmatmul.mubr.bf16.gmra.mrb[0].mxu0 %v824
        %v863 = vpop.f32.mrb[0].mxu0
        %v864 = vadd.f32 0.0, %v863
        %v865 = vpop.f32.mrb[0].mxu0
        %v866 = vpop.f32.mrb[0].mxu0
        %v867 = vpop.f32.mrb[0].mxu0
        %868 = vdwg.mxu0
        %870 = vrot.lane.b32.xlu0 %v600, 120
        %v871 = vpop.permute.xlu0 %870
        %873 = vrot.lane.b32.xlu0 %v602, 120
        %v874 = vpop.permute.xlu0 %873
        %v876 = vsel %vm605, %v871, 0
        %v879 = vsel %vm605, %v874, 0
        %881 = vmatprep.subr.bf16.mxu0 0
        %882 = vmatpush1.bf16.xpose.msra.mxu0 %v879
        %883 = vmatprep.subr.bf16.mxu0 0
        %884 = vmatpush1.bf16.xpose.msra.mxu0 0
        %885 = vmatprep.subr.bf16.mxu0 0
        %886 = vmatpush1.bf16.xpose.msra.mxu0 0
        %887 = vmatprep.subr.bf16.mxu0 0
        %888 = vmatpush1.bf16.xpose.msra.mxu0 0
        %889 = vmatprep.subr.bf16.mxu0 0
        %890 = vmatpush1.bf16.xpose.msra.mxu0 0
        %891 = vmatprep.subr.bf16.mxu0 0
        %892 = vmatpush1.bf16.xpose.msra.mxu0 0
        %893 = vmatprep.subr.bf16.mxu0 0
        %894 = vmatpush1.bf16.xpose.msra.mxu0 0
        %895 = vmatprep.subr.bf16.mxu0 0
        %896 = vmatpush1.bf16.xpose.msra.mxu0 0
        %897 = vmatprep.subr.bf16.mxu0 0
        %898 = vmatpush1.bf16.xpose.msra.mxu0 0
        %899 = vmatprep.subr.bf16.mxu0 0
        %900 = vmatpush1.bf16.xpose.msra.mxu0 0
        %901 = vmatprep.subr.bf16.mxu0 0
        %902 = vmatpush1.bf16.xpose.msra.mxu0 0
        %903 = vmatprep.subr.bf16.mxu0 0
        %904 = vmatpush1.bf16.xpose.msra.mxu0 0
        %905 = vmatprep.subr.bf16.mxu0 0
        %906 = vmatpush1.bf16.xpose.msra.mxu0 0
        %907 = vmatprep.subr.bf16.mxu0 0
        %908 = vmatpush1.bf16.xpose.msra.mxu0 0
        %909 = vmatprep.subr.bf16.mxu0 0
        %910 = vmatpush1.bf16.xpose.msra.mxu0 0
        %911 = vmatprep.subr.bf16.mxu0 0
        %912 = vmatpush1.bf16.xpose.msra.mxu0 0
        %913 = vmatprep.mubr.bf16.mxu0 0
        %914 = vmatmul.mubr.bf16.gmra.mrb[0].mxu0 %v876
        %v915 = vpop.f32.mrb[0].mxu0
        %v916 = vadd.f32 0.0, %v915
        %v917 = vpop.f32.mrb[0].mxu0
        %v918 = vpop.f32.mrb[0].mxu0
        %v919 = vpop.f32.mrb[0].mxu0
        %920 = vdwg.mxu0
        %v921 = vsel %vm605, %v864, -inf
        %922 = vmax.xlane.f32.xlu0 %v921
        %v923 = vpop.xlane.xlu0 %922
        %v924 = vsel %vm605, %v916, -inf
        %925 = vmax.xlane.f32.xlu0 %v924
        %v926 = vpop.xlane.xlu0 %925
        %v927 = vsub.f32 %v864, %v923
        %v928 = vsub.f32 %v916, %v926
        %v929 = vmul.f32 %v927, 1.442695
        %v930 = vpow.pop %v929
        %v931 = vmul.f32 %v928, 1.442695
        %v932 = vpow.pop %v931
        %v933 = vsel %vm605, %v930, 0.0
        %934 = vadd.xlane.f32.xlu0 %v933
        %v935 = vpop.xlane.xlu0 %934
        %v936 = vsel %vm605, %v932, 0.0
        %937 = vadd.xlane.f32.xlu0 %v936
        %v938 = vpop.xlane.xlu0 %937
        %v939 = vrcp.pop %v935
        %v940 = vrcp.pop %v938
        %v941 = vmul.f32 %v930, %v939
        %v942 = vmul.f32 %v932, %v940
        %v943 = vpack.c.bf16 %v941, %v941
        %v944 = vpack.c.bf16 %v942, %v942
        %946 = vrot.lane.b32.xlu0 %v603, 120
        %v947 = vpop.permute.xlu0 %946
        %v949 = vsel %vm605, %v943, 0
        %v952 = vsel %vm725, %v947, 0
        %954 = vmatprep.subr.bf16.mxu0 0
        %955 = vmatpush1.bf16.msra.mxu0 %v952
        %956 = vmatprep.subr.bf16.mxu0 0
        %957 = vmatpush1.bf16.msra.mxu0 0
        %958 = vmatprep.subr.bf16.mxu0 0
        %959 = vmatpush1.bf16.msra.mxu0 0
        %960 = vmatprep.subr.bf16.mxu0 0
        %961 = vmatpush1.bf16.msra.mxu0 0
        %962 = vmatprep.subr.bf16.mxu0 0
        %963 = vmatpush1.bf16.msra.mxu0 0
        %964 = vmatprep.subr.bf16.mxu0 0
        %965 = vmatpush1.bf16.msra.mxu0 0
        %966 = vmatprep.subr.bf16.mxu0 0
        %967 = vmatpush1.bf16.msra.mxu0 0
        %968 = vmatprep.subr.bf16.mxu0 0
        %969 = vmatpush1.bf16.msra.mxu0 0
        %970 = vmatprep.subr.bf16.mxu0 0
        %971 = vmatpush1.bf16.msra.mxu0 0
        %972 = vmatprep.subr.bf16.mxu0 0
        %973 = vmatpush1.bf16.msra.mxu0 0
        %974 = vmatprep.subr.bf16.mxu0 0
        %975 = vmatpush1.bf16.msra.mxu0 0
        %976 = vmatprep.subr.bf16.mxu0 0
        %977 = vmatpush1.bf16.msra.mxu0 0
        %978 = vmatprep.subr.bf16.mxu0 0
        %979 = vmatpush1.bf16.msra.mxu0 0
        %980 = vmatprep.subr.bf16.mxu0 0
        %981 = vmatpush1.bf16.msra.mxu0 0
        %982 = vmatprep.subr.bf16.mxu0 0
        %983 = vmatpush1.bf16.msra.mxu0 0
        %984 = vmatprep.subr.bf16.mxu0 0
        %985 = vmatpush1.bf16.msra.mxu0 0
        %986 = vmatprep.mubr.bf16.mxu0 0
        %987 = vmatmul.mubr.bf16.gmra.mrb[0].mxu0 %v949
        %v988 = vpop.f32.mrb[0].mxu0
        %v989 = vadd.f32 0.0, %v988
        %v990 = vpop.f32.mrb[0].mxu0
        %v991 = vpop.f32.mrb[0].mxu0
        %v992 = vpop.f32.mrb[0].mxu0
        %993 = vdwg.mxu0
        %995 = vrot.lane.b32.xlu0 %v604, 120
        %v996 = vpop.permute.xlu0 %995
        %v998 = vsel %vm605, %v944, 0
        %v1001 = vsel %vm725, %v996, 0
        %1003 = vmatprep.subr.bf16.mxu0 0
        %1004 = vmatpush1.bf16.msra.mxu0 %v1001
        %1005 = vmatprep.subr.bf16.mxu0 0
        %1006 = vmatpush1.bf16.msra.mxu0 0
        %1007 = vmatprep.subr.bf16.mxu0 0
        %1008 = vmatpush1.bf16.msra.mxu0 0
        %1009 = vmatprep.subr.bf16.mxu0 0
        %1010 = vmatpush1.bf16.msra.mxu0 0
        %1011 = vmatprep.subr.bf16.mxu0 0
        %1012 = vmatpush1.bf16.msra.mxu0 0
        %1013 = vmatprep.subr.bf16.mxu0 0
        %1014 = vmatpush1.bf16.msra.mxu0 0
        %1015 = vmatprep.subr.bf16.mxu0 0
        %1016 = vmatpush1.bf16.msra.mxu0 0
        %1017 = vmatprep.subr.bf16.mxu0 0
        %1018 = vmatpush1.bf16.msra.mxu0 0
        %1019 = vmatprep.subr.bf16.mxu0 0
        %1020 = vmatpush1.bf16.msra.mxu0 0
        %1021 = vmatprep.subr.bf16.mxu0 0
        %1022 = vmatpush1.bf16.msra.mxu0 0
        %1023 = vmatprep.subr.bf16.mxu0 0
        %1024 = vmatpush1.bf16.msra.mxu0 0
        %1025 = vmatprep.subr.bf16.mxu0 0
        %1026 = vmatpush1.bf16.msra.mxu0 0
        %1027 = vmatprep.subr.bf16.mxu0 0
        %1028 = vmatpush1.bf16.msra.mxu0 0
        %1029 = vmatprep.subr.bf16.mxu0 0
        %1030 = vmatpush1.bf16.msra.mxu0 0
        %1031 = vmatprep.subr.bf16.mxu0 0
        %1032 = vmatpush1.bf16.msra.mxu0 0
        %1033 = vmatprep.subr.bf16.mxu0 0
        %1034 = vmatpush1.bf16.msra.mxu0 0
        %1035 = vmatprep.mubr.bf16.mxu0 0
        %1036 = vmatmul.mubr.bf16.gmra.mrb[0].mxu0 %v998
        %v1037 = vpop.f32.mrb[0].mxu0
        %v1038 = vadd.f32 0.0, %v1037
        %v1039 = vpop.f32.mrb[0].mxu0
        %v1040 = vpop.f32.mrb[0].mxu0
        %v1041 = vpop.f32.mrb[0].mxu0
        %1042 = vdwg.mxu0
        %1045 = vrot.lane.b32.xlu0 %v989, 8
        %v1046 = vpop.permute.xlu0 %1045
        %1047 = vrot.lane.b32.xlu0 %v1038, 8
        %v1048 = vpop.permute.xlu0 %1047
        %vm1051 = vcmask 130112
        %1052 = vst.msk [vmem:[#allocation2] sm:$0xff] %vm1051, %v1046
        %1053 = vst.msk [vmem:[#allocation2 + $0x8] sm:$0xff] %vm1051, %v1048
        %1054 = vrot.lane.b32.xlu0 %v599, 112
        %v1055 = vpop.permute.xlu0 %1054
        %1056 = vrot.lane.b32.xlu0 %v601, 112
        %v1057 = vpop.permute.xlu0 %1056
        %v1059 = vsel %vm605, %v1055, 0
        %v1062 = vsel %vm605, %v1057, 0
        %1064 = vmatprep.subr.bf16.mxu0 0
        %1065 = vmatpush1.bf16.xpose.msra.mxu0 %v1062
        %1066 = vmatprep.subr.bf16.mxu0 0
        %1067 = vmatpush1.bf16.xpose.msra.mxu0 0
        %1068 = vmatprep.subr.bf16.mxu0 0
        %1069 = vmatpush1.bf16.xpose.msra.mxu0 0
        %1070 = vmatprep.subr.bf16.mxu0 0
        %1071 = vmatpush1.bf16.xpose.msra.mxu0 0
        %1072 = vmatprep.subr.bf16.mxu0 0
        %1073 = vmatpush1.bf16.xpose.msra.mxu0 0
        %1074 = vmatprep.subr.bf16.mxu0 0
        %1075 = vmatpush1.bf16.xpose.msra.mxu0 0
        %1076 = vmatprep.subr.bf16.mxu0 0
        %1077 = vmatpush1.bf16.xpose.msra.mxu0 0
        %1078 = vmatprep.subr.bf16.mxu0 0
        %1079 = vmatpush1.bf16.xpose.msra.mxu0 0
        %1080 = vmatprep.subr.bf16.mxu0 0
        %1081 = vmatpush1.bf16.xpose.msra.mxu0 0
        %1082 = vmatprep.subr.bf16.mxu0 0
        %1083 = vmatpush1.bf16.xpose.msra.mxu0 0
        %1084 = vmatprep.subr.bf16.mxu0 0
        %1085 = vmatpush1.bf16.xpose.msra.mxu0 0
        %1086 = vmatprep.subr.bf16.mxu0 0
        %1087 = vmatpush1.bf16.xpose.msra.mxu0 0
        %1088 = vmatprep.subr.bf16.mxu0 0
        %1089 = vmatpush1.bf16.xpose.msra.mxu0 0
        %1090 = vmatprep.subr.bf16.mxu0 0
        %1091 = vmatpush1.bf16.xpose.msra.mxu0 0
        %1092 = vmatprep.subr.bf16.mxu0 0
        %1093 = vmatpush1.bf16.xpose.msra.mxu0 0
        %1094 = vmatprep.subr.bf16.mxu0 0
        %1095 = vmatpush1.bf16.xpose.msra.mxu0 0
        %1096 = vmatprep.mubr.bf16.mxu0 0
        %1097 = vmatmul.mubr.bf16.gmra.mrb[0].mxu0 %v1059
        %v1098 = vpop.f32.mrb[0].mxu0
        %v1099 = vadd.f32 0.0, %v1098
        %v1100 = vpop.f32.mrb[0].mxu0
        %v1101 = vpop.f32.mrb[0].mxu0
        %v1102 = vpop.f32.mrb[0].mxu0
        %1103 = vdwg.mxu0
        %1104 = vrot.lane.b32.xlu0 %v600, 112
        %v1105 = vpop.permute.xlu0 %1104
        %1106 = vrot.lane.b32.xlu0 %v602, 112
        %v1107 = vpop.permute.xlu0 %1106
        %v1109 = vsel %vm605, %v1105, 0
        %v1112 = vsel %vm605, %v1107, 0
        %1114 = vmatprep.subr.bf16.mxu0 0
        %1115 = vmatpush1.bf16.xpose.msra.mxu0 %v1112
        %1116 = vmatprep.subr.bf16.mxu0 0
        %1117 = vmatpush1.bf16.xpose.msra.mxu0 0
        %1118 = vmatprep.subr.bf16.mxu0 0
        %1119 = vmatpush1.bf16.xpose.msra.mxu0 0
        %1120 = vmatprep.subr.bf16.mxu0 0
        %1121 = vmatpush1.bf16.xpose.msra.mxu0 0
        %1122 = vmatprep.subr.bf16.mxu0 0
        %1123 = vmatpush1.bf16.xpose.msra.mxu0 0
        %1124 = vmatprep.subr.bf16.mxu0 0
        %1125 = vmatpush1.bf16.xpose.msra.mxu0 0
        %1126 = vmatprep.subr.bf16.mxu0 0
        %1127 = vmatpush1.bf16.xpose.msra.mxu0 0
        %1128 = vmatprep.subr.bf16.mxu0 0
        %1129 = vmatpush1.bf16.xpose.msra.mxu0 0
        %1130 = vmatprep.subr.bf16.mxu0 0
        %1131 = vmatpush1.bf16.xpose.msra.mxu0 0
        %1132 = vmatprep.subr.bf16.mxu0 0
        %1133 = vmatpush1.bf16.xpose.msra.mxu0 0
        %1134 = vmatprep.subr.bf16.mxu0 0
        %1135 = vmatpush1.bf16.xpose.msra.mxu0 0
        %1136 = vmatprep.subr.bf16.mxu0 0
        %1137 = vmatpush1.bf16.xpose.msra.mxu0 0
        %1138 = vmatprep.subr.bf16.mxu0 0
        %1139 = vmatpush1.bf16.xpose.msra.mxu0 0
        %1140 = vmatprep.subr.bf16.mxu0 0
        %1141 = vmatpush1.bf16.xpose.msra.mxu0 0
        %1142 = vmatprep.subr.bf16.mxu0 0
        %1143 = vmatpush1.bf16.xpose.msra.mxu0 0
        %1144 = vmatprep.subr.bf16.mxu0 0
        %1145 = vmatpush1.bf16.xpose.msra.mxu0 0
        %1146 = vmatprep.mubr.bf16.mxu0 0
        %1147 = vmatmul.mubr.bf16.gmra.mrb[0].mxu0 %v1109
        %v1148 = vpop.f32.mrb[0].mxu0
        %v1149 = vadd.f32 0.0, %v1148
        %v1150 = vpop.f32.mrb[0].mxu0
        %v1151 = vpop.f32.mrb[0].mxu0
        %v1152 = vpop.f32.mrb[0].mxu0
        %1153 = vdwg.mxu0
        %v1154 = vsel %vm605, %v1099, -inf
        %1155 = vmax.xlane.f32.xlu0 %v1154
        %v1156 = vpop.xlane.xlu0 %1155
        %v1157 = vsel %vm605, %v1149, -inf
        %1158 = vmax.xlane.f32.xlu0 %v1157
        %v1159 = vpop.xlane.xlu0 %1158
        %v1160 = vsub.f32 %v1099, %v1156
        %v1161 = vsub.f32 %v1149, %v1159
        %v1162 = vmul.f32 %v1160, 1.442695
        %v1163 = vpow.pop %v1162
        %v1164 = vmul.f32 %v1161, 1.442695
        %v1165 = vpow.pop %v1164
        %v1166 = vsel %vm605, %v1163, 0.0
        %1167 = vadd.xlane.f32.xlu0 %v1166
        %v1168 = vpop.xlane.xlu0 %1167
        %v1169 = vsel %vm605, %v1165, 0.0
        %1170 = vadd.xlane.f32.xlu0 %v1169
        %v1171 = vpop.xlane.xlu0 %1170
        %v1172 = vrcp.pop %v1168
        %v1173 = vrcp.pop %v1171
        %v1174 = vmul.f32 %v1163, %v1172
        %v1175 = vmul.f32 %v1165, %v1173
        %v1176 = vpack.c.bf16 %v1174, %v1174
        %v1177 = vpack.c.bf16 %v1175, %v1175
        %1178 = vrot.lane.b32.xlu0 %v603, 112
        %v1179 = vpop.permute.xlu0 %1178
        %v1181 = vsel %vm605, %v1176, 0
        %v1184 = vsel %vm725, %v1179, 0
        %1186 = vmatprep.subr.bf16.mxu0 0
        %1187 = vmatpush1.bf16.msra.mxu0 %v1184
        %1188 = vmatprep.subr.bf16.mxu0 0
        %1189 = vmatpush1.bf16.msra.mxu0 0
        %1190 = vmatprep.subr.bf16.mxu0 0
        %1191 = vmatpush1.bf16.msra.mxu0 0
        %1192 = vmatprep.subr.bf16.mxu0 0
        %1193 = vmatpush1.bf16.msra.mxu0 0
        %1194 = vmatprep.subr.bf16.mxu0 0
        %1195 = vmatpush1.bf16.msra.mxu0 0
        %1196 = vmatprep.subr.bf16.mxu0 0
        %1197 = vmatpush1.bf16.msra.mxu0 0
        %1198 = vmatprep.subr.bf16.mxu0 0
        %1199 = vmatpush1.bf16.msra.mxu0 0
        %1200 = vmatprep.subr.bf16.mxu0 0
        %1201 = vmatpush1.bf16.msra.mxu0 0
        %1202 = vmatprep.subr.bf16.mxu0 0
        %1203 = vmatpush1.bf16.msra.mxu0 0
        %1204 = vmatprep.subr.bf16.mxu0 0
        %1205 = vmatpush1.bf16.msra.mxu0 0
        %1206 = vmatprep.subr.bf16.mxu0 0
        %1207 = vmatpush1.bf16.msra.mxu0 0
        %1208 = vmatprep.subr.bf16.mxu0 0
        %1209 = vmatpush1.bf16.msra.mxu0 0
        %1210 = vmatprep.subr.bf16.mxu0 0
        %1211 = vmatpush1.bf16.msra.mxu0 0
        %1212 = vmatprep.subr.bf16.mxu0 0
        %1213 = vmatpush1.bf16.msra.mxu0 0
        %1214 = vmatprep.subr.bf16.mxu0 0
        %1215 = vmatpush1.bf16.msra.mxu0 0
        %1216 = vmatprep.subr.bf16.mxu0 0
        %1217 = vmatpush1.bf16.msra.mxu0 0
        %1218 = vmatprep.mubr.bf16.mxu0 0
        %1219 = vmatmul.mubr.bf16.gmra.mrb[0].mxu0 %v1181
        %v1220 = vpop.f32.mrb[0].mxu0
        %v1221 = vadd.f32 0.0, %v1220
        %v1222 = vpop.f32.mrb[0].mxu0
        %v1223 = vpop.f32.mrb[0].mxu0
        %v1224 = vpop.f32.mrb[0].mxu0
        %1225 = vdwg.mxu0
        %1226 = vrot.lane.b32.xlu0 %v604, 112
        %v1227 = vpop.permute.xlu0 %1226
        %v1229 = vsel %vm605, %v1177, 0
        %v1232 = vsel %vm725, %v1227, 0
        %1234 = vmatprep.subr.bf16.mxu0 0
        %1235 = vmatpush1.bf16.msra.mxu0 %v1232
        %1236 = vmatprep.subr.bf16.mxu0 0
        %1237 = vmatpush1.bf16.msra.mxu0 0
        %1238 = vmatprep.subr.bf16.mxu0 0
        %1239 = vmatpush1.bf16.msra.mxu0 0
        %1240 = vmatprep.subr.bf16.mxu0 0
        %1241 = vmatpush1.bf16.msra.mxu0 0
        %1242 = vmatprep.subr.bf16.mxu0 0
        %1243 = vmatpush1.bf16.msra.mxu0 0
        %1244 = vmatprep.subr.bf16.mxu0 0
        %1245 = vmatpush1.bf16.msra.mxu0 0
        %1246 = vmatprep.subr.bf16.mxu0 0
        %1247 = vmatpush1.bf16.msra.mxu0 0
        %1248 = vmatprep.subr.bf16.mxu0 0
        %1249 = vmatpush1.bf16.msra.mxu0 0
        %1250 = vmatprep.subr.bf16.mxu0 0
        %1251 = vmatpush1.bf16.msra.mxu0 0
        %1252 = vmatprep.subr.bf16.mxu0 0
        %1253 = vmatpush1.bf16.msra.mxu0 0
        %1254 = vmatprep.subr.bf16.mxu0 0
        %1255 = vmatpush1.bf16.msra.mxu0 0
        %1256 = vmatprep.subr.bf16.mxu0 0
        %1257 = vmatpush1.bf16.msra.mxu0 0
        %1258 = vmatprep.subr.bf16.mxu0 0
        %1259 = vmatpush1.bf16.msra.mxu0 0
        %1260 = vmatprep.subr.bf16.mxu0 0
        %1261 = vmatpush1.bf16.msra.mxu0 0
        %1262 = vmatprep.subr.bf16.mxu0 0
        %1263 = vmatpush1.bf16.msra.mxu0 0
        %1264 = vmatprep.subr.bf16.mxu0 0
        %1265 = vmatpush1.bf16.msra.mxu0 0
        %1266 = vmatprep.mubr.bf16.mxu0 0
        %1267 = vmatmul.mubr.bf16.gmra.mrb[0].mxu0 %v1229
        %v1268 = vpop.f32.mrb[0].mxu0
        %v1269 = vadd.f32 0.0, %v1268
        %v1270 = vpop.f32.mrb[0].mxu0
        %v1271 = vpop.f32.mrb[0].mxu0
        %v1272 = vpop.f32.mrb[0].mxu0
        %1273 = vdwg.mxu0
        %1276 = vrot.lane.b32.xlu0 %v1221, 16
        %v1277 = vpop.permute.xlu0 %1276
        %1278 = vrot.lane.b32.xlu0 %v1269, 16
        %v1279 = vpop.permute.xlu0 %1278
        %vm1282 = vcmask 195712
        %1283 = vst.msk [vmem:[#allocation2] sm:$0xff] %vm1282, %v1277
        %1284 = vst.msk [vmem:[#allocation2 + $0x8] sm:$0xff] %vm1282, %v1279
        %1285 = vrot.lane.b32.xlu0 %v599, 104
        %v1286 = vpop.permute.xlu0 %1285
        %1287 = vrot.lane.b32.xlu0 %v601, 104
        %v1288 = vpop.permute.xlu0 %1287
        %v1290 = vsel %vm605, %v1286, 0
        %v1293 = vsel %vm605, %v1288, 0
        %1295 = vmatprep.subr.bf16.mxu0 0
        %1296 = vmatpush1.bf16.xpose.msra.mxu0 %v1293
        %1297 = vmatprep.subr.bf16.mxu0 0
        %1298 = vmatpush1.bf16.xpose.msra.mxu0 0
        %1299 = vmatprep.subr.bf16.mxu0 0
        %1300 = vmatpush1.bf16.xpose.msra.mxu0 0
        %1301 = vmatprep.subr.bf16.mxu0 0
        %1302 = vmatpush1.bf16.xpose.msra.mxu0 0
        %1303 = vmatprep.subr.bf16.mxu0 0
        %1304 = vmatpush1.bf16.xpose.msra.mxu0 0
        %1305 = vmatprep.subr.bf16.mxu0 0
        %1306 = vmatpush1.bf16.xpose.msra.mxu0 0
        %1307 = vmatprep.subr.bf16.mxu0 0
        %1308 = vmatpush1.bf16.xpose.msra.mxu0 0
        %1309 = vmatprep.subr.bf16.mxu0 0
        %1310 = vmatpush1.bf16.xpose.msra.mxu0 0
        %1311 = vmatprep.subr.bf16.mxu0 0
        %1312 = vmatpush1.bf16.xpose.msra.mxu0 0
        %1313 = vmatprep.subr.bf16.mxu0 0
        %1314 = vmatpush1.bf16.xpose.msra.mxu0 0
        %1315 = vmatprep.subr.bf16.mxu0 0
        %1316 = vmatpush1.bf16.xpose.msra.mxu0 0
        %1317 = vmatprep.subr.bf16.mxu0 0
        %1318 = vmatpush1.bf16.xpose.msra.mxu0 0
        %1319 = vmatprep.subr.bf16.mxu0 0
        %1320 = vmatpush1.bf16.xpose.msra.mxu0 0
        %1321 = vmatprep.subr.bf16.mxu0 0
        %1322 = vmatpush1.bf16.xpose.msra.mxu0 0
        %1323 = vmatprep.subr.bf16.mxu0 0
        %1324 = vmatpush1.bf16.xpose.msra.mxu0 0
        %1325 = vmatprep.subr.bf16.mxu0 0
        %1326 = vmatpush1.bf16.xpose.msra.mxu0 0
        %1327 = vmatprep.mubr.bf16.mxu0 0
        %1328 = vmatmul.mubr.bf16.gmra.mrb[0].mxu0 %v1290
        %v1329 = vpop.f32.mrb[0].mxu0
        %v1330 = vadd.f32 0.0, %v1329
        %v1331 = vpop.f32.mrb[0].mxu0
        %v1332 = vpop.f32.mrb[0].mxu0
        %v1333 = vpop.f32.mrb[0].mxu0
        %1334 = vdwg.mxu0
        %1335 = vrot.lane.b32.xlu0 %v600, 104
        %v1336 = vpop.permute.xlu0 %1335
        %1337 = vrot.lane.b32.xlu0 %v602, 104
        %v1338 = vpop.permute.xlu0 %1337
        %v1340 = vsel %vm605, %v1336, 0
        %v1343 = vsel %vm605, %v1338, 0
        %1345 = vmatprep.subr.bf16.mxu0 0
        %1346 = vmatpush1.bf16.xpose.msra.mxu0 %v1343
        %1347 = vmatprep.subr.bf16.mxu0 0
        %1348 = vmatpush1.bf16.xpose.msra.mxu0 0
        %1349 = vmatprep.subr.bf16.mxu0 0
        %1350 = vmatpush1.bf16.xpose.msra.mxu0 0
        %1351 = vmatprep.subr.bf16.mxu0 0
        %1352 = vmatpush1.bf16.xpose.msra.mxu0 0
        %1353 = vmatprep.subr.bf16.mxu0 0
        %1354 = vmatpush1.bf16.xpose.msra.mxu0 0
        %1355 = vmatprep.subr.bf16.mxu0 0
        %1356 = vmatpush1.bf16.xpose.msra.mxu0 0
        %1357 = vmatprep.subr.bf16.mxu0 0
        %1358 = vmatpush1.bf16.xpose.msra.mxu0 0
        %1359 = vmatprep.subr.bf16.mxu0 0
        %1360 = vmatpush1.bf16.xpose.msra.mxu0 0
        %1361 = vmatprep.subr.bf16.mxu0 0
        %1362 = vmatpush1.bf16.xpose.msra.mxu0 0
        %1363 = vmatprep.subr.bf16.mxu0 0
        %1364 = vmatpush1.bf16.xpose.msra.mxu0 0
        %1365 = vmatprep.subr.bf16.mxu0 0
        %1366 = vmatpush1.bf16.xpose.msra.mxu0 0
        %1367 = vmatprep.subr.bf16.mxu0 0
        %1368 = vmatpush1.bf16.xpose.msra.mxu0 0
        %1369 = vmatprep.subr.bf16.mxu0 0
        %1370 = vmatpush1.bf16.xpose.msra.mxu0 0
        %1371 = vmatprep.subr.bf16.mxu0 0
        %1372 = vmatpush1.bf16.xpose.msra.mxu0 0
        %1373 = vmatprep.subr.bf16.mxu0 0
        %1374 = vmatpush1.bf16.xpose.msra.mxu0 0
        %1375 = vmatprep.subr.bf16.mxu0 0
        %1376 = vmatpush1.bf16.xpose.msra.mxu0 0
        %1377 = vmatprep.mubr.bf16.mxu0 0
        %1378 = vmatmul.mubr.bf16.gmra.mrb[0].mxu0 %v1340
        %v1379 = vpop.f32.mrb[0].mxu0
        %v1380 = vadd.f32 0.0, %v1379
        %v1381 = vpop.f32.mrb[0].mxu0
        %v1382 = vpop.f32.mrb[0].mxu0
        %v1383 = vpop.f32.mrb[0].mxu0
        %1384 = vdwg.mxu0
        %v1385 = vsel %vm605, %v1330, -inf
        %1386 = vmax.xlane.f32.xlu0 %v1385
        %v1387 = vpop.xlane.xlu0 %1386
        %v1388 = vsel %vm605, %v1380, -inf
        %1389 = vmax.xlane.f32.xlu0 %v1388
        %v1390 = vpop.xlane.xlu0 %1389
        %v1391 = vsub.f32 %v1330, %v1387
        %v1392 = vsub.f32 %v1380, %v1390
        %v1393 = vmul.f32 %v1391, 1.442695
        %v1394 = vpow.pop %v1393
        %v1395 = vmul.f32 %v1392, 1.442695
        %v1396 = vpow.pop %v1395
        %v1397 = vsel %vm605, %v1394, 0.0
        %1398 = vadd.xlane.f32.xlu0 %v1397
        %v1399 = vpop.xlane.xlu0 %1398
        %v1400 = vsel %vm605, %v1396, 0.0
        %1401 = vadd.xlane.f32.xlu0 %v1400
        %v1402 = vpop.xlane.xlu0 %1401
        %v1403 = vrcp.pop %v1399
        %v1404 = vrcp.pop %v1402
        %v1405 = vmul.f32 %v1394, %v1403
        %v1406 = vmul.f32 %v1396, %v1404
        %v1407 = vpack.c.bf16 %v1405, %v1405
        %v1408 = vpack.c.bf16 %v1406, %v1406
        %1409 = vrot.lane.b32.xlu0 %v603, 104
        %v1410 = vpop.permute.xlu0 %1409
        %v1412 = vsel %vm605, %v1407, 0
        %v1415 = vsel %vm725, %v1410, 0
        %1417 = vmatprep.subr.bf16.mxu0 0
        %1418 = vmatpush1.bf16.msra.mxu0 %v1415
        %1419 = vmatprep.subr.bf16.mxu0 0
        %1420 = vmatpush1.bf16.msra.mxu0 0
        %1421 = vmatprep.subr.bf16.mxu0 0
        %1422 = vmatpush1.bf16.msra.mxu0 0
        %1423 = vmatprep.subr.bf16.mxu0 0
        %1424 = vmatpush1.bf16.msra.mxu0 0
        %1425 = vmatprep.subr.bf16.mxu0 0
        %1426 = vmatpush1.bf16.msra.mxu0 0
        %1427 = vmatprep.subr.bf16.mxu0 0
        %1428 = vmatpush1.bf16.msra.mxu0 0
        %1429 = vmatprep.subr.bf16.mxu0 0
        %1430 = vmatpush1.bf16.msra.mxu0 0
        %1431 = vmatprep.subr.bf16.mxu0 0
        %1432 = vmatpush1.bf16.msra.mxu0 0
        %1433 = vmatprep.subr.bf16.mxu0 0
        %1434 = vmatpush1.bf16.msra.mxu0 0
        %1435 = vmatprep.subr.bf16.mxu0 0
        %1436 = vmatpush1.bf16.msra.mxu0 0
        %1437 = vmatprep.subr.bf16.mxu0 0
        %1438 = vmatpush1.bf16.msra.mxu0 0
        %1439 = vmatprep.subr.bf16.mxu0 0
        %1440 = vmatpush1.bf16.msra.mxu0 0
        %1441 = vmatprep.subr.bf16.mxu0 0
        %1442 = vmatpush1.bf16.msra.mxu0 0
        %1443 = vmatprep.subr.bf16.mxu0 0
        %1444 = vmatpush1.bf16.msra.mxu0 0
        %1445 = vmatprep.subr.bf16.mxu0 0
        %1446 = vmatpush1.bf16.msra.mxu0 0
        %1447 = vmatprep.subr.bf16.mxu0 0
        %1448 = vmatpush1.bf16.msra.mxu0 0
        %1449 = vmatprep.mubr.bf16.mxu0 0
        %1450 = vmatmul.mubr.bf16.gmra.mrb[0].mxu0 %v1412
        %v1451 = vpop.f32.mrb[0].mxu0
        %v1452 = vadd.f32 0.0, %v1451
        %v1453 = vpop.f32.mrb[0].mxu0
        %v1454 = vpop.f32.mrb[0].mxu0
        %v1455 = vpop.f32.mrb[0].mxu0
        %1456 = vdwg.mxu0
        %1457 = vrot.lane.b32.xlu0 %v604, 104
        %v1458 = vpop.permute.xlu0 %1457
        %v1460 = vsel %vm605, %v1408, 0
        %v1463 = vsel %vm725, %v1458, 0
        %1465 = vmatprep.subr.bf16.mxu0 0
        %1466 = vmatpush1.bf16.msra.mxu0 %v1463
        %1467 = vmatprep.subr.bf16.mxu0 0
        %1468 = vmatpush1.bf16.msra.mxu0 0
        %1469 = vmatprep.subr.bf16.mxu0 0
        %1470 = vmatpush1.bf16.msra.mxu0 0
        %1471 = vmatprep.subr.bf16.mxu0 0
        %1472 = vmatpush1.bf16.msra.mxu0 0
        %1473 = vmatprep.subr.bf16.mxu0 0
        %1474 = vmatpush1.bf16.msra.mxu0 0
        %1475 = vmatprep.subr.bf16.mxu0 0
        %1476 = vmatpush1.bf16.msra.mxu0 0
        %1477 = vmatprep.subr.bf16.mxu0 0
        %1478 = vmatpush1.bf16.msra.mxu0 0
        %1479 = vmatprep.subr.bf16.mxu0 0
        %1480 = vmatpush1.bf16.msra.mxu0 0
        %1481 = vmatprep.subr.bf16.mxu0 0
        %1482 = vmatpush1.bf16.msra.mxu0 0
        %1483 = vmatprep.subr.bf16.mxu0 0
        %1484 = vmatpush1.bf16.msra.mxu0 0
        %1485 = vmatprep.subr.bf16.mxu0 0
        %1486 = vmatpush1.bf16.msra.mxu0 0
        %1487 = vmatprep.subr.bf16.mxu0 0
        %1488 = vmatpush1.bf16.msra.mxu0 0
        %1489 = vmatprep.subr.bf16.mxu0 0
        %1490 = vmatpush1.bf16.msra.mxu0 0
        %1491 = vmatprep.subr.bf16.mxu0 0
        %1492 = vmatpush1.bf16.msra.mxu0 0
        %1493 = vmatprep.subr.bf16.mxu0 0
        %1494 = vmatpush1.bf16.msra.mxu0 0
        %1495 = vmatprep.subr.bf16.mxu0 0
        %1496 = vmatpush1.bf16.msra.mxu0 0
        %1497 = vmatprep.mubr.bf16.mxu0 0
        %1498 = vmatmul.mubr.bf16.gmra.mrb[0].mxu0 %v1460
        %v1499 = vpop.f32.mrb[0].mxu0
        %v1500 = vadd.f32 0.0, %v1499
        %v1501 = vpop.f32.mrb[0].mxu0
        %v1502 = vpop.f32.mrb[0].mxu0
        %v1503 = vpop.f32.mrb[0].mxu0
        %1504 = vdwg.mxu0
        %1507 = vrot.lane.b32.xlu0 %v1452, 24
        %v1508 = vpop.permute.xlu0 %1507
        %1509 = vrot.lane.b32.xlu0 %v1500, 24
        %v1510 = vpop.permute.xlu0 %1509
        %vm1513 = vcmask 261312
        %1514 = vst.msk [vmem:[#allocation2] sm:$0xff] %vm1513, %v1508
        %1515 = vst.msk [vmem:[#allocation2 + $0x8] sm:$0xff] %vm1513, %v1510
        %v1516 = vld [vmem:[#allocation2] sm:$0xff]
        %v1517 = vld [vmem:[#allocation2 + $0x8] sm:$0xff]
        %v1518 = vpack.c.bf16 %v1517, %v1516
        %v1519 = vld [vmem:[#allocation11] sm:$0xf]
        %v1520 = vld [vmem:[#allocation11 + $0x4] sm:$0xf]
        %v1521 = vld [vmem:[#allocation11 + $0x8] sm:$0xf]
        %v1522 = vld [vmem:[#allocation11 + $0xc] sm:$0xf]
        %v1527 = vunpack.c.l.b16 %v1519
        %v1528 = vunpack.c.l.b16 %v1520
        %v1529 = vunpack.c.l.b16 %v1521
        %v1530 = vunpack.c.l.b16 %v1522
        %v1531 = vpack.c.b16 %v1528, %v1527
        %v1532 = vpack.c.b16 %v1530, %v1529
        %v1536 = vsel %vm380, %v1518, 0
        %1538 = vmatprep.subr.bf16.mxu0 0
        %1539 = vmatpush1.bf16.msra.mxu0 %v1531
        %1540 = vmatprep.subr.bf16.mxu0 0
        %1541 = vmatpush1.bf16.msra.mxu0 %v1532
        %1542 = vmatprep.subr.bf16.mxu0 0
        %1543 = vmatpush1.bf16.msra.mxu0 0
        %1544 = vmatprep.subr.bf16.mxu0 0
        %1545 = vmatpush1.bf16.msra.mxu0 0
        %1546 = vmatprep.subr.bf16.mxu0 0
        %1547 = vmatpush1.bf16.msra.mxu0 0
        %1548 = vmatprep.subr.bf16.mxu0 0
        %1549 = vmatpush1.bf16.msra.mxu0 0
        %1550 = vmatprep.subr.bf16.mxu0 0
        %1551 = vmatpush1.bf16.msra.mxu0 0
        %1552 = vmatprep.subr.bf16.mxu0 0
        %1553 = vmatpush1.bf16.msra.mxu0 0
        %1554 = vmatprep.subr.bf16.mxu0 0
        %1555 = vmatpush1.bf16.msra.mxu0 0
        %1556 = vmatprep.subr.bf16.mxu0 0
        %1557 = vmatpush1.bf16.msra.mxu0 0
        %1558 = vmatprep.subr.bf16.mxu0 0
        %1559 = vmatpush1.bf16.msra.mxu0 0
        %1560 = vmatprep.subr.bf16.mxu0 0
        %1561 = vmatpush1.bf16.msra.mxu0 0
        %1562 = vmatprep.subr.bf16.mxu0 0
        %1563 = vmatpush1.bf16.msra.mxu0 0
        %1564 = vmatprep.subr.bf16.mxu0 0
        %1565 = vmatpush1.bf16.msra.mxu0 0
        %1566 = vmatprep.subr.bf16.mxu0 0
        %1567 = vmatpush1.bf16.msra.mxu0 0
        %1568 = vmatprep.subr.bf16.mxu0 0
        %1569 = vmatpush1.bf16.msra.mxu0 0
        %1570 = vmatprep.mubr.bf16.mxu0 0
        %1571 = vmatmul.mubr.bf16.gmra.mrb[0].mxu0 %v1536
        %v1572 = vpop.f32.mrb[0].mxu0
        %v1573 = vadd.f32 0.0, %v1572
        %v1574 = vpop.f32.mrb[0].mxu0
        %v1575 = vpop.f32.mrb[0].mxu0
        %v1576 = vadd.f32 0.0, %v1575
        %v1577 = vpop.f32.mrb[0].mxu0
        %1578 = vdwg.mxu0
        %1579 = vst.msk [vmem:[%s372] sm:$0xff] %vm380, %v1573
        %1580 = vst.msk [vmem:[%s372 + $0x8] sm:$0xff] %vm380, %v1576
        %s1581 = sand.u32 %s202, 1
        %s1582 = scalar_lea.sflag [#allocation5], %s1581
        %s1583 = sand.u32 %s202, 1
        %s1584 = smul.addr %s1583, 16
        %s1585 = scalar_lea.vmem [#allocation12], %s1584
        // Predicated region
        $region69: #{tpu_custom_call.1} parent=47 // pred_check
          %p1586 = pneg %p212
        $region70: #{tpu_custom_call.1} parent=47 // pred_check_branch
          %1588 = sbr.rel (%p1586) target = $region72
        $region71: #{tpu_custom_call.1} parent=47 // pred_region
          %s1589 = smul.u32 2, %s31
          %s1591 = ssub.s32 256, 256
          %1592 = vsyncadd %s1582, %s1591
          %s1593 = smul.addr %s30, 2
          %s1594 = sadd.s32 %s1589, %s1593
          %s1595 = smul.addr %s1594, 128
          %s1596 = scalar_lea.hbm %s7, %s1595
          %s1597 = sshll.u32 %s1585, 4
          %s1598 = int_to_ptr.vmem [resolvable:$true] %s1597
          %1603 = dma.vmem_to_hbm [thread:$0]  %s1598, 256, %s1596, %s1582, 128, 128, 8
        $region72: #{tpu_custom_call.1} parent=47 // pred_fallthru
          _
      $region48: #{tpu_custom_call.1} parent=5 // pred_fallthru
        _
      %p1604 = scmp.le.s32.totalorder 2, %s21
      // Predicated region
      $region73: #{tpu_custom_call.1} parent=5 // pred_check
        %p1605 = pneg %p1604
      $region74: #{tpu_custom_call.1} parent=5 // pred_check_branch
        %1607 = sbr.rel (%p1605) target = $region76
      $region75: #{tpu_custom_call.1} parent=5 // pred_region
        %s1608 = ssub.s32 %s21, 2
        // Predicated region
        $region77: #{tpu_custom_call.1} parent=75 // pred_check
          %p1609 = pneg %p218
        $region78: #{tpu_custom_call.1} parent=75 // pred_check_branch
          %1611 = sbr.rel (%p1609) target = $region80
        $region79: #{tpu_custom_call.1} parent=75 // pred_region
          %s1612 = sand.u32 %s203, 1
          %s1613 = scalar_lea.sflag [#allocation5], %s1612
          %s1614 = sand.u32 %s203, 1
          %s1615 = smul.addr %s1614, 16
          %s1616 = scalar_lea.vmem [#allocation12], %s1615
          %1617 = dma.done %s1613, 256
        $region80: #{tpu_custom_call.1} parent=75 // pred_fallthru
          _
      $region76: #{tpu_custom_call.1} parent=5 // pred_fallthru
        _
    $region6: #{tpu_custom_call.1} parent=1 // loop_footer
      %s25 = sadd.s32 1, %s21
    $region7: #{tpu_custom_call.1} parent=1 // loop_footer_branch
      %20 = sbr.rel target = $region3
    $region8: #{tpu_custom_call.1} parent=1 // loop_exit
      _
    %1618 = vsyncpa [#allocation4], 1
    %s1619 = scalar_lea.sflag [#allocation4], 1
    %1620 = vsyncpa %s1619, 1
    %1621 = vsyncpa [#allocation7], 1
    %1622 = vsyncpa [#allocation10], 1
    %1623 = vsyncpa [#allocation5], 1
    %s1624 = scalar_lea.sflag [#allocation5], 1
    %1625 = vsyncpa %s1624, 1

// kernel: tpu_custom_call.1
$region0: #{tpu_custom_call.1}
  #allocation0 [shape = 'u32[]', space=smem, size = 0x4, offset = 0x4, fixed_abs, tag = 'smem constant byte address 0x4 - core index']
  #allocation1 [shape = 'u32[144,128]{1,0:T(1,128)}', space=vmem, size = 0x12000, scoped, tag = 'internal scratch']
  #allocation2 [shape = 'f32[16,32]{1,0:T(8,128)}', space=vmem, size = 0x2000, scoped, tag = 'scratch operand']
  %s0 = inlined_call_operand.hbm [shape: f32[2,16,32], index: 0, kind: input, shape index: {}]
  %s1 = inlined_call_operand.hbm [shape: bf16[32,32], index: 1, kind: input, shape index: {}]
  %s2 = inlined_call_operand.hbm [shape: bf16[32,32], index: 2, kind: input, shape index: {}]
  %s3 = inlined_call_operand.hbm [shape: bf16[32,32], index: 3, kind: input, shape index: {}]
  %s4 = inlined_call_operand.hbm [shape: bf16[32,32], index: 4, kind: input, shape index: {}]
  %s5 = inlined_call_operand.vmem [shape: f32[1,32], index: 5, kind: input, shape index: {}]
  %s6 = inlined_call_operand.vmem [shape: f32[1,32], index: 6, kind: input, shape index: {}]
  %s7 = inlined_call_operand.hbm [shape: f32[2,16,32], index: 7, kind: output, shape index: {}]
  %s8 = sld [smem:[#allocation0]]
  $region81: #{tpu_custom_call.1} parent=0
    _
  %s10 = ssub.s32 1, %s8
  %s11 = scalar_select 0, %s10, %s8
  $region1: #{tpu_custom_call.1} parent=0
    #allocation3 [shape = 'u8[16384]{0}', space=vmem, size = 0x4000, scoped, tag = 'input window, operand 0']
    #allocation4 [shape = 's32[2]{0}', space=sflag, size = 0x8, scoped, tag = 'scoped memory for tpu_custom_call.1']
    #allocation5 [shape = 's32[2]{0}', space=sflag, size = 0x8, scoped, tag = 'scoped memory for tpu_custom_call.1']
    #allocation6 [shape = 'u8[8192]{0}', space=vmem, size = 0x2000, scoped, tag = 'input window, operand 1, single buffered']
    #allocation7 [shape = 's32[1]{0}', space=sflag, size = 0x4, scoped, tag = 'scoped memory for tpu_custom_call.1']
    #allocation8 [shape = 'u8[8192]{0}', space=vmem, size = 0x2000, scoped, tag = 'input window, operand 2, single buffered']
    #allocation9 [shape = 'u8[8192]{0}', space=vmem, size = 0x2000, scoped, tag = 'input window, operand 3, single buffered']
    #allocation10 [shape = 's32[1]{0}', space=sflag, size = 0x4, scoped, tag = 'scoped memory for tpu_custom_call.1']
    #allocation11 [shape = 'u8[8192]{0}', space=vmem, size = 0x2000, scoped, tag = 'input window, operand 4, single buffered']
    #allocation12 [shape = 'u8[16384]{0}', space=vmem, size = 0x4000, scoped, tag = 'output window, operand 0']
    %12 = vsyncpa [#allocation4], 0
    %s13 = scalar_lea.sflag [#allocation4], 1
    %14 = vsyncpa %s13, 0
    %15 = vsyncpa [#allocation7], 0
    %16 = vsyncpa [#allocation10], 0
    %17 = vsyncpa [#allocation5], 0
    %s18 = scalar_lea.sflag [#allocation5], 1
    %19 = vsyncpa %s18, 0
    loop: start=0, step=1, limit=4
    $region2: #{tpu_custom_call.1} parent=1 // loop_pre_header
      _
    $region3: #{tpu_custom_call.1} parent=1 // loop_header
      %s21 = sphi 0, %s25
      %p22 = scmp.ge.s32.totalorder %s21, 4
      %s28 = sphi 0, %s40
      %s29 = sphi 0, %s36
      %s30 = sphi 0, %s28
      %s31 = sphi 0, %s29
      %s32 = sphi 0, %s30
      %s33 = sphi 0, %s31
      %s45 = sphi 0, %s47
      %s48 = sphi 0, %s45
      %s49 = sphi 0, %s48
      %s65 = sphi 0, %s49
      %s69 = sphi 0, %s69
      %s71 = sphi 0, %s69
      %s72 = sphi 0, %s71
      %s86 = sphi 0, %s72
      %s90 = sphi 0, %s90
      %s92 = sphi 0, %s90
      %s93 = sphi 0, %s92
      %s107 = sphi 0, %s93
      %s111 = sphi 0, %s111
      %s113 = sphi 0, %s111
      %s114 = sphi 0, %s113
      %s128 = sphi 0, %s114
      %s132 = sphi 0, %s132
      %s134 = sphi 0, %s132
      %s135 = sphi 0, %s134
      %s149 = sphi 0, %s135
      %s153 = sphi 0, %s153
      %s155 = sphi 0, %s153
      %s156 = sphi 0, %s155
      %s170 = sphi 0, %s156
      %s174 = sphi 0, %s174
      %s176 = sphi 0, %s174
      %s177 = sphi 0, %s176
      %s191 = sphi 0, %s177
      %s199 = sphi 0, %s201
      %s202 = sphi 0, %s199
      %s203 = sphi 0, %s202
      %s219 = sphi 0, %s203
    $region4: #{tpu_custom_call.1} parent=1 // loop_header_branch
      %24 = sbr.rel (%p22) target = $region8
    $region5: #{tpu_custom_call.1} parent=1 // loop_body
      %s26 = ssub.s32 %s21, 1
      %s27 = ssub.s32 %s21, 2
      %s34 = sadd.s32 1, %s29
      %p35 = scmp.ge.s32.totalorder %s34, 1
      %s36 = scalar_select %p35, 0, %s34
      %s37 = sadd.s32 1, %s28
      %s38 = scalar_select %p35, %s37, %s28
      %p39 = scmp.ge.s32.totalorder %s38, 2
      %s40 = scalar_select %p39, 0, %s38
      %s41 = ssub.s32 %s28, %s40
      %s42 = ssub.s32 %s29, %s36
      %s43 = sor.u32 %s41, %s42
      %p44 = scmp.eq.s32.totalorder %s43, 0
      %s46 = sadd.s32 %s45, 1
      %s47 = scalar_select %p44, %s45, %s46
      %p50 = pneg %p44
      %p51 = scmp.eq.s32.totalorder %s21, 1
      %p52 = por %p50, %p51
      %p53 = scmp.ne.s32.totalorder %s45, %s48
      %p54 = scmp.eq.s32.totalorder %s21, 0
      %p55 = por %p53, %p54
      %p56 = scmp.ne.s32.totalorder %s45, %s48
      %p57 = scmp.eq.s32.totalorder %s26, 1
      %p58 = por %p56, %p57
      %p59 = scmp.ne.s32.totalorder %s48, %s49
      %p60 = scmp.eq.s32.totalorder %s26, 0
      %p61 = por %p59, %p60
      %p62 = scmp.ne.s32.totalorder %s48, %s49
      %p63 = scmp.eq.s32.totalorder %s27, 1
      %p64 = por %p62, %p63
      %p66 = scmp.ne.s32.totalorder %s49, %s65
      %p67 = scmp.eq.s32.totalorder %s27, 0
      %p68 = por %p66, %p67
      %s70 = sadd.s32 %s69, 1
      %p73 = scmp.eq.s32.totalorder %s21, 1
      %p74 = scmp.ne.s32.totalorder %s69, %s71
      %p75 = scmp.eq.s32.totalorder %s21, 0
      %p76 = por %p74, %p75
      %p77 = scmp.ne.s32.totalorder %s69, %s71
      %p78 = scmp.eq.s32.totalorder %s26, 1
      %p79 = por %p77, %p78
      %p80 = scmp.ne.s32.totalorder %s71, %s72
      %p81 = scmp.eq.s32.totalorder %s26, 0
      %p82 = por %p80, %p81
      %p83 = scmp.ne.s32.totalorder %s71, %s72
      %p84 = scmp.eq.s32.totalorder %s27, 1
      %p85 = por %p83, %p84
      %p87 = scmp.ne.s32.totalorder %s72, %s86
      %p88 = scmp.eq.s32.totalorder %s27, 0
      %p89 = por %p87, %p88
      %s91 = sadd.s32 %s90, 1
      %p94 = scmp.eq.s32.totalorder %s21, 1
      %p95 = scmp.ne.s32.totalorder %s90, %s92
      %p96 = scmp.eq.s32.totalorder %s21, 0
      %p97 = por %p95, %p96
      %p98 = scmp.ne.s32.totalorder %s90, %s92
      %p99 = scmp.eq.s32.totalorder %s26, 1
      %p100 = por %p98, %p99
      %p101 = scmp.ne.s32.totalorder %s92, %s93
      %p102 = scmp.eq.s32.totalorder %s26, 0
      %p103 = por %p101, %p102
      %p104 = scmp.ne.s32.totalorder %s92, %s93
      %p105 = scmp.eq.s32.totalorder %s27, 1
      %p106 = por %p104, %p105
      %p108 = scmp.ne.s32.totalorder %s93, %s107
      %p109 = scmp.eq.s32.totalorder %s27, 0
      %p110 = por %p108, %p109
      %s112 = sadd.s32 %s111, 1
      %p115 = scmp.eq.s32.totalorder %s21, 1
      %p116 = scmp.ne.s32.totalorder %s111, %s113
      %p117 = scmp.eq.s32.totalorder %s21, 0
      %p118 = por %p116, %p117
      %p119 = scmp.ne.s32.totalorder %s111, %s113
      %p120 = scmp.eq.s32.totalorder %s26, 1
      %p121 = por %p119, %p120
      %p122 = scmp.ne.s32.totalorder %s113, %s114
      %p123 = scmp.eq.s32.totalorder %s26, 0
      %p124 = por %p122, %p123
      %p125 = scmp.ne.s32.totalorder %s113, %s114
      %p126 = scmp.eq.s32.totalorder %s27, 1
      %p127 = por %p125, %p126
      %p129 = scmp.ne.s32.totalorder %s114, %s128
      %p130 = scmp.eq.s32.totalorder %s27, 0
      %p131 = por %p129, %p130
      %s133 = sadd.s32 %s132, 1
      %p136 = scmp.eq.s32.totalorder %s21, 1
      %p137 = scmp.ne.s32.totalorder %s132, %s134
      %p138 = scmp.eq.s32.totalorder %s21, 0
      %p139 = por %p137, %p138
      %p140 = scmp.ne.s32.totalorder %s132, %s134
      %p141 = scmp.eq.s32.totalorder %s26, 1
      %p142 = por %p140, %p141
      %p143 = scmp.ne.s32.totalorder %s134, %s135
      %p144 = scmp.eq.s32.totalorder %s26, 0
      %p145 = por %p143, %p144
      %p146 = scmp.ne.s32.totalorder %s134, %s135
      %p147 = scmp.eq.s32.totalorder %s27, 1
      %p148 = por %p146, %p147
      %p150 = scmp.ne.s32.totalorder %s135, %s149
      %p151 = scmp.eq.s32.totalorder %s27, 0
      %p152 = por %p150, %p151
      %s154 = sadd.s32 %s153, 1
      %p157 = scmp.eq.s32.totalorder %s21, 1
      %p158 = scmp.ne.s32.totalorder %s153, %s155
      %p159 = scmp.eq.s32.totalorder %s21, 0
      %p160 = por %p158, %p159
      %p161 = scmp.ne.s32.totalorder %s153, %s155
      %p162 = scmp.eq.s32.totalorder %s26, 1
      %p163 = por %p161, %p162
      %p164 = scmp.ne.s32.totalorder %s155, %s156
      %p165 = scmp.eq.s32.totalorder %s26, 0
      %p166 = por %p164, %p165
      %p167 = scmp.ne.s32.totalorder %s155, %s156
      %p168 = scmp.eq.s32.totalorder %s27, 1
      %p169 = por %p167, %p168
      %p171 = scmp.ne.s32.totalorder %s156, %s170
      %p172 = scmp.eq.s32.totalorder %s27, 0
      %p173 = por %p171, %p172
      %s175 = sadd.s32 %s174, 1
      %p178 = scmp.eq.s32.totalorder %s21, 1
      %p179 = scmp.ne.s32.totalorder %s174, %s176
      %p180 = scmp.eq.s32.totalorder %s21, 0
      %p181 = por %p179, %p180
      %p182 = scmp.ne.s32.totalorder %s174, %s176
      %p183 = scmp.eq.s32.totalorder %s26, 1
      %p184 = por %p182, %p183
      %p185 = scmp.ne.s32.totalorder %s176, %s177
      %p186 = scmp.eq.s32.totalorder %s26, 0
      %p187 = por %p185, %p186
      %p188 = scmp.ne.s32.totalorder %s176, %s177
      %p189 = scmp.eq.s32.totalorder %s27, 1
      %p190 = por %p188, %p189
      %p192 = scmp.ne.s32.totalorder %s177, %s191
      %p193 = scmp.eq.s32.totalorder %s27, 0
      %p194 = por %p192, %p193
      %s195 = ssub.s32 %s28, %s40
      %s196 = ssub.s32 %s29, %s36
      %s197 = sor.u32 %s195, %s196
      %p198 = scmp.eq.s32.totalorder %s197, 0
      %s200 = sadd.s32 %s199, 1
      %s201 = scalar_select %p198, %s199, %s200
      %p204 = pneg %p198
      %p205 = scmp.eq.s32.totalorder %s21, 1
      %p206 = por %p204, %p205
      %p207 = scmp.ne.s32.totalorder %s199, %s202
      %p208 = scmp.eq.s32.totalorder %s21, 0
      %p209 = por %p207, %p208
      %p210 = scmp.ne.s32.totalorder %s199, %s202
      %p211 = scmp.eq.s32.totalorder %s26, 1
      %p212 = por %p210, %p211
      %p213 = scmp.ne.s32.totalorder %s202, %s203
      %p214 = scmp.eq.s32.totalorder %s26, 0
      %p215 = por %p213, %p214
      %p216 = scmp.ne.s32.totalorder %s202, %s203
      %p217 = scmp.eq.s32.totalorder %s27, 1
      %p218 = por %p216, %p217
      %p220 = scmp.ne.s32.totalorder %s203, %s219
      %p221 = scmp.eq.s32.totalorder %s27, 0
      %p222 = por %p220, %p221
      %p223 = scmp.le.s32.totalorder 1, %s21
      %p224 = scmp.lt.s32.totalorder %s21, 3
      %p225 = pnand %p223, %p224
      %p226 = pneg %p225
      // Predicated region
      $region9: #{tpu_custom_call.1} parent=5 // pred_check
        _
      $region10: #{tpu_custom_call.1} parent=5 // pred_check_branch
        %228 = sbr.rel (%p225) target = $region12
      $region11: #{tpu_custom_call.1} parent=5 // pred_region
        %s229 = ssub.s32 %s21, 1
        // Predicated region
        $region13: #{tpu_custom_call.1} parent=11 // pred_check
          %p230 = pneg %p82
        $region14: #{tpu_custom_call.1} parent=11 // pred_check_branch
          %232 = sbr.rel (%p230) target = $region16
        $region15: #{tpu_custom_call.1} parent=11 // pred_region
          %s234 = ssub.s32 256, 256
          %235 = vsyncadd [#allocation7], %s234
          %s236 = sshll.u32 [#allocation6], 4
          %s237 = int_to_ptr.vmem [resolvable:$true] %s236
          %242 = dma.hbm_to_vmem [thread:$0]  %s1, 256, %s237, [#allocation7], 64, 64, 4
        $region16: #{tpu_custom_call.1} parent=11 // pred_fallthru
          _
        // Predicated region
        $region17: #{tpu_custom_call.1} parent=11 // pred_check
          %p243 = pneg %p103
        $region18: #{tpu_custom_call.1} parent=11 // pred_check_branch
          %245 = sbr.rel (%p243) target = $region20
        $region19: #{tpu_custom_call.1} parent=11 // pred_region
          %s247 = ssub.s32 256, 256
          %248 = vsyncadd [#allocation7], %s247
          %s249 = sshll.u32 [#allocation8], 4
          %s250 = int_to_ptr.vmem [resolvable:$true] %s249
          %255 = dma.hbm_to_vmem [thread:$0]  %s2, 256, %s250, [#allocation7], 64, 64, 4
        $region20: #{tpu_custom_call.1} parent=11 // pred_fallthru
          _
        // Predicated region
        $region21: #{tpu_custom_call.1} parent=11 // pred_check
          %p256 = pneg %p124
        $region22: #{tpu_custom_call.1} parent=11 // pred_check_branch
          %258 = sbr.rel (%p256) target = $region24
        $region23: #{tpu_custom_call.1} parent=11 // pred_region
          %s260 = ssub.s32 256, 256
          %261 = vsyncadd [#allocation10], %s260
          %s262 = sshll.u32 [#allocation9], 4
          %s263 = int_to_ptr.vmem [resolvable:$true] %s262
          %268 = dma.hbm_to_vmem [thread:$0]  %s3, 256, %s263, [#allocation10], 64, 64, 4
        $region24: #{tpu_custom_call.1} parent=11 // pred_fallthru
          _
        // Predicated region
        $region25: #{tpu_custom_call.1} parent=11 // pred_check
          %p269 = pneg %p145
        $region26: #{tpu_custom_call.1} parent=11 // pred_check_branch
          %271 = sbr.rel (%p269) target = $region28
        $region27: #{tpu_custom_call.1} parent=11 // pred_region
          %s273 = ssub.s32 256, 256
          %274 = vsyncadd [#allocation10], %s273
          %s275 = sshll.u32 [#allocation11], 4
          %s276 = int_to_ptr.vmem [resolvable:$true] %s275
          %281 = dma.hbm_to_vmem [thread:$0]  %s4, 256, %s276, [#allocation10], 64, 64, 4
        $region28: #{tpu_custom_call.1} parent=11 // pred_fallthru
          _
        // Predicated region
        $region29: #{tpu_custom_call.1} parent=11 // pred_check
          %p282 = pneg %p166
        $region30: #{tpu_custom_call.1} parent=11 // pred_check_branch
          %284 = sbr.rel (%p282) target = $region32
        $region31: #{tpu_custom_call.1} parent=11 // pred_region
          _
        $region32: #{tpu_custom_call.1} parent=11 // pred_fallthru
          _
        // Predicated region
        $region33: #{tpu_custom_call.1} parent=11 // pred_check
          %p285 = pneg %p187
        $region34: #{tpu_custom_call.1} parent=11 // pred_check_branch
          %287 = sbr.rel (%p285) target = $region36
        $region35: #{tpu_custom_call.1} parent=11 // pred_region
          _
        $region36: #{tpu_custom_call.1} parent=11 // pred_fallthru
          _
      $region12: #{tpu_custom_call.1} parent=5 // pred_fallthru
        _
      %p288 = scmp.lt.s32.totalorder %s21, 2
      // Predicated region
      $region37: #{tpu_custom_call.1} parent=5 // pred_check
        %p289 = pneg %p288
      $region38: #{tpu_custom_call.1} parent=5 // pred_check_branch
        %291 = sbr.rel (%p289) target = $region40
      $region39: #{tpu_custom_call.1} parent=5 // pred_region
        // Predicated region
        $region41: #{tpu_custom_call.1} parent=39 // pred_check
          %p292 = pneg %p55
        $region42: #{tpu_custom_call.1} parent=39 // pred_check_branch
          %294 = sbr.rel (%p292) target = $region44
        $region43: #{tpu_custom_call.1} parent=39 // pred_region
          %s295 = sand.u32 %s45, 1
          %s296 = scalar_lea.sflag [#allocation4], %s295
          %s297 = sand.u32 %s45, 1
          %s298 = smul.addr %s297, 16
          %s299 = scalar_lea.vmem [#allocation3], %s298
          %s300 = smul.u32 2, %s29
          %s302 = ssub.s32 256, 256
          %303 = vsyncadd %s296, %s302
          %s304 = smul.addr %s28, 2
          %s305 = sadd.s32 %s300, %s304
          %s306 = smul.addr %s305, 128
          %s307 = scalar_lea.hbm %s0, %s306
          %s308 = sshll.u32 %s299, 4
          %s309 = int_to_ptr.vmem [resolvable:$true] %s308
          %314 = dma.hbm_to_vmem [thread:$0]  %s307, 256, %s309, %s296, 128, 128, 8
        $region44: #{tpu_custom_call.1} parent=39 // pred_fallthru
          _
      $region40: #{tpu_custom_call.1} parent=5 // pred_fallthru
        _
      %p315 = scmp.le.s32.totalorder 1, %s21
      %p316 = scmp.lt.s32.totalorder %s21, 3
      %p317 = pnand %p315, %p316
      %p318 = pneg %p317
      // Predicated region
      $region45: #{tpu_custom_call.1} parent=5 // pred_check
        _
      $region46: #{tpu_custom_call.1} parent=5 // pred_check_branch
        %320 = sbr.rel (%p317) target = $region48
      $region47: #{tpu_custom_call.1} parent=5 // pred_region
        %s321 = ssub.s32 %s21, 1
        %s322 = sand.u32 %s48, 1
        %s323 = scalar_lea.sflag [#allocation4], %s322
        %s324 = sand.u32 %s48, 1
        %s325 = smul.addr %s324, 16
        %s326 = scalar_lea.vmem [#allocation3], %s325
        // Predicated region
        $region49: #{tpu_custom_call.1} parent=47 // pred_check
          %p327 = pneg %p61
        $region50: #{tpu_custom_call.1} parent=47 // pred_check_branch
          %329 = sbr.rel (%p327) target = $region52
        $region51: #{tpu_custom_call.1} parent=47 // pred_region
          %330 = dma.done %s323, 256
        $region52: #{tpu_custom_call.1} parent=47 // pred_fallthru
          _
        // Predicated region
        $region53: #{tpu_custom_call.1} parent=47 // pred_check
          %p331 = pneg %p82
        $region54: #{tpu_custom_call.1} parent=47 // pred_check_branch
          %333 = sbr.rel (%p331) target = $region56
        $region55: #{tpu_custom_call.1} parent=47 // pred_region
          %334 = dma.done [#allocation7], 256
        $region56: #{tpu_custom_call.1} parent=47 // pred_fallthru
          _
        // Predicated region
        $region57: #{tpu_custom_call.1} parent=47 // pred_check
          %p335 = pneg %p103
        $region58: #{tpu_custom_call.1} parent=47 // pred_check_branch
          %337 = sbr.rel (%p335) target = $region60
        $region59: #{tpu_custom_call.1} parent=47 // pred_region
          %338 = dma.done [#allocation7], 256
        $region60: #{tpu_custom_call.1} parent=47 // pred_fallthru
          _
        // Predicated region
        $region61: #{tpu_custom_call.1} parent=47 // pred_check
          %p339 = pneg %p124
        $region62: #{tpu_custom_call.1} parent=47 // pred_check_branch
          %341 = sbr.rel (%p339) target = $region64
        $region63: #{tpu_custom_call.1} parent=47 // pred_region
          %342 = dma.done [#allocation10], 256
        $region64: #{tpu_custom_call.1} parent=47 // pred_fallthru
          _
        // Predicated region
        $region65: #{tpu_custom_call.1} parent=47 // pred_check
          %p343 = pneg %p145
        $region66: #{tpu_custom_call.1} parent=47 // pred_check_branch
          %345 = sbr.rel (%p343) target = $region68
        $region67: #{tpu_custom_call.1} parent=47 // pred_region
          %346 = dma.done [#allocation10], 256
        $region68: #{tpu_custom_call.1} parent=47 // pred_fallthru
          _
        %s347 = sand.u32 %s48, 1
        %s348 = scalar_lea.sflag [#allocation4], %s347
        %s349 = sand.u32 %s48, 1
        %s350 = smul.addr %s349, 16
        %s351 = scalar_lea.vmem [#allocation3], %s350
        %p352 = pneg %p61
        %p353 = pneg %p58
        %p354 = pneg %p82
        %p355 = pneg %p79
        %p356 = pneg %p103
        %p357 = pneg %p100
        %p358 = pneg %p124
        %p359 = pneg %p121
        %p360 = pneg %p145
        %p361 = pneg %p142
        %p362 = pneg %p166
        %p363 = pneg %p163
        %p364 = pneg %p187
        %p365 = pneg %p184
        %p366 = pneg %p215
        %p367 = pneg %p212
        %s368 = sand.u32 %s202, 1
        %s369 = scalar_lea.sflag [#allocation5], %s368
        %s370 = sand.u32 %s202, 1
        %s371 = smul.addr %s370, 16
        %s372 = scalar_lea.vmem [#allocation12], %s371
        %s373 = smul.u32 2, %s31
        %s374 = smul.u32 2, %s31
        %v376 = vld [vmem:[%s326] sm:$0xff]
        %v377 = vld [vmem:[%s326 + $0x8] sm:$0xff]
        %v378 = vld [vmem:[%s5] sm:$0x1]
        %v379 = vld [vmem:[%s6] sm:$0x1]
        %vm380 = vcmask 261120
        %v381 = vsel %vm380, %v376, 0.0
        %382 = vadd.xlane.f32.xlu0 %v381
        %v383 = vpop.xlane.xlu0 %382
        %v384 = vsel %vm380, %v377, 0.0
        %385 = vadd.xlane.f32.xlu0 %v384
        %v386 = vpop.xlane.xlu0 %385
        %v387 = vrcp.pop 32.0
        %v388 = vmul.f32 %v383, %v387
        %v389 = vmul.f32 %v386, %v387
        %v390 = vsub.f32 %v376, %v388
        %v391 = vsub.f32 %v377, %v389
        %v392 = vmul.f32 %v390, %v390
        %v393 = vmul.f32 %v391, %v391
        %v394 = vsel %vm380, %v392, 0.0
        %395 = vadd.xlane.f32.xlu0 %v394
        %v396 = vpop.xlane.xlu0 %395
        %v397 = vsel %vm380, %v393, 0.0
        %398 = vadd.xlane.f32.xlu0 %v397
        %v399 = vpop.xlane.xlu0 %398
        %v400 = vmul.f32 %v396, %v387
        %v401 = vmul.f32 %v399, %v387
        %v402 = vadd.f32 %v400, 1e-05
        %v403 = vadd.f32 %v401, 1e-05
        %v404 = vrsqrt.pop %v402
        %v405 = vrsqrt.pop %v403
        %v406 = vmul.f32 %v390, %v404
        %v407 = vmul.f32 %v391, %v405
        %v409 = vlaneseq
        %v410 = vshrl.u32 %v409, 7
        %v411 = vsub.s32 0, %v410
        %v412 = vrot.slane %v378, %v411
        %v414 = vmul.f32 %v406, %v412
        %v415 = vmul.f32 %v407, %v412
        %v417 = vlaneseq
        %v418 = vshrl.u32 %v417, 7
        %v419 = vsub.s32 0, %v418
        %v420 = vrot.slane %v379, %v419
        %v422 = vadd.f32 %v414, %v420
        %v423 = vadd.f32 %v415, %v420
        %v424 = vpack.c.bf16 %v423, %v422
        %v425 = vld [vmem:[#allocation6] sm:$0xf]
        %v426 = vld [vmem:[#allocation6 + $0x4] sm:$0xf]
        %v427 = vld [vmem:[#allocation6 + $0x8] sm:$0xf]
        %v428 = vld [vmem:[#allocation6 + $0xc] sm:$0xf]
        %v433 = vunpack.c.l.b16 %v425
        %v434 = vunpack.c.l.b16 %v426
        %v435 = vunpack.c.l.b16 %v427
        %v436 = vunpack.c.l.b16 %v428
        %v437 = vpack.c.b16 %v434, %v433
        %v438 = vpack.c.b16 %v436, %v435
        %v442 = vsel %vm380, %v424, 0
        %444 = vmatprep.subr.bf16.mxu0 0
        %445 = vmatpush1.bf16.msra.mxu0 %v437
        %446 = vmatprep.subr.bf16.mxu0 0
        %447 = vmatpush1.bf16.msra.mxu0 %v438
        %448 = vmatprep.subr.bf16.mxu0 0
        %449 = vmatpush1.bf16.msra.mxu0 0
        %450 = vmatprep.subr.bf16.mxu0 0
        %451 = vmatpush1.bf16.msra.mxu0 0
        %452 = vmatprep.subr.bf16.mxu0 0
        %453 = vmatpush1.bf16.msra.mxu0 0
        %454 = vmatprep.subr.bf16.mxu0 0
        %455 = vmatpush1.bf16.msra.mxu0 0
        %456 = vmatprep.subr.bf16.mxu0 0
        %457 = vmatpush1.bf16.msra.mxu0 0
        %458 = vmatprep.subr.bf16.mxu0 0
        %459 = vmatpush1.bf16.msra.mxu0 0
        %460 = vmatprep.subr.bf16.mxu0 0
        %461 = vmatpush1.bf16.msra.mxu0 0
        %462 = vmatprep.subr.bf16.mxu0 0
        %463 = vmatpush1.bf16.msra.mxu0 0
        %464 = vmatprep.subr.bf16.mxu0 0
        %465 = vmatpush1.bf16.msra.mxu0 0
        %466 = vmatprep.subr.bf16.mxu0 0
        %467 = vmatpush1.bf16.msra.mxu0 0
        %468 = vmatprep.subr.bf16.mxu0 0
        %469 = vmatpush1.bf16.msra.mxu0 0
        %470 = vmatprep.subr.bf16.mxu0 0
        %471 = vmatpush1.bf16.msra.mxu0 0
        %472 = vmatprep.subr.bf16.mxu0 0
        %473 = vmatpush1.bf16.msra.mxu0 0
        %474 = vmatprep.subr.bf16.mxu0 0
        %475 = vmatpush1.bf16.msra.mxu0 0
        %476 = vmatprep.mubr.bf16.mxu0 0
        %477 = vmatmul.mubr.bf16.gmra.mrb[0].mxu0 %v442
        %v478 = vpop.f32.mrb[0].mxu0
        %v479 = vadd.f32 0.0, %v478
        %v480 = vpop.f32.mrb[0].mxu0
        %v481 = vpop.f32.mrb[0].mxu0
        %v482 = vadd.f32 0.0, %v481
        %v483 = vpop.f32.mrb[0].mxu0
        %484 = vdwg.mxu0
        %v485 = vld [vmem:[#allocation8] sm:$0xf]
        %v486 = vld [vmem:[#allocation8 + $0x4] sm:$0xf]
        %v487 = vld [vmem:[#allocation8 + $0x8] sm:$0xf]
        %v488 = vld [vmem:[#allocation8 + $0xc] sm:$0xf]
        %v493 = vunpack.c.l.b16 %v485
        %v494 = vunpack.c.l.b16 %v486
        %v495 = vunpack.c.l.b16 %v487
        %v496 = vunpack.c.l.b16 %v488
        %v497 = vpack.c.b16 %v494, %v493
        %v498 = vpack.c.b16 %v496, %v495
        %501 = vmatprep.subr.bf16.mxu0 0
        %502 = vmatpush1.bf16.msra.mxu0 %v497
        %503 = vmatprep.subr.bf16.mxu0 0
        %504 = vmatpush1.bf16.msra.mxu0 %v498
        %505 = vmatprep.subr.bf16.mxu0 0
        %506 = vmatpush1.bf16.msra.mxu0 0
        %507 = vmatprep.subr.bf16.mxu0 0
        %508 = vmatpush1.bf16.msra.mxu0 0
        %509 = vmatprep.subr.bf16.mxu0 0
        %510 = vmatpush1.bf16.msra.mxu0 0
        %511 = vmatprep.subr.bf16.mxu0 0
        %512 = vmatpush1.bf16.msra.mxu0 0
        %513 = vmatprep.subr.bf16.mxu0 0
        %514 = vmatpush1.bf16.msra.mxu0 0
        %515 = vmatprep.subr.bf16.mxu0 0
        %516 = vmatpush1.bf16.msra.mxu0 0
        %517 = vmatprep.subr.bf16.mxu0 0
        %518 = vmatpush1.bf16.msra.mxu0 0
        %519 = vmatprep.subr.bf16.mxu0 0
        %520 = vmatpush1.bf16.msra.mxu0 0
        %521 = vmatprep.subr.bf16.mxu0 0
        %522 = vmatpush1.bf16.msra.mxu0 0
        %523 = vmatprep.subr.bf16.mxu0 0
        %524 = vmatpush1.bf16.msra.mxu0 0
        %525 = vmatprep.subr.bf16.mxu0 0
        %526 = vmatpush1.bf16.msra.mxu0 0
        %527 = vmatprep.subr.bf16.mxu0 0
        %528 = vmatpush1.bf16.msra.mxu0 0
        %529 = vmatprep.subr.bf16.mxu0 0
        %530 = vmatpush1.bf16.msra.mxu0 0
        %531 = vmatprep.subr.bf16.mxu0 0
        %532 = vmatpush1.bf16.msra.mxu0 0
        %533 = vmatprep.mubr.bf16.mxu0 0
        %534 = vmatmul.mubr.bf16.gmra.mrb[0].mxu0 %v442
        %v535 = vpop.f32.mrb[0].mxu0
        %v536 = vadd.f32 0.0, %v535
        %v537 = vpop.f32.mrb[0].mxu0
        %v538 = vpop.f32.mrb[0].mxu0
        %v539 = vadd.f32 0.0, %v538
        %v540 = vpop.f32.mrb[0].mxu0
        %541 = vdwg.mxu0
        %v542 = vld [vmem:[#allocation9] sm:$0xf]
        %v543 = vld [vmem:[#allocation9 + $0x4] sm:$0xf]
        %v544 = vld [vmem:[#allocation9 + $0x8] sm:$0xf]
        %v545 = vld [vmem:[#allocation9 + $0xc] sm:$0xf]
        %v550 = vunpack.c.l.b16 %v542
        %v551 = vunpack.c.l.b16 %v543
        %v552 = vunpack.c.l.b16 %v544
        %v553 = vunpack.c.l.b16 %v545
        %v554 = vpack.c.b16 %v551, %v550
        %v555 = vpack.c.b16 %v553, %v552
        %558 = vmatprep.subr.bf16.mxu0 0
        %559 = vmatpush1.bf16.msra.mxu0 %v554
        %560 = vmatprep.subr.bf16.mxu0 0
        %561 = vmatpush1.bf16.msra.mxu0 %v555
        %562 = vmatprep.subr.bf16.mxu0 0
        %563 = vmatpush1.bf16.msra.mxu0 0
        %564 = vmatprep.subr.bf16.mxu0 0
        %565 = vmatpush1.bf16.msra.mxu0 0
        %566 = vmatprep.subr.bf16.mxu0 0
        %567 = vmatpush1.bf16.msra.mxu0 0
        %568 = vmatprep.subr.bf16.mxu0 0
        %569 = vmatpush1.bf16.msra.mxu0 0
        %570 = vmatprep.subr.bf16.mxu0 0
        %571 = vmatpush1.bf16.msra.mxu0 0
        %572 = vmatprep.subr.bf16.mxu0 0
        %573 = vmatpush1.bf16.msra.mxu0 0
        %574 = vmatprep.subr.bf16.mxu0 0
        %575 = vmatpush1.bf16.msra.mxu0 0
        %576 = vmatprep.subr.bf16.mxu0 0
        %577 = vmatpush1.bf16.msra.mxu0 0
        %578 = vmatprep.subr.bf16.mxu0 0
        %579 = vmatpush1.bf16.msra.mxu0 0
        %580 = vmatprep.subr.bf16.mxu0 0
        %581 = vmatpush1.bf16.msra.mxu0 0
        %582 = vmatprep.subr.bf16.mxu0 0
        %583 = vmatpush1.bf16.msra.mxu0 0
        %584 = vmatprep.subr.bf16.mxu0 0
        %585 = vmatpush1.bf16.msra.mxu0 0
        %586 = vmatprep.subr.bf16.mxu0 0
        %587 = vmatpush1.bf16.msra.mxu0 0
        %588 = vmatprep.subr.bf16.mxu0 0
        %589 = vmatpush1.bf16.msra.mxu0 0
        %590 = vmatprep.mubr.bf16.mxu0 0
        %591 = vmatmul.mubr.bf16.gmra.mrb[0].mxu0 %v442
        %v592 = vpop.f32.mrb[0].mxu0
        %v593 = vadd.f32 0.0, %v592
        %v594 = vpop.f32.mrb[0].mxu0
        %v595 = vpop.f32.mrb[0].mxu0
        %v596 = vadd.f32 0.0, %v595
        %v597 = vpop.f32.mrb[0].mxu0
        %598 = vdwg.mxu0
        %v599 = vpack.c.bf16 %v479, %v479
        %v600 = vpack.c.bf16 %v482, %v482
        %v601 = vpack.c.bf16 %v536, %v536
        %v602 = vpack.c.bf16 %v539, %v539
        %v603 = vpack.c.bf16 %v593, %v593
        %v604 = vpack.c.bf16 %v596, %v596
        %vm605 = vcmask 64512
        %v607 = vsel %vm605, %v599, 0
        %v610 = vsel %vm605, %v601, 0
        %612 = vmatprep.subr.bf16.mxu0 0
        %613 = vmatpush1.bf16.xpose.msra.mxu0 %v610
        %614 = vmatprep.subr.bf16.mxu0 0
        %615 = vmatpush1.bf16.xpose.msra.mxu0 0
        %616 = vmatprep.subr.bf16.mxu0 0
        %617 = vmatpush1.bf16.xpose.msra.mxu0 0
        %618 = vmatprep.subr.bf16.mxu0 0
        %619 = vmatpush1.bf16.xpose.msra.mxu0 0
        %620 = vmatprep.subr.bf16.mxu0 0
        %621 = vmatpush1.bf16.xpose.msra.mxu0 0
        %622 = vmatprep.subr.bf16.mxu0 0
        %623 = vmatpush1.bf16.xpose.msra.mxu0 0
        %624 = vmatprep.subr.bf16.mxu0 0
        %625 = vmatpush1.bf16.xpose.msra.mxu0 0
        %626 = vmatprep.subr.bf16.mxu0 0
        %627 = vmatpush1.bf16.xpose.msra.mxu0 0
        %628 = vmatprep.subr.bf16.mxu0 0
        %629 = vmatpush1.bf16.xpose.msra.mxu0 0
        %630 = vmatprep.subr.bf16.mxu0 0
        %631 = vmatpush1.bf16.xpose.msra.mxu0 0
        %632 = vmatprep.subr.bf16.mxu0 0
        %633 = vmatpush1.bf16.xpose.msra.mxu0 0
        %634 = vmatprep.subr.bf16.mxu0 0
        %635 = vmatpush1.bf16.xpose.msra.mxu0 0
        %636 = vmatprep.subr.bf16.mxu0 0
        %637 = vmatpush1.bf16.xpose.msra.mxu0 0
        %638 = vmatprep.subr.bf16.mxu0 0
        %639 = vmatpush1.bf16.xpose.msra.mxu0 0
        %640 = vmatprep.subr.bf16.mxu0 0
        %641 = vmatpush1.bf16.xpose.msra.mxu0 0
        %642 = vmatprep.subr.bf16.mxu0 0
        %643 = vmatpush1.bf16.xpose.msra.mxu0 0
        %644 = vmatprep.mubr.bf16.mxu0 0
        %645 = vmatmul.mubr.bf16.gmra.mrb[0].mxu0 %v607
        %v646 = vpop.f32.mrb[0].mxu0
        %v647 = vadd.f32 0.0, %v646
        %v648 = vpop.f32.mrb[0].mxu0
        %v649 = vpop.f32.mrb[0].mxu0
        %v650 = vpop.f32.mrb[0].mxu0
        %651 = vdwg.mxu0
        %v653 = vsel %vm605, %v600, 0
        %v656 = vsel %vm605, %v602, 0
        %658 = vmatprep.subr.bf16.mxu0 0
        %659 = vmatpush1.bf16.xpose.msra.mxu0 %v656
        %660 = vmatprep.subr.bf16.mxu0 0
        %661 = vmatpush1.bf16.xpose.msra.mxu0 0
        %662 = vmatprep.subr.bf16.mxu0 0
        %663 = vmatpush1.bf16.xpose.msra.mxu0 0
        %664 = vmatprep.subr.bf16.mxu0 0
        %665 = vmatpush1.bf16.xpose.msra.mxu0 0
        %666 = vmatprep.subr.bf16.mxu0 0
        %667 = vmatpush1.bf16.xpose.msra.mxu0 0
        %668 = vmatprep.subr.bf16.mxu0 0
        %669 = vmatpush1.bf16.xpose.msra.mxu0 0
        %670 = vmatprep.subr.bf16.mxu0 0
        %671 = vmatpush1.bf16.xpose.msra.mxu0 0
        %672 = vmatprep.subr.bf16.mxu0 0
        %673 = vmatpush1.bf16.xpose.msra.mxu0 0
        %674 = vmatprep.subr.bf16.mxu0 0
        %675 = vmatpush1.bf16.xpose.msra.mxu0 0
        %676 = vmatprep.subr.bf16.mxu0 0
        %677 = vmatpush1.bf16.xpose.msra.mxu0 0
        %678 = vmatprep.subr.bf16.mxu0 0
        %679 = vmatpush1.bf16.xpose.msra.mxu0 0
        %680 = vmatprep.subr.bf16.mxu0 0
        %681 = vmatpush1.bf16.xpose.msra.mxu0 0
        %682 = vmatprep.subr.bf16.mxu0 0
        %683 = vmatpush1.bf16.xpose.msra.mxu0 0
        %684 = vmatprep.subr.bf16.mxu0 0
        %685 = vmatpush1.bf16.xpose.msra.mxu0 0
        %686 = vmatprep.subr.bf16.mxu0 0
        %687 = vmatpush1.bf16.xpose.msra.mxu0 0
        %688 = vmatprep.subr.bf16.mxu0 0
        %689 = vmatpush1.bf16.xpose.msra.mxu0 0
        %690 = vmatprep.mubr.bf16.mxu0 0
        %691 = vmatmul.mubr.bf16.gmra.mrb[0].mxu0 %v653
        %v692 = vpop.f32.mrb[0].mxu0
        %v693 = vadd.f32 0.0, %v692
        %v694 = vpop.f32.mrb[0].mxu0
        %v695 = vpop.f32.mrb[0].mxu0
        %v696 = vpop.f32.mrb[0].mxu0
        %697 = vdwg.mxu0
        %v698 = vsel %vm605, %v647, -inf
        %699 = vmax.xlane.f32.xlu0 %v698
        %v700 = vpop.xlane.xlu0 %699
        %v701 = vsel %vm605, %v693, -inf
        %702 = vmax.xlane.f32.xlu0 %v701
        %v703 = vpop.xlane.xlu0 %702
        %v704 = vsub.f32 %v647, %v700
        %v705 = vsub.f32 %v693, %v703
        %v706 = vmul.f32 %v704, 1.442695
        %v707 = vpow.pop %v706
        %v708 = vmul.f32 %v705, 1.442695
        %v709 = vpow.pop %v708
        %v710 = vsel %vm605, %v707, 0.0
        %711 = vadd.xlane.f32.xlu0 %v710
        %v712 = vpop.xlane.xlu0 %711
        %v713 = vsel %vm605, %v709, 0.0
        %714 = vadd.xlane.f32.xlu0 %v713
        %v715 = vpop.xlane.xlu0 %714
        %v716 = vrcp.pop %v712
        %v717 = vrcp.pop %v715
        %v718 = vmul.f32 %v707, %v716
        %v719 = vmul.f32 %v709, %v717
        %v720 = vpack.c.bf16 %v718, %v718
        %v721 = vpack.c.bf16 %v719, %v719
        %v723 = vsel %vm605, %v720, 0
        %vm725 = vcmask 1043456
        %v727 = vsel %vm725, %v603, 0
        %729 = vmatprep.subr.bf16.mxu0 0
        %730 = vmatpush1.bf16.msra.mxu0 %v727
        %731 = vmatprep.subr.bf16.mxu0 0
        %732 = vmatpush1.bf16.msra.mxu0 0
        %733 = vmatprep.subr.bf16.mxu0 0
        %734 = vmatpush1.bf16.msra.mxu0 0
        %735 = vmatprep.subr.bf16.mxu0 0
        %736 = vmatpush1.bf16.msra.mxu0 0
        %737 = vmatprep.subr.bf16.mxu0 0
        %738 = vmatpush1.bf16.msra.mxu0 0
        %739 = vmatprep.subr.bf16.mxu0 0
        %740 = vmatpush1.bf16.msra.mxu0 0
        %741 = vmatprep.subr.bf16.mxu0 0
        %742 = vmatpush1.bf16.msra.mxu0 0
        %743 = vmatprep.subr.bf16.mxu0 0
        %744 = vmatpush1.bf16.msra.mxu0 0
        %745 = vmatprep.subr.bf16.mxu0 0
        %746 = vmatpush1.bf16.msra.mxu0 0
        %747 = vmatprep.subr.bf16.mxu0 0
        %748 = vmatpush1.bf16.msra.mxu0 0
        %749 = vmatprep.subr.bf16.mxu0 0
        %750 = vmatpush1.bf16.msra.mxu0 0
        %751 = vmatprep.subr.bf16.mxu0 0
        %752 = vmatpush1.bf16.msra.mxu0 0
        %753 = vmatprep.subr.bf16.mxu0 0
        %754 = vmatpush1.bf16.msra.mxu0 0
        %755 = vmatprep.subr.bf16.mxu0 0
        %756 = vmatpush1.bf16.msra.mxu0 0
        %757 = vmatprep.subr.bf16.mxu0 0
        %758 = vmatpush1.bf16.msra.mxu0 0
        %759 = vmatprep.subr.bf16.mxu0 0
        %760 = vmatpush1.bf16.msra.mxu0 0
        %761 = vmatprep.mubr.bf16.mxu0 0
        %762 = vmatmul.mubr.bf16.gmra.mrb[0].mxu0 %v723
        %v763 = vpop.f32.mrb[0].mxu0
        %v764 = vadd.f32 0.0, %v763
        %v765 = vpop.f32.mrb[0].mxu0
        %v766 = vpop.f32.mrb[0].mxu0
        %v767 = vpop.f32.mrb[0].mxu0
        %768 = vdwg.mxu0
        %v770 = vsel %vm605, %v721, 0
        %v773 = vsel %vm725, %v604, 0
        %775 = vmatprep.subr.bf16.mxu0 0
        %776 = vmatpush1.bf16.msra.mxu0 %v773
        %777 = vmatprep.subr.bf16.mxu0 0
        %778 = vmatpush1.bf16.msra.mxu0 0
        %779 = vmatprep.subr.bf16.mxu0 0
        %780 = vmatpush1.bf16.msra.mxu0 0
        %781 = vmatprep.subr.bf16.mxu0 0
        %782 = vmatpush1.bf16.msra.mxu0 0
        %783 = vmatprep.subr.bf16.mxu0 0
        %784 = vmatpush1.bf16.msra.mxu0 0
        %785 = vmatprep.subr.bf16.mxu0 0
        %786 = vmatpush1.bf16.msra.mxu0 0
        %787 = vmatprep.subr.bf16.mxu0 0
        %788 = vmatpush1.bf16.msra.mxu0 0
        %789 = vmatprep.subr.bf16.mxu0 0
        %790 = vmatpush1.bf16.msra.mxu0 0
        %791 = vmatprep.subr.bf16.mxu0 0
        %792 = vmatpush1.bf16.msra.mxu0 0
        %793 = vmatprep.subr.bf16.mxu0 0
        %794 = vmatpush1.bf16.msra.mxu0 0
        %795 = vmatprep.subr.bf16.mxu0 0
        %796 = vmatpush1.bf16.msra.mxu0 0
        %797 = vmatprep.subr.bf16.mxu0 0
        %798 = vmatpush1.bf16.msra.mxu0 0
        %799 = vmatprep.subr.bf16.mxu0 0
        %800 = vmatpush1.bf16.msra.mxu0 0
        %801 = vmatprep.subr.bf16.mxu0 0
        %802 = vmatpush1.bf16.msra.mxu0 0
        %803 = vmatprep.subr.bf16.mxu0 0
        %804 = vmatpush1.bf16.msra.mxu0 0
        %805 = vmatprep.subr.bf16.mxu0 0
        %806 = vmatpush1.bf16.msra.mxu0 0
        %807 = vmatprep.mubr.bf16.mxu0 0
        %808 = vmatmul.mubr.bf16.gmra.mrb[0].mxu0 %v770
        %v809 = vpop.f32.mrb[0].mxu0
        %v810 = vadd.f32 0.0, %v809
        %v811 = vpop.f32.mrb[0].mxu0
        %v812 = vpop.f32.mrb[0].mxu0
        %v813 = vpop.f32.mrb[0].mxu0
        %814 = vdwg.mxu0
        %815 = vst.msk [vmem:[#allocation2] sm:$0xff] %vm605, %v764
        %816 = vst.msk [vmem:[#allocation2 + $0x8] sm:$0xff] %vm605, %v810
        %818 = vrot.lane.b32.xlu0 %v599, 120
        %v819 = vpop.permute.xlu0 %818
        %821 = vrot.lane.b32.xlu0 %v601, 120
        %v822 = vpop.permute.xlu0 %821
        %v824 = vsel %vm605, %v819, 0
        %v827 = vsel %vm605, %v822, 0
        %829 = vmatprep.subr.bf16.mxu0 0
        %830 = vmatpush1.bf16.xpose.msra.mxu0 %v827
        %831 = vmatprep.subr.bf16.mxu0 0
        %832 = vmatpush1.bf16.xpose.msra.mxu0 0
        %833 = vmatprep.subr.bf16.mxu0 0
        %834 = vmatpush1.bf16.xpose.msra.mxu0 0
        %835 = vmatprep.subr.bf16.mxu0 0
        %836 = vmatpush1.bf16.xpose.msra.mxu0 0
        %837 = vmatprep.subr.bf16.mxu0 0
        %838 = vmatpush1.bf16.xpose.msra.mxu0 0
        %839 = vmatprep.subr.bf16.mxu0 0
        %840 = vmatpush1.bf16.xpose.msra.mxu0 0
        %841 = vmatprep.subr.bf16.mxu0 0
        %842 = vmatpush1.bf16.xpose.msra.mxu0 0
        %843 = vmatprep.subr.bf16.mxu0 0
        %844 = vmatpush1.bf16.xpose.msra.mxu0 0
        %845 = vmatprep.subr.bf16.mxu0 0
        %846 = vmatpush1.bf16.xpose.msra.mxu0 0
        %847 = vmatprep.subr.bf16.mxu0 0
        %848 = vmatpush1.bf16.xpose.msra.mxu0 0
        %849 = vmatprep.subr.bf16.mxu0 0
        %850 = vmatpush1.bf16.xpose.msra.mxu0 0
        %851 = vmatprep.subr.bf16.mxu0 0
        %852 = vmatpush1.bf16.xpose.msra.mxu0 0
        %853 = vmatprep.subr.bf16.mxu0 0
        %854 = vmatpush1.bf16.xpose.msra.mxu0 0
        %855 = vmatprep.subr.bf16.mxu0 0
        %856 = vmatpush1.bf16.xpose.msra.mxu0 0
        %857 = vmatprep.subr.bf16.mxu0 0
        %858 = vmatpush1.bf16.xpose.msra.mxu0 0
        %859 = vmatprep.subr.bf16.mxu0 0
        %860 = vmatpush1.bf16.xpose.msra.mxu0 0
        %861 = vmatprep.mubr.bf16.mxu0 0
        %862 = vmatmul.mubr.bf16.gmra.mrb[0].mxu0 %v824
        %v863 = vpop.f32.mrb[0].mxu0
        %v864 = vadd.f32 0.0, %v863
        %v865 = vpop.f32.mrb[0].mxu0
        %v866 = vpop.f32.mrb[0].mxu0
        %v867 = vpop.f32.mrb[0].mxu0
        %868 = vdwg.mxu0
        %870 = vrot.lane.b32.xlu0 %v600, 120
        %v871 = vpop.permute.xlu0 %870
        %873 = vrot.lane.b32.xlu0 %v602, 120
        %v874 = vpop.permute.xlu0 %873
        %v876 = vsel %vm605, %v871, 0
        %v879 = vsel %vm605, %v874, 0
        %881 = vmatprep.subr.bf16.mxu0 0
        %882 = vmatpush1.bf16.xpose.msra.mxu0 %v879
        %883 = vmatprep.subr.bf16.mxu0 0
        %884 = vmatpush1.bf16.xpose.msra.mxu0 0
        %885 = vmatprep.subr.bf16.mxu0 0
        %886 = vmatpush1.bf16.xpose.msra.mxu0 0
        %887 = vmatprep.subr.bf16.mxu0 0
        %888 = vmatpush1.bf16.xpose.msra.mxu0 0
        %889 = vmatprep.subr.bf16.mxu0 0
        %890 = vmatpush1.bf16.xpose.msra.mxu0 0
        %891 = vmatprep.subr.bf16.mxu0 0
        %892 = vmatpush1.bf16.xpose.msra.mxu0 0
        %893 = vmatprep.subr.bf16.mxu0 0
        %894 = vmatpush1.bf16.xpose.msra.mxu0 0
        %895 = vmatprep.subr.bf16.mxu0 0
        %896 = vmatpush1.bf16.xpose.msra.mxu0 0
        %897 = vmatprep.subr.bf16.mxu0 0
        %898 = vmatpush1.bf16.xpose.msra.mxu0 0
        %899 = vmatprep.subr.bf16.mxu0 0
        %900 = vmatpush1.bf16.xpose.msra.mxu0 0
        %901 = vmatprep.subr.bf16.mxu0 0
        %902 = vmatpush1.bf16.xpose.msra.mxu0 0
        %903 = vmatprep.subr.bf16.mxu0 0
        %904 = vmatpush1.bf16.xpose.msra.mxu0 0
        %905 = vmatprep.subr.bf16.mxu0 0
        %906 = vmatpush1.bf16.xpose.msra.mxu0 0
        %907 = vmatprep.subr.bf16.mxu0 0
        %908 = vmatpush1.bf16.xpose.msra.mxu0 0
        %909 = vmatprep.subr.bf16.mxu0 0
        %910 = vmatpush1.bf16.xpose.msra.mxu0 0
        %911 = vmatprep.subr.bf16.mxu0 0
        %912 = vmatpush1.bf16.xpose.msra.mxu0 0
        %913 = vmatprep.mubr.bf16.mxu0 0
        %914 = vmatmul.mubr.bf16.gmra.mrb[0].mxu0 %v876
        %v915 = vpop.f32.mrb[0].mxu0
        %v916 = vadd.f32 0.0, %v915
        %v917 = vpop.f32.mrb[0].mxu0
        %v918 = vpop.f32.mrb[0].mxu0
        %v919 = vpop.f32.mrb[0].mxu0
        %920 = vdwg.mxu0
        %v921 = vsel %vm605, %v864, -inf
        %922 = vmax.xlane.f32.xlu0 %v921
        %v923 = vpop.xlane.xlu0 %922
        %v924 = vsel %vm605, %v916, -inf
        %925 = vmax.xlane.f32.xlu0 %v924
        %v926 = vpop.xlane.xlu0 %925
        %v927 = vsub.f32 %v864, %v923
        %v928 = vsub.f32 %v916, %v926
        %v929 = vmul.f32 %v927, 1.442695
        %v930 = vpow.pop %v929
        %v931 = vmul.f32 %v928, 1.442695
        %v932 = vpow.pop %v931
        %v933 = vsel %vm605, %v930, 0.0
        %934 = vadd.xlane.f32.xlu0 %v933
        %v935 = vpop.xlane.xlu0 %934
        %v936 = vsel %vm605, %v932, 0.0
        %937 = vadd.xlane.f32.xlu0 %v936
        %v938 = vpop.xlane.xlu0 %937
        %v939 = vrcp.pop %v935
        %v940 = vrcp.pop %v938
        %v941 = vmul.f32 %v930, %v939
        %v942 = vmul.f32 %v932, %v940
        %v943 = vpack.c.bf16 %v941, %v941
        %v944 = vpack.c.bf16 %v942, %v942
        %946 = vrot.lane.b32.xlu0 %v603, 120
        %v947 = vpop.permute.xlu0 %946
        %v949 = vsel %vm605, %v943, 0
        %v952 = vsel %vm725, %v947, 0
        %954 = vmatprep.subr.bf16.mxu0 0
        %955 = vmatpush1.bf16.msra.mxu0 %v952
        %956 = vmatprep.subr.bf16.mxu0 0
        %957 = vmatpush1.bf16.msra.mxu0 0
        %958 = vmatprep.subr.bf16.mxu0 0
        %959 = vmatpush1.bf16.msra.mxu0 0
        %960 = vmatprep.subr.bf16.mxu0 0
        %961 = vmatpush1.bf16.msra.mxu0 0
        %962 = vmatprep.subr.bf16.mxu0 0
        %963 = vmatpush1.bf16.msra.mxu0 0
        %964 = vmatprep.subr.bf16.mxu0 0
        %965 = vmatpush1.bf16.msra.mxu0 0
        %966 = vmatprep.subr.bf16.mxu0 0
        %967 = vmatpush1.bf16.msra.mxu0 0
        %968 = vmatprep.subr.bf16.mxu0 0
        %969 = vmatpush1.bf16.msra.mxu0 0
        %970 = vmatprep.subr.bf16.mxu0 0
        %971 = vmatpush1.bf16.msra.mxu0 0
        %972 = vmatprep.subr.bf16.mxu0 0
        %973 = vmatpush1.bf16.msra.mxu0 0
        %974 = vmatprep.subr.bf16.mxu0 0
        %975 = vmatpush1.bf16.msra.mxu0 0
        %976 = vmatprep.subr.bf16.mxu0 0
        %977 = vmatpush1.bf16.msra.mxu0 0
        %978 = vmatprep.subr.bf16.mxu0 0
        %979 = vmatpush1.bf16.msra.mxu0 0
        %980 = vmatprep.subr.bf16.mxu0 0
        %981 = vmatpush1.bf16.msra.mxu0 0
        %982 = vmatprep.subr.bf16.mxu0 0
        %983 = vmatpush1.bf16.msra.mxu0 0
        %984 = vmatprep.subr.bf16.mxu0 0
        %985 = vmatpush1.bf16.msra.mxu0 0
        %986 = vmatprep.mubr.bf16.mxu0 0
        %987 = vmatmul.mubr.bf16.gmra.mrb[0].mxu0 %v949
        %v988 = vpop.f32.mrb[0].mxu0
        %v989 = vadd.f32 0.0, %v988
        %v990 = vpop.f32.mrb[0].mxu0
        %v991 = vpop.f32.mrb[0].mxu0
        %v992 = vpop.f32.mrb[0].mxu0
        %993 = vdwg.mxu0
        %995 = vrot.lane.b32.xlu0 %v604, 120
        %v996 = vpop.permute.xlu0 %995
        %v998 = vsel %vm605, %v944, 0
        %v1001 = vsel %vm725, %v996, 0
        %1003 = vmatprep.subr.bf16.mxu0 0
        %1004 = vmatpush1.bf16.msra.mxu0 %v1001
        %1005 = vmatprep.subr.bf16.mxu0 0
        %1006 = vmatpush1.bf16.msra.mxu0 0
        %1007 = vmatprep.subr.bf16.mxu0 0
        %1008 = vmatpush1.bf16.msra.mxu0 0
        %1009 = vmatprep.subr.bf16.mxu0 0
        %1010 = vmatpush1.bf16.msra.mxu0 0
        %1011 = vmatprep.subr.bf16.mxu0 0
        %1012 = vmatpush1.bf16.msra.mxu0 0
        %1013 = vmatprep.subr.bf16.mxu0 0
        %1014 = vmatpush1.bf16.msra.mxu0 0
        %1015 = vmatprep.subr.bf16.mxu0 0
        %1016 = vmatpush1.bf16.msra.mxu0 0
        %1017 = vmatprep.subr.bf16.mxu0 0
        %1018 = vmatpush1.bf16.msra.mxu0 0
        %1019 = vmatprep.subr.bf16.mxu0 0
        %1020 = vmatpush1.bf16.msra.mxu0 0
        %1021 = vmatprep.subr.bf16.mxu0 0
        %1022 = vmatpush1.bf16.msra.mxu0 0
        %1023 = vmatprep.subr.bf16.mxu0 0
        %1024 = vmatpush1.bf16.msra.mxu0 0
        %1025 = vmatprep.subr.bf16.mxu0 0
        %1026 = vmatpush1.bf16.msra.mxu0 0
        %1027 = vmatprep.subr.bf16.mxu0 0
        %1028 = vmatpush1.bf16.msra.mxu0 0
        %1029 = vmatprep.subr.bf16.mxu0 0
        %1030 = vmatpush1.bf16.msra.mxu0 0
        %1031 = vmatprep.subr.bf16.mxu0 0
        %1032 = vmatpush1.bf16.msra.mxu0 0
        %1033 = vmatprep.subr.bf16.mxu0 0
        %1034 = vmatpush1.bf16.msra.mxu0 0
        %1035 = vmatprep.mubr.bf16.mxu0 0
        %1036 = vmatmul.mubr.bf16.gmra.mrb[0].mxu0 %v998
        %v1037 = vpop.f32.mrb[0].mxu0
        %v1038 = vadd.f32 0.0, %v1037
        %v1039 = vpop.f32.mrb[0].mxu0
        %v1040 = vpop.f32.mrb[0].mxu0
        %v1041 = vpop.f32.mrb[0].mxu0
        %1042 = vdwg.mxu0
        %1045 = vrot.lane.b32.xlu0 %v989, 8
        %v1046 = vpop.permute.xlu0 %1045
        %1047 = vrot.lane.b32.xlu0 %v1038, 8
        %v1048 = vpop.permute.xlu0 %1047
        %vm1051 = vcmask 130112
        %1052 = vst.msk [vmem:[#allocation2] sm:$0xff] %vm1051, %v1046
        %1053 = vst.msk [vmem:[#allocation2 + $0x8] sm:$0xff] %vm1051, %v1048
        %1054 = vrot.lane.b32.xlu0 %v599, 112
        %v1055 = vpop.permute.xlu0 %1054
        %1056 = vrot.lane.b32.xlu0 %v601, 112
        %v1057 = vpop.permute.xlu0 %1056
        %v1059 = vsel %vm605, %v1055, 0
        %v1062 = vsel %vm605, %v1057, 0
        %1064 = vmatprep.subr.bf16.mxu0 0
        %1065 = vmatpush1.bf16.xpose.msra.mxu0 %v1062
        %1066 = vmatprep.subr.bf16.mxu0 0
        %1067 = vmatpush1.bf16.xpose.msra.mxu0 0
        %1068 = vmatprep.subr.bf16.mxu0 0
        %1069 = vmatpush1.bf16.xpose.msra.mxu0 0
        %1070 = vmatprep.subr.bf16.mxu0 0
        %1071 = vmatpush1.bf16.xpose.msra.mxu0 0
        %1072 = vmatprep.subr.bf16.mxu0 0
        %1073 = vmatpush1.bf16.xpose.msra.mxu0 0
        %1074 = vmatprep.subr.bf16.mxu0 0
        %1075 = vmatpush1.bf16.xpose.msra.mxu0 0
        %1076 = vmatprep.subr.bf16.mxu0 0
        %1077 = vmatpush1.bf16.xpose.msra.mxu0 0
        %1078 = vmatprep.subr.bf16.mxu0 0
        %1079 = vmatpush1.bf16.xpose.msra.mxu0 0
        %1080 = vmatprep.subr.bf16.mxu0 0
        %1081 = vmatpush1.bf16.xpose.msra.mxu0 0
        %1082 = vmatprep.subr.bf16.mxu0 0
        %1083 = vmatpush1.bf16.xpose.msra.mxu0 0
        %1084 = vmatprep.subr.bf16.mxu0 0
        %1085 = vmatpush1.bf16.xpose.msra.mxu0 0
        %1086 = vmatprep.subr.bf16.mxu0 0
        %1087 = vmatpush1.bf16.xpose.msra.mxu0 0
        %1088 = vmatprep.subr.bf16.mxu0 0
        %1089 = vmatpush1.bf16.xpose.msra.mxu0 0
        %1090 = vmatprep.subr.bf16.mxu0 0
        %1091 = vmatpush1.bf16.xpose.msra.mxu0 0
        %1092 = vmatprep.subr.bf16.mxu0 0
        %1093 = vmatpush1.bf16.xpose.msra.mxu0 0
        %1094 = vmatprep.subr.bf16.mxu0 0
        %1095 = vmatpush1.bf16.xpose.msra.mxu0 0
        %1096 = vmatprep.mubr.bf16.mxu0 0
        %1097 = vmatmul.mubr.bf16.gmra.mrb[0].mxu0 %v1059
        %v1098 = vpop.f32.mrb[0].mxu0
        %v1099 = vadd.f32 0.0, %v1098
        %v1100 = vpop.f32.mrb[0].mxu0
        %v1101 = vpop.f32.mrb[0].mxu0
        %v1102 = vpop.f32.mrb[0].mxu0
        %1103 = vdwg.mxu0
        %1104 = vrot.lane.b32.xlu0 %v600, 112
        %v1105 = vpop.permute.xlu0 %1104
        %1106 = vrot.lane.b32.xlu0 %v602, 112
        %v1107 = vpop.permute.xlu0 %1106
        %v1109 = vsel %vm605, %v1105, 0
        %v1112 = vsel %vm605, %v1107, 0
        %1114 = vmatprep.subr.bf16.mxu0 0
        %1115 = vmatpush1.bf16.xpose.msra.mxu0 %v1112
        %1116 = vmatprep.subr.bf16.mxu0 0
        %1117 = vmatpush1.bf16.xpose.msra.mxu0 0
        %1118 = vmatprep.subr.bf16.mxu0 0
        %1119 = vmatpush1.bf16.xpose.msra.mxu0 0
        %1120 = vmatprep.subr.bf16.mxu0 0
        %1121 = vmatpush1.bf16.xpose.msra.mxu0 0
        %1122 = vmatprep.subr.bf16.mxu0 0
        %1123 = vmatpush1.bf16.xpose.msra.mxu0 0
        %1124 = vmatprep.subr.bf16.mxu0 0
        %1125 = vmatpush1.bf16.xpose.msra.mxu0 0
        %1126 = vmatprep.subr.bf16.mxu0 0
        %1127 = vmatpush1.bf16.xpose.msra.mxu0 0
        %1128 = vmatprep.subr.bf16.mxu0 0
        %1129 = vmatpush1.bf16.xpose.msra.mxu0 0
        %1130 = vmatprep.subr.bf16.mxu0 0
        %1131 = vmatpush1.bf16.xpose.msra.mxu0 0
        %1132 = vmatprep.subr.bf16.mxu0 0
        %1133 = vmatpush1.bf16.xpose.msra.mxu0 0
        %1134 = vmatprep.subr.bf16.mxu0 0
        %1135 = vmatpush1.bf16.xpose.msra.mxu0 0
        %1136 = vmatprep.subr.bf16.mxu0 0
        %1137 = vmatpush1.bf16.xpose.msra.mxu0 0
        %1138 = vmatprep.subr.bf16.mxu0 0
        %1139 = vmatpush1.bf16.xpose.msra.mxu0 0
        %1140 = vmatprep.subr.bf16.mxu0 0
        %1141 = vmatpush1.bf16.xpose.msra.mxu0 0
        %1142 = vmatprep.subr.bf16.mxu0 0
        %1143 = vmatpush1.bf16.xpose.msra.mxu0 0
        %1144 = vmatprep.subr.bf16.mxu0 0
        %1145 = vmatpush1.bf16.xpose.msra.mxu0 0
        %1146 = vmatprep.mubr.bf16.mxu0 0
        %1147 = vmatmul.mubr.bf16.gmra.mrb[0].mxu0 %v1109
        %v1148 = vpop.f32.mrb[0].mxu0
        %v1149 = vadd.f32 0.0, %v1148
        %v1150 = vpop.f32.mrb[0].mxu0
        %v1151 = vpop.f32.mrb[0].mxu0
        %v1152 = vpop.f32.mrb[0].mxu0
        %1153 = vdwg.mxu0
        %v1154 = vsel %vm605, %v1099, -inf
        %1155 = vmax.xlane.f32.xlu0 %v1154
        %v1156 = vpop.xlane.xlu0 %1155
        %v1157 = vsel %vm605, %v1149, -inf
        %1158 = vmax.xlane.f32.xlu0 %v1157
        %v1159 = vpop.xlane.xlu0 %1158
        %v1160 = vsub.f32 %v1099, %v1156
        %v1161 = vsub.f32 %v1149, %v1159
        %v1162 = vmul.f32 %v1160, 1.442695
        %v1163 = vpow.pop %v1162
        %v1164 = vmul.f32 %v1161, 1.442695
        %v1165 = vpow.pop %v1164
        %v1166 = vsel %vm605, %v1163, 0.0
        %1167 = vadd.xlane.f32.xlu0 %v1166
        %v1168 = vpop.xlane.xlu0 %1167
        %v1169 = vsel %vm605, %v1165, 0.0
        %1170 = vadd.xlane.f32.xlu0 %v1169
        %v1171 = vpop.xlane.xlu0 %1170
        %v1172 = vrcp.pop %v1168
        %v1173 = vrcp.pop %v1171
        %v1174 = vmul.f32 %v1163, %v1172
        %v1175 = vmul.f32 %v1165, %v1173
        %v1176 = vpack.c.bf16 %v1174, %v1174
        %v1177 = vpack.c.bf16 %v1175, %v1175
        %1178 = vrot.lane.b32.xlu0 %v603, 112
        %v1179 = vpop.permute.xlu0 %1178
        %v1181 = vsel %vm605, %v1176, 0
        %v1184 = vsel %vm725, %v1179, 0
        %1186 = vmatprep.subr.bf16.mxu0 0
        %1187 = vmatpush1.bf16.msra.mxu0 %v1184
        %1188 = vmatprep.subr.bf16.mxu0 0
        %1189 = vmatpush1.bf16.msra.mxu0 0
        %1190 = vmatprep.subr.bf16.mxu0 0
        %1191 = vmatpush1.bf16.msra.mxu0 0
        %1192 = vmatprep.subr.bf16.mxu0 0
        %1193 = vmatpush1.bf16.msra.mxu0 0
        %1194 = vmatprep.subr.bf16.mxu0 0
        %1195 = vmatpush1.bf16.msra.mxu0 0
        %1196 = vmatprep.subr.bf16.mxu0 0
        %1197 = vmatpush1.bf16.msra.mxu0 0
        %1198 = vmatprep.subr.bf16.mxu0 0
        %1199 = vmatpush1.bf16.msra.mxu0 0
        %1200 = vmatprep.subr.bf16.mxu0 0
        %1201 = vmatpush1.bf16.msra.mxu0 0
        %1202 = vmatprep.subr.bf16.mxu0 0
        %1203 = vmatpush1.bf16.msra.mxu0 0
        %1204 = vmatprep.subr.bf16.mxu0 0
        %1205 = vmatpush1.bf16.msra.mxu0 0
        %1206 = vmatprep.subr.bf16.mxu0 0
        %1207 = vmatpush1.bf16.msra.mxu0 0
        %1208 = vmatprep.subr.bf16.mxu0 0
        %1209 = vmatpush1.bf16.msra.mxu0 0
        %1210 = vmatprep.subr.bf16.mxu0 0
        %1211 = vmatpush1.bf16.msra.mxu0 0
        %1212 = vmatprep.subr.bf16.mxu0 0
        %1213 = vmatpush1.bf16.msra.mxu0 0
        %1214 = vmatprep.subr.bf16.mxu0 0
        %1215 = vmatpush1.bf16.msra.mxu0 0
        %1216 = vmatprep.subr.bf16.mxu0 0
        %1217 = vmatpush1.bf16.msra.mxu0 0
        %1218 = vmatprep.mubr.bf16.mxu0 0
        %1219 = vmatmul.mubr.bf16.gmra.mrb[0].mxu0 %v1181
        %v1220 = vpop.f32.mrb[0].mxu0
        %v1221 = vadd.f32 0.0, %v1220
        %v1222 = vpop.f32.mrb[0].mxu0
        %v1223 = vpop.f32.mrb[0].mxu0
        %v1224 = vpop.f32.mrb[0].mxu0
        %1225 = vdwg.mxu0
        %1226 = vrot.lane.b32.xlu0 %v604, 112
        %v1227 = vpop.permute.xlu0 %1226
        %v1229 = vsel %vm605, %v1177, 0
        %v1232 = vsel %vm725, %v1227, 0
        %1234 = vmatprep.subr.bf16.mxu0 0
        %1235 = vmatpush1.bf16.msra.mxu0 %v1232
        %1236 = vmatprep.subr.bf16.mxu0 0
        %1237 = vmatpush1.bf16.msra.mxu0 0
        %1238 = vmatprep.subr.bf16.mxu0 0
        %1239 = vmatpush1.bf16.msra.mxu0 0
        %1240 = vmatprep.subr.bf16.mxu0 0
        %1241 = vmatpush1.bf16.msra.mxu0 0
        %1242 = vmatprep.subr.bf16.mxu0 0
        %1243 = vmatpush1.bf16.msra.mxu0 0
        %1244 = vmatprep.subr.bf16.mxu0 0
        %1245 = vmatpush1.bf16.msra.mxu0 0
        %1246 = vmatprep.subr.bf16.mxu0 0
        %1247 = vmatpush1.bf16.msra.mxu0 0
        %1248 = vmatprep.subr.bf16.mxu0 0
        %1249 = vmatpush1.bf16.msra.mxu0 0
        %1250 = vmatprep.subr.bf16.mxu0 0
        %1251 = vmatpush1.bf16.msra.mxu0 0
        %1252 = vmatprep.subr.bf16.mxu0 0
        %1253 = vmatpush1.bf16.msra.mxu0 0
        %1254 = vmatprep.subr.bf16.mxu0 0
        %1255 = vmatpush1.bf16.msra.mxu0 0
        %1256 = vmatprep.subr.bf16.mxu0 0
        %1257 = vmatpush1.bf16.msra.mxu0 0
        %1258 = vmatprep.subr.bf16.mxu0 0
        %1259 = vmatpush1.bf16.msra.mxu0 0
        %1260 = vmatprep.subr.bf16.mxu0 0
        %1261 = vmatpush1.bf16.msra.mxu0 0
        %1262 = vmatprep.subr.bf16.mxu0 0
        %1263 = vmatpush1.bf16.msra.mxu0 0
        %1264 = vmatprep.subr.bf16.mxu0 0
        %1265 = vmatpush1.bf16.msra.mxu0 0
        %1266 = vmatprep.mubr.bf16.mxu0 0
        %1267 = vmatmul.mubr.bf16.gmra.mrb[0].mxu0 %v1229
        %v1268 = vpop.f32.mrb[0].mxu0
        %v1269 = vadd.f32 0.0, %v1268
        %v1270 = vpop.f32.mrb[0].mxu0
        %v1271 = vpop.f32.mrb[0].mxu0
        %v1272 = vpop.f32.mrb[0].mxu0
        %1273 = vdwg.mxu0
        %1276 = vrot.lane.b32.xlu0 %v1221, 16
        %v1277 = vpop.permute.xlu0 %1276
        %1278 = vrot.lane.b32.xlu0 %v1269, 16
        %v1279 = vpop.permute.xlu0 %1278
        %vm1282 = vcmask 195712
        %1283 = vst.msk [vmem:[#allocation2] sm:$0xff] %vm1282, %v1277
        %1284 = vst.msk [vmem:[#allocation2 + $0x8] sm:$0xff] %vm1282, %v1279
        %1285 = vrot.lane.b32.xlu0 %v599, 104
        %v1286 = vpop.permute.xlu0 %1285
        %1287 = vrot.lane.b32.xlu0 %v601, 104
        %v1288 = vpop.permute.xlu0 %1287
        %v1290 = vsel %vm605, %v1286, 0
        %v1293 = vsel %vm605, %v1288, 0
        %1295 = vmatprep.subr.bf16.mxu0 0
        %1296 = vmatpush1.bf16.xpose.msra.mxu0 %v1293
        %1297 = vmatprep.subr.bf16.mxu0 0
        %1298 = vmatpush1.bf16.xpose.msra.mxu0 0
        %1299 = vmatprep.subr.bf16.mxu0 0
        %1300 = vmatpush1.bf16.xpose.msra.mxu0 0
        %1301 = vmatprep.subr.bf16.mxu0 0
        %1302 = vmatpush1.bf16.xpose.msra.mxu0 0
        %1303 = vmatprep.subr.bf16.mxu0 0
        %1304 = vmatpush1.bf16.xpose.msra.mxu0 0
        %1305 = vmatprep.subr.bf16.mxu0 0
        %1306 = vmatpush1.bf16.xpose.msra.mxu0 0
        %1307 = vmatprep.subr.bf16.mxu0 0
        %1308 = vmatpush1.bf16.xpose.msra.mxu0 0
        %1309 = vmatprep.subr.bf16.mxu0 0
        %1310 = vmatpush1.bf16.xpose.msra.mxu0 0
        %1311 = vmatprep.subr.bf16.mxu0 0
        %1312 = vmatpush1.bf16.xpose.msra.mxu0 0
        %1313 = vmatprep.subr.bf16.mxu0 0
        %1314 = vmatpush1.bf16.xpose.msra.mxu0 0
        %1315 = vmatprep.subr.bf16.mxu0 0
        %1316 = vmatpush1.bf16.xpose.msra.mxu0 0
        %1317 = vmatprep.subr.bf16.mxu0 0
        %1318 = vmatpush1.bf16.xpose.msra.mxu0 0
        %1319 = vmatprep.subr.bf16.mxu0 0
        %1320 = vmatpush1.bf16.xpose.msra.mxu0 0
        %1321 = vmatprep.subr.bf16.mxu0 0
        %1322 = vmatpush1.bf16.xpose.msra.mxu0 0
        %1323 = vmatprep.subr.bf16.mxu0 0
        %1324 = vmatpush1.bf16.xpose.msra.mxu0 0
        %1325 = vmatprep.subr.bf16.mxu0 0
        %1326 = vmatpush1.bf16.xpose.msra.mxu0 0
        %1327 = vmatprep.mubr.bf16.mxu0 0
        %1328 = vmatmul.mubr.bf16.gmra.mrb[0].mxu0 %v1290
        %v1329 = vpop.f32.mrb[0].mxu0
        %v1330 = vadd.f32 0.0, %v1329
        %v1331 = vpop.f32.mrb[0].mxu0
        %v1332 = vpop.f32.mrb[0].mxu0
        %v1333 = vpop.f32.mrb[0].mxu0
        %1334 = vdwg.mxu0
        %1335 = vrot.lane.b32.xlu0 %v600, 104
        %v1336 = vpop.permute.xlu0 %1335
        %1337 = vrot.lane.b32.xlu0 %v602, 104
        %v1338 = vpop.permute.xlu0 %1337
        %v1340 = vsel %vm605, %v1336, 0
        %v1343 = vsel %vm605, %v1338, 0
        %1345 = vmatprep.subr.bf16.mxu0 0
        %1346 = vmatpush1.bf16.xpose.msra.mxu0 %v1343
        %1347 = vmatprep.subr.bf16.mxu0 0
        %1348 = vmatpush1.bf16.xpose.msra.mxu0 0
        %1349 = vmatprep.subr.bf16.mxu0 0
        %1350 = vmatpush1.bf16.xpose.msra.mxu0 0
        %1351 = vmatprep.subr.bf16.mxu0 0
        %1352 = vmatpush1.bf16.xpose.msra.mxu0 0
        %1353 = vmatprep.subr.bf16.mxu0 0
        %1354 = vmatpush1.bf16.xpose.msra.mxu0 0
        %1355 = vmatprep.subr.bf16.mxu0 0
        %1356 = vmatpush1.bf16.xpose.msra.mxu0 0
        %1357 = vmatprep.subr.bf16.mxu0 0
        %1358 = vmatpush1.bf16.xpose.msra.mxu0 0
        %1359 = vmatprep.subr.bf16.mxu0 0
        %1360 = vmatpush1.bf16.xpose.msra.mxu0 0
        %1361 = vmatprep.subr.bf16.mxu0 0
        %1362 = vmatpush1.bf16.xpose.msra.mxu0 0
        %1363 = vmatprep.subr.bf16.mxu0 0
        %1364 = vmatpush1.bf16.xpose.msra.mxu0 0
        %1365 = vmatprep.subr.bf16.mxu0 0
        %1366 = vmatpush1.bf16.xpose.msra.mxu0 0
        %1367 = vmatprep.subr.bf16.mxu0 0
        %1368 = vmatpush1.bf16.xpose.msra.mxu0 0
        %1369 = vmatprep.subr.bf16.mxu0 0
        %1370 = vmatpush1.bf16.xpose.msra.mxu0 0
        %1371 = vmatprep.subr.bf16.mxu0 0
        %1372 = vmatpush1.bf16.xpose.msra.mxu0 0
        %1373 = vmatprep.subr.bf16.mxu0 0
        %1374 = vmatpush1.bf16.xpose.msra.mxu0 0
        %1375 = vmatprep.subr.bf16.mxu0 0
        %1376 = vmatpush1.bf16.xpose.msra.mxu0 0
        %1377 = vmatprep.mubr.bf16.mxu0 0
        %1378 = vmatmul.mubr.bf16.gmra.mrb[0].mxu0 %v1340
        %v1379 = vpop.f32.mrb[0].mxu0
        %v1380 = vadd.f32 0.0, %v1379
        %v1381 = vpop.f32.mrb[0].mxu0
        %v1382 = vpop.f32.mrb[0].mxu0
        %v1383 = vpop.f32.mrb[0].mxu0
        %1384 = vdwg.mxu0
        %v1385 = vsel %vm605, %v1330, -inf
        %1386 = vmax.xlane.f32.xlu0 %v1385
        %v1387 = vpop.xlane.xlu0 %1386
        %v1388 = vsel %vm605, %v1380, -inf
        %1389 = vmax.xlane.f32.xlu0 %v1388
        %v1390 = vpop.xlane.xlu0 %1389
        %v1391 = vsub.f32 %v1330, %v1387
        %v1392 = vsub.f32 %v1380, %v1390
        %v1393 = vmul.f32 %v1391, 1.442695
        %v1394 = vpow.pop %v1393
        %v1395 = vmul.f32 %v1392, 1.442695
        %v1396 = vpow.pop %v1395
        %v1397 = vsel %vm605, %v1394, 0.0
        %1398 = vadd.xlane.f32.xlu0 %v1397
        %v1399 = vpop.xlane.xlu0 %1398
        %v1400 = vsel %vm605, %v1396, 0.0
        %1401 = vadd.xlane.f32.xlu0 %v1400
        %v1402 = vpop.xlane.xlu0 %1401
        %v1403 = vrcp.pop %v1399
        %v1404 = vrcp.pop %v1402
        %v1405 = vmul.f32 %v1394, %v1403
        %v1406 = vmul.f32 %v1396, %v1404
        %v1407 = vpack.c.bf16 %v1405, %v1405
        %v1408 = vpack.c.bf16 %v1406, %v1406
        %1409 = vrot.lane.b32.xlu0 %v603, 104
        %v1410 = vpop.permute.xlu0 %1409
        %v1412 = vsel %vm605, %v1407, 0
        %v1415 = vsel %vm725, %v1410, 0
        %1417 = vmatprep.subr.bf16.mxu0 0
        %1418 = vmatpush1.bf16.msra.mxu0 %v1415
        %1419 = vmatprep.subr.bf16.mxu0 0
        %1420 = vmatpush1.bf16.msra.mxu0 0
        %1421 = vmatprep.subr.bf16.mxu0 0
        %1422 = vmatpush1.bf16.msra.mxu0 0
        %1423 = vmatprep.subr.bf16.mxu0 0
        %1424 = vmatpush1.bf16.msra.mxu0 0
        %1425 = vmatprep.subr.bf16.mxu0 0
        %1426 = vmatpush1.bf16.msra.mxu0 0
        %1427 = vmatprep.subr.bf16.mxu0 0
        %1428 = vmatpush1.bf16.msra.mxu0 0
        %1429 = vmatprep.subr.bf16.mxu0 0
        %1430 = vmatpush1.bf16.msra.mxu0 0
        %1431 = vmatprep.subr.bf16.mxu0 0
        %1432 = vmatpush1.bf16.msra.mxu0 0
        %1433 = vmatprep.subr.bf16.mxu0 0
        %1434 = vmatpush1.bf16.msra.mxu0 0
        %1435 = vmatprep.subr.bf16.mxu0 0
        %1436 = vmatpush1.bf16.msra.mxu0 0
        %1437 = vmatprep.subr.bf16.mxu0 0
        %1438 = vmatpush1.bf16.msra.mxu0 0
        %1439 = vmatprep.subr.bf16.mxu0 0
        %1440 = vmatpush1.bf16.msra.mxu0 0
        %1441 = vmatprep.subr.bf16.mxu0 0
        %1442 = vmatpush1.bf16.msra.mxu0 0
        %1443 = vmatprep.subr.bf16.mxu0 0
        %1444 = vmatpush1.bf16.msra.mxu0 0
        %1445 = vmatprep.subr.bf16.mxu0 0
        %1446 = vmatpush1.bf16.msra.mxu0 0
        %1447 = vmatprep.subr.bf16.mxu0 0
        %1448 = vmatpush1.bf16.msra.mxu0 0
        %1449 = vmatprep.mubr.bf16.mxu0 0
        %1450 = vmatmul.mubr.bf16.gmra.mrb[0].mxu0 %v1412
        %v1451 = vpop.f32.mrb[0].mxu0
        %v1452 = vadd.f32 0.0, %v1451
        %v1453 = vpop.f32.mrb[0].mxu0
        %v1454 = vpop.f32.mrb[0].mxu0
        %v1455 = vpop.f32.mrb[0].mxu0
        %1456 = vdwg.mxu0
        %1457 = vrot.lane.b32.xlu0 %v604, 104
        %v1458 = vpop.permute.xlu0 %1457
        %v1460 = vsel %vm605, %v1408, 0
        %v1463 = vsel %vm725, %v1458, 0
        %1465 = vmatprep.subr.bf16.mxu0 0
        %1466 = vmatpush1.bf16.msra.mxu0 %v1463
        %1467 = vmatprep.subr.bf16.mxu0 0
        %1468 = vmatpush1.bf16.msra.mxu0 0
        %1469 = vmatprep.subr.bf16.mxu0 0
        %1470 = vmatpush1.bf16.msra.mxu0 0
        %1471 = vmatprep.subr.bf16.mxu0 0
        %1472 = vmatpush1.bf16.msra.mxu0 0
        %1473 = vmatprep.subr.bf16.mxu0 0
        %1474 = vmatpush1.bf16.msra.mxu0 0
        %1475 = vmatprep.subr.bf16.mxu0 0
        %1476 = vmatpush1.bf16.msra.mxu0 0
        %1477 = vmatprep.subr.bf16.mxu0 0
        %1478 = vmatpush1.bf16.msra.mxu0 0
        %1479 = vmatprep.subr.bf16.mxu0 0
        %1480 = vmatpush1.bf16.msra.mxu0 0
        %1481 = vmatprep.subr.bf16.mxu0 0
        %1482 = vmatpush1.bf16.msra.mxu0 0
        %1483 = vmatprep.subr.bf16.mxu0 0
        %1484 = vmatpush1.bf16.msra.mxu0 0
        %1485 = vmatprep.subr.bf16.mxu0 0
        %1486 = vmatpush1.bf16.msra.mxu0 0
        %1487 = vmatprep.subr.bf16.mxu0 0
        %1488 = vmatpush1.bf16.msra.mxu0 0
        %1489 = vmatprep.subr.bf16.mxu0 0
        %1490 = vmatpush1.bf16.msra.mxu0 0
        %1491 = vmatprep.subr.bf16.mxu0 0
        %1492 = vmatpush1.bf16.msra.mxu0 0
        %1493 = vmatprep.subr.bf16.mxu0 0
        %1494 = vmatpush1.bf16.msra.mxu0 0
        %1495 = vmatprep.subr.bf16.mxu0 0
        %1496 = vmatpush1.bf16.msra.mxu0 0
        %1497 = vmatprep.mubr.bf16.mxu0 0
        %1498 = vmatmul.mubr.bf16.gmra.mrb[0].mxu0 %v1460
        %v1499 = vpop.f32.mrb[0].mxu0
        %v1500 = vadd.f32 0.0, %v1499
        %v1501 = vpop.f32.mrb[0].mxu0
        %v1502 = vpop.f32.mrb[0].mxu0
        %v1503 = vpop.f32.mrb[0].mxu0
        %1504 = vdwg.mxu0
        %1507 = vrot.lane.b32.xlu0 %v1452, 24
        %v1508 = vpop.permute.xlu0 %1507
        %1509 = vrot.lane.b32.xlu0 %v1500, 24
        %v1510 = vpop.permute.xlu0 %1509
        %vm1513 = vcmask 261312
        %1514 = vst.msk [vmem:[#allocation2] sm:$0xff] %vm1513, %v1508
        %1515 = vst.msk [vmem:[#allocation2 + $0x8] sm:$0xff] %vm1513, %v1510
        %v1516 = vld [vmem:[#allocation2] sm:$0xff]
        %v1517 = vld [vmem:[#allocation2 + $0x8] sm:$0xff]
        %v1518 = vpack.c.bf16 %v1517, %v1516
        %v1519 = vld [vmem:[#allocation11] sm:$0xf]
        %v1520 = vld [vmem:[#allocation11 + $0x4] sm:$0xf]
        %v1521 = vld [vmem:[#allocation11 + $0x8] sm:$0xf]
        %v1522 = vld [vmem:[#allocation11 + $0xc] sm:$0xf]
        %v1527 = vunpack.c.l.b16 %v1519
        %v1528 = vunpack.c.l.b16 %v1520
        %v1529 = vunpack.c.l.b16 %v1521
        %v1530 = vunpack.c.l.b16 %v1522
        %v1531 = vpack.c.b16 %v1528, %v1527
        %v1532 = vpack.c.b16 %v1530, %v1529
        %v1536 = vsel %vm380, %v1518, 0
        %1538 = vmatprep.subr.bf16.mxu0 0
        %1539 = vmatpush1.bf16.msra.mxu0 %v1531
        %1540 = vmatprep.subr.bf16.mxu0 0
        %1541 = vmatpush1.bf16.msra.mxu0 %v1532
        %1542 = vmatprep.subr.bf16.mxu0 0
        %1543 = vmatpush1.bf16.msra.mxu0 0
        %1544 = vmatprep.subr.bf16.mxu0 0
        %1545 = vmatpush1.bf16.msra.mxu0 0
        %1546 = vmatprep.subr.bf16.mxu0 0
        %1547 = vmatpush1.bf16.msra.mxu0 0
        %1548 = vmatprep.subr.bf16.mxu0 0
        %1549 = vmatpush1.bf16.msra.mxu0 0
        %1550 = vmatprep.subr.bf16.mxu0 0
        %1551 = vmatpush1.bf16.msra.mxu0 0
        %1552 = vmatprep.subr.bf16.mxu0 0
        %1553 = vmatpush1.bf16.msra.mxu0 0
        %1554 = vmatprep.subr.bf16.mxu0 0
        %1555 = vmatpush1.bf16.msra.mxu0 0
        %1556 = vmatprep.subr.bf16.mxu0 0
        %1557 = vmatpush1.bf16.msra.mxu0 0
        %1558 = vmatprep.subr.bf16.mxu0 0
        %1559 = vmatpush1.bf16.msra.mxu0 0
        %1560 = vmatprep.subr.bf16.mxu0 0
        %1561 = vmatpush1.bf16.msra.mxu0 0
        %1562 = vmatprep.subr.bf16.mxu0 0
        %1563 = vmatpush1.bf16.msra.mxu0 0
        %1564 = vmatprep.subr.bf16.mxu0 0
        %1565 = vmatpush1.bf16.msra.mxu0 0
        %1566 = vmatprep.subr.bf16.mxu0 0
        %1567 = vmatpush1.bf16.msra.mxu0 0
        %1568 = vmatprep.subr.bf16.mxu0 0
        %1569 = vmatpush1.bf16.msra.mxu0 0
        %1570 = vmatprep.mubr.bf16.mxu0 0
        %1571 = vmatmul.mubr.bf16.gmra.mrb[0].mxu0 %v1536
        %v1572 = vpop.f32.mrb[0].mxu0
        %v1573 = vadd.f32 0.0, %v1572
        %v1574 = vpop.f32.mrb[0].mxu0
        %v1575 = vpop.f32.mrb[0].mxu0
        %v1576 = vadd.f32 0.0, %v1575
        %v1577 = vpop.f32.mrb[0].mxu0
        %1578 = vdwg.mxu0
        %1579 = vst.msk [vmem:[%s372] sm:$0xff] %vm380, %v1573
        %1580 = vst.msk [vmem:[%s372 + $0x8] sm:$0xff] %vm380, %v1576
        %s1581 = sand.u32 %s202, 1
        %s1582 = scalar_lea.sflag [#allocation5], %s1581
        %s1583 = sand.u32 %s202, 1
        %s1584 = smul.addr %s1583, 16
        %s1585 = scalar_lea.vmem [#allocation12], %s1584
        // Predicated region
        $region69: #{tpu_custom_call.1} parent=47 // pred_check
          %p1586 = pneg %p212
        $region70: #{tpu_custom_call.1} parent=47 // pred_check_branch
          %1588 = sbr.rel (%p1586) target = $region72
        $region71: #{tpu_custom_call.1} parent=47 // pred_region
          %s1589 = smul.u32 2, %s31
          %s1591 = ssub.s32 256, 256
          %1592 = vsyncadd %s1582, %s1591
          %s1593 = smul.addr %s30, 2
          %s1594 = sadd.s32 %s1589, %s1593
          %s1595 = smul.addr %s1594, 128
          %s1596 = scalar_lea.hbm %s7, %s1595
          %s1597 = sshll.u32 %s1585, 4
          %s1598 = int_to_ptr.vmem [resolvable:$true] %s1597
          %1603 = dma.vmem_to_hbm [thread:$0]  %s1598, 256, %s1596, %s1582, 128, 128, 8
        $region72: #{tpu_custom_call.1} parent=47 // pred_fallthru
          _
      $region48: #{tpu_custom_call.1} parent=5 // pred_fallthru
        _
      %p1604 = scmp.le.s32.totalorder 2, %s21
      // Predicated region
      $region73: #{tpu_custom_call.1} parent=5 // pred_check
        %p1605 = pneg %p1604
      $region74: #{tpu_custom_call.1} parent=5 // pred_check_branch
        %1607 = sbr.rel (%p1605) target = $region76
      $region75: #{tpu_custom_call.1} parent=5 // pred_region
        %s1608 = ssub.s32 %s21, 2
        // Predicated region
        $region77: #{tpu_custom_call.1} parent=75 // pred_check
          %p1609 = pneg %p218
        $region78: #{tpu_custom_call.1} parent=75 // pred_check_branch
          %1611 = sbr.rel (%p1609) target = $region80
        $region79: #{tpu_custom_call.1} parent=75 // pred_region
          %s1612 = sand.u32 %s203, 1
          %s1613 = scalar_lea.sflag [#allocation5], %s1612
          %s1614 = sand.u32 %s203, 1
          %s1615 = smul.addr %s1614, 16
          %s1616 = scalar_lea.vmem [#allocation12], %s1615
          %1617 = dma.done %s1613, 256
        $region80: #{tpu_custom_call.1} parent=75 // pred_fallthru
          _
      $region76: #{tpu_custom_call.1} parent=5 // pred_fallthru
        _
    $region6: #{tpu_custom_call.1} parent=1 // loop_footer
      %s25 = sadd.s32 1, %s21
    $region7: #{tpu_custom_call.1} parent=1 // loop_footer_branch
      %20 = sbr.rel target = $region3
    $region8: #{tpu_custom_call.1} parent=1 // loop_exit
      _
    %1618 = vsyncpa [#allocation4], 1
    %s1619 = scalar_lea.sflag [#allocation4], 1
    %1620 = vsyncpa %s1619, 1
    %1621 = vsyncpa [#allocation7], 1
    %1622 = vsyncpa [#allocation10], 1
    %1623 = vsyncpa [#allocation5], 1
    %s1624 = scalar_lea.sflag [#allocation5], 1
    %1625 = vsyncpa %s1624, 1

</llo_original>
